<compile_context>
chip_gen: v7x
topology: tpu7x:2x2x1
jax: 0.10.0
libtpu: 0.0.40
codegen_flags: <defaults>
</compile_context>

<pallas_src>
import functools

import jax
import jax.numpy as jnp
from jax.experimental import pallas as pl
from jax.experimental.pallas import tpu as pltpu


# ----------------------------------------------------------------------------
# in-kernel helpers
# ----------------------------------------------------------------------------
def _layer_norm(x, gamma, beta, eps=1e-5):
    # single-pass statistics: var = E[x^2] - mean^2
    d = x.shape[-1]
    s1 = jnp.sum(x, axis=-1, keepdims=True)
    s2 = jnp.sum(x * x, axis=-1, keepdims=True)
    mean = s1 / d
    var = s2 / d - mean * mean
    return (x - mean) * jax.lax.rsqrt(var + eps) * gamma + beta


# ----------------------------------------------------------------------------
# fused encoder-layer kernel: MHA -> Add&Norm -> FFN -> Add&Norm
# ----------------------------------------------------------------------------
def _encoder_layer_kernel(x_q_ref, x_kv_ref, mask_ref,
                          wq_ref, bq_ref, wk_ref, bk_ref, wv_ref, bv_ref,
                          wo_ref, bo_ref, g1_ref, be1_ref,
                          w1_ref, b1_ref, w2_ref, b2_ref, g2_ref, be2_ref,
                          out_ref, *att_refs, n_head, d_k, d_v, emit_att):
    """One encoder layer for one (batch, query-tile) grid point."""
    f32, bf16 = jnp.float32, jnp.bfloat16

    xq = x_q_ref[0]                                  # (Tq, D) f32  query rows
    xkv = x_kv_ref[0]                                # (S,  D) f32  all rows
    Tq, _ = xq.shape
    S = xkv.shape[0]
    H = n_head

    # Additive key mask (computed once): 0 = keep, -1e9 = pad. (1, S)
    add_mask = (1.0 - mask_ref[0]) * (-1e9)

    scale = 1.0 / (d_k ** 0.5)
    xq_b = xq.astype(bf16)
    xkv_b = xkv.astype(bf16)

    # --- QKV projections: bf16 MXU operands, f32 accumulation ----------------
    q = (jnp.dot(xq_b, wq_ref[...], preferred_element_type=f32)
         + bq_ref[...]) * scale                      # (Tq, H*dk), scale folded
    k = jnp.dot(xkv_b, wk_ref[...], preferred_element_type=f32) + bk_ref[...]
    v = jnp.dot(xkv_b, wv_ref[...], preferred_element_type=f32) + bv_ref[...]

    # --- head-batched attention (head is the leading batch dim) --------------
    qh = jnp.transpose(q.reshape(Tq, H, d_k), (1, 0, 2)).astype(bf16)  # (H,Tq,dk)
    kh = jnp.transpose(k.reshape(S, H, d_k), (1, 0, 2)).astype(bf16)   # (H,S,dk)
    vh = jnp.transpose(v.reshape(S, H, d_v), (1, 0, 2)).astype(bf16)   # (H,S,dv)

    s = jnp.einsum('hqd,hkd->hqk', qh, kh, preferred_element_type=f32)  # (H,Tq,S)
    s = s + add_mask

    m = jnp.max(s, axis=-1, keepdims=True)
    e = jnp.exp(s - m)                                # f32, unnormalized probs
    denom = jnp.sum(e, axis=-1, keepdims=True)        # (H, Tq, 1)
    inv = pl.reciprocal(denom, approx=True)           # EUP reciprocal (~free)

    # Context from UNNORMALIZED probs, scaled AFTER the AV matmul
    # (H*Tq*d_v multiplies instead of H*Tq*S).
    ctx = jnp.einsum('hqk,hkd->hqd', e.astype(bf16), vh,
                     preferred_element_type=f32)      # (H, Tq, dv)
    ctx = ctx * inv
    ctx2d = jnp.transpose(ctx, (1, 0, 2)).reshape(Tq, H * d_v)

    if emit_att:                                      # static flag
        att_refs[0][0] = e * inv                      # (H, Tq, S) f32

    attn_out = jnp.dot(ctx2d.astype(bf16), wo_ref[...],
                       preferred_element_type=f32) + bo_ref[...]
    y = _layer_norm(xq + attn_out, g1_ref[...], be1_ref[...])

    # --- position-wise FFN + residual + LN (still resident in VMEM) ----------
    h = jnp.dot(y.astype(bf16), w1_ref[...], preferred_element_type=f32) + b1_ref[...]
    h = jnp.maximum(h, 0.0)                           # ReLU
    z = jnp.dot(h.astype(bf16), w2_ref[...], preferred_element_type=f32) + b2_ref[...]
    out_ref[0] = _layer_norm(y + z, g2_ref[...], be2_ref[...])


# ----------------------------------------------------------------------------
# pallas_call wrapper
# ----------------------------------------------------------------------------
def _weight_spec(a, single_buffer):
    """Full-array block, replicated across the (batch, q-tile) grid."""
    nd = a.ndim
    idx = lambda b, qi, _nd=nd: (0,) * _nd
    if single_buffer:
        # index never changes -> double-buffering the weights is pure VMEM waste
        return pl.BlockSpec(a.shape, idx, pipeline_mode=pl.Buffered(1))
    return pl.BlockSpec(a.shape, idx)


def _pick_q_tile(S):
    if S <= 256:
        return S
    for t in (256, 128, 64, 32, 16, 8):
        if S % t == 0:
            return t
    return S


def _estimate_layer_vmem_bytes(S, D, Tq, H, d_k, d_v, d_ff, emit_att):
    f32, bf16 = 4, 2
    w = bf16 * (2 * D * H * d_k + D * H * d_v + H * d_v * D + 2 * D * d_ff)
    w += f32 * (2 * H * d_k + H * d_v + 3 * D + d_ff + 2 * D + 4 * D)
    io = f32 * 2 * (Tq * D + S * D + S + Tq * D)                 # dbl-buffered IO
    if emit_att:
        io += f32 * 2 * (H * Tq * S)
    interm = f32 * (S * (2 * H * d_k + H * d_v) + 3 * H * Tq * S
                    + 2 * Tq * H * d_v + Tq * d_ff + 4 * Tq * D)
    return 2 * w + io + interm


def encoder_layer_block(x, mask, layer_params, n_head, d_k, d_v,
                        return_attention=True, q_tile=None):
    B, S, D = x.shape
    H = n_head
    a, f = layer_params['attn'], layer_params['ffn']
    weights = (a['wq'], a['bq'], a['wk'], a['bk'], a['wv'], a['bv'],
               a['wo'], a['bo'], a['ln_g'], a['ln_b'],
               f['w1'], f['b1'], f['w2'], f['b2'], f['ln_g'], f['ln_b'])

    Tq = q_tile if q_tile is not None else _pick_q_tile(S)
    assert S % Tq == 0 and (Tq == S or Tq % 8 == 0)
    nq = S // Tq

    kernel = functools.partial(_encoder_layer_kernel, n_head=n_head,
                               d_k=d_k, d_v=d_v, emit_att=return_attention)

    out_sds = jax.ShapeDtypeStruct((B, S, D), jnp.float32)
    out_spec = pl.BlockSpec((1, Tq, D), lambda b, qi: (b, qi, 0))
    if return_attention:
        out_shapes = (out_sds, jax.ShapeDtypeStruct((B, H, S, S), jnp.float32))
        out_specs = (out_spec,
                     pl.BlockSpec((1, H, Tq, S), lambda b, qi: (b, 0, qi, 0)))
    else:
        out_shapes = out_sds
        out_specs = out_spec

    d_ff = f['w1'].shape[1]
    vmem_limit = int(min(60 * 2 ** 20,
                         max(32 * 2 ** 20,
                             2 * _estimate_layer_vmem_bytes(
                                 S, D, Tq, H, d_k, d_v, d_ff, return_attention))))

    def run(single_buffer_weights):
        in_specs = ([pl.BlockSpec((1, Tq, D), lambda b, qi: (b, qi, 0)),  # q rows
                     pl.BlockSpec((1, S, D), lambda b, qi: (b, 0, 0)),    # KV rows
                     pl.BlockSpec((1, 1, S), lambda b, qi: (b, 0, 0))]    # mask
                    + [_weight_spec(w, single_buffer_weights) for w in weights])
        return pl.pallas_call(
            kernel,
            out_shape=out_shapes,
            grid=(B, nq),
            in_specs=in_specs,
            out_specs=out_specs,
            compiler_params=pltpu.CompilerParams(
                dimension_semantics=("parallel", "parallel"),
                vmem_limit_bytes=vmem_limit),
        )(x, x, mask, *weights)

    single_buffer = hasattr(pl, "Buffered")
    try:
        result = run(single_buffer)
    except Exception:
        if not single_buffer:
            raise
        # jax build rejected pipeline_mode=pl.Buffered(1); fall back.
        result = run(False)

    if return_attention:
        out, att = result
        return out, att
    return result, None


# ----------------------------------------------------------------------------
# Encoder forward (embedding glue in JAX, layers in Pallas)
# ----------------------------------------------------------------------------
def sinusoidal_pe(max_len, d_model):
    pos = jnp.arange(max_len, dtype=jnp.float32)[:, None]
    i = jnp.arange(d_model, dtype=jnp.float32)[None, :]
    angle = pos / jnp.power(10000.0, (2.0 * jnp.floor(i / 2.0)) / d_model)
    return jnp.where(i % 2 == 0, jnp.sin(angle), jnp.cos(angle))


def encoder_forward(src_seq, src_mask, params, cfg,
                    return_attention=True, q_tile=None):
    """src_seq: (B, S) int32, src_mask: (B, 1, S) float32 (1=keep, 0=pad)."""
    B, S = src_seq.shape
    # TransformerEmbedding: token embedding + positional encoding
    # (dropout is identity in eval mode).
    x = params['emb'][src_seq] + params['pos'][:S][None, :, :]
    att_list = []
    for layer in params['layers']:
        x, att = encoder_layer_block(x, src_mask, layer,
                                     cfg['n_head'], cfg['d_k'], cfg['d_v'],
                                     return_attention=return_attention,
                                     q_tile=q_tile)
        att_list.append(att)
    return x, att_list


# ----------------------------------------------------------------------------
# deterministic parameter init (shapes match the PyTorch module; matmul
# weights stored bf16 = fast MXU path + half the weight DMA)
# ----------------------------------------------------------------------------
def init_params(key, cfg):
    D, dk, dv, dff = cfg['d_model'], cfg['d_k'], cfg['d_v'], cfg['d_ff']
    L, H = cfg['n_layers'], cfg['n_head']
    V, max_len, pad = cfg['vocab_size'], cfg['max_len'], cfg['pad_idx']

    keys = iter(jax.random.split(key, 4 + L * 16))

    def w(shape, dtype=jnp.float32):
        return (0.02 * jax.random.normal(next(keys), shape)).astype(dtype)

    emb = w((V, D)).at[pad].set(0.0)   # nn.Embedding(padding_idx=pad_idx)
    params = {'emb': emb, 'pos': sinusoidal_pe(max_len, D)}

    bf16 = jnp.bfloat16
    layers = []
    for _ in range(L):
        attn = {'wq': w((D, H * dk), bf16), 'bq': w((1, H * dk)),
                'wk': w((D, H * dk), bf16), 'bk': w((1, H * dk)),
                'wv': w((D, H * dv), bf16), 'bv': w((1, H * dv)),
                'wo': w((H * dv, D), bf16), 'bo': w((1, D)),
                'ln_g': jnp.ones((1, D), jnp.float32),
                'ln_b': jnp.zeros((1, D), jnp.float32)}
        ffn = {'w1': w((D, dff), bf16), 'b1': w((1, dff)),
               'w2': w((dff, D), bf16), 'b2': w((1, D)),
               'ln_g': jnp.ones((1, D), jnp.float32),
               'ln_b': jnp.zeros((1, D), jnp.float32)}
        layers.append({'attn': attn, 'ffn': ffn})
    params['layers'] = layers
    return params


# ----------------------------------------------------------------------------
# pure-JAX reference (mirrors the kernel's bf16-matmul / f32-accumulate recipe)
# ----------------------------------------------------------------------------
def _bmm(x, w):
    return jnp.einsum('...d,df->...f', x.astype(jnp.bfloat16),
                      w.astype(jnp.bfloat16), preferred_element_type=jnp.float32)


def ref_forward(src_seq, src_mask, params, cfg):
    B, S = src_seq.shape
    H, dk, dv = cfg['n_head'], cfg['d_k'], cfg['d_v']
    bf16 = jnp.bfloat16
    x = params['emb'][src_seq] + params['pos'][:S][None]
    atts = []
    for layer in params['layers']:
        a = layer['attn']
        scale = 1.0 / (dk ** 0.5)
        q = (_bmm(x, a['wq']) + a['bq']) * scale
        k = _bmm(x, a['wk']) + a['bk']
        v = _bmm(x, a['wv']) + a['bv']
        qh = q.reshape(B, S, H, dk).astype(bf16)
        kh = k.reshape(B, S, H, dk).astype(bf16)
        vh = v.reshape(B, S, H, dv).astype(bf16)
        s = jnp.einsum('bqhd,bkhd->bhqk', qh, kh,
                       preferred_element_type=jnp.float32)
        s = s + (1.0 - src_mask[:, :, None, :]) * (-1e9)
        m = jnp.max(s, axis=-1, keepdims=True)
        e = jnp.exp(s - m)
        denom = jnp.sum(e, axis=-1, keepdims=True)
        att = e / denom
        ctx = jnp.einsum('bhqk,bkhd->bhqd', e.astype(bf16), vh,
                         preferred_element_type=jnp.float32) / denom
        ctx = jnp.transpose(ctx, (0, 2, 1, 3)).reshape(B, S, H * dv)
        y = _bmm(ctx, a['wo']) + a['bo']
        x = _layer_norm(x + y, a['ln_g'], a['ln_b'])
        f = layer['ffn']
        h = jnp.maximum(_bmm(x, f['w1']) + f['b1'], 0.0)
        z = _bmm(h, f['w2']) + f['b2']
        x = _layer_norm(x + z, f['ln_g'], f['ln_b'])
        atts.append(att)
    return x, atts


# ----------------------------------------------------------------------------
if __name__ == "__main__":
    cfg = dict(d_model=32, d_k=8, d_v=8, d_ff=64, n_layers=2, n_head=4,
               max_len=32, vocab_size=50, pad_idx=0, dropout=0.1)

    key = jax.random.PRNGKey(0)
    pkey, dkey = jax.random.split(key)
    params = init_params(pkey, cfg)

    B, S = 2, 16
    src = jax.random.randint(dkey, (B, S), 1, cfg['vocab_size'], dtype=jnp.int32)
    src = src.at[:, -3:].set(cfg['pad_idx'])                      # pad the tail
    src_mask = (src != cfg['pad_idx']).astype(jnp.float32)[:, None, :]  # (B,1,S)

    # Full module semantics (attention maps returned), exercising 2 query tiles.
    out, att_list = encoder_forward(src, src_mask, params, cfg,
                                    return_attention=True, q_tile=8)
    out = jax.block_until_ready(out)
    att_list = [jax.block_until_ready(a) for a in att_list]

    ref_out, ref_atts = ref_forward(src, src_mask, params, cfg)
    assert out.shape == (B, S, cfg['d_model'])
    # tolerance covers the approximate (EUP) softmax reciprocal
    assert jnp.allclose(out, ref_out, atol=1e-2, rtol=1e-2), \
        float(jnp.max(jnp.abs(out - ref_out)))
    for a, ra in zip(att_list, ref_atts):
        assert a.shape == (B, cfg['n_head'], S, S)
        assert jnp.allclose(a, ra, atol=1e-2, rtol=1e-2)

    # Perf mode: attention-probability output skipped -> same hidden states.
    out2, _ = encoder_forward(src, src_mask, params, cfg, return_attention=False)
    out2 = jax.block_until_ready(out2)
    assert jnp.allclose(out, out2, atol=2e-3, rtol=2e-3)

    # TODO(synk): dropout layers are identity here (inference semantics); no
    # stochastic-training path is implemented in-kernel.
    print("KERNEL_OK")
</pallas_src>

<mosaic_0001>
module attributes {stable_mosaic.version = 11 : i64} {
  func.func @_encoder_layer_kernel(%arg0: i32, %arg1: i32, %arg2: memref<1x8x32xf32, #tpu.memory_space<vmem>>, %arg3: memref<1x16x32xf32, #tpu.memory_space<vmem>>, %arg4: memref<1x1x16xf32, #tpu.memory_space<vmem>>, %arg5: memref<32x32xbf16, #tpu.memory_space<vmem>>, %arg6: memref<1x32xf32, #tpu.memory_space<vmem>>, %arg7: memref<32x32xbf16, #tpu.memory_space<vmem>>, %arg8: memref<1x32xf32, #tpu.memory_space<vmem>>, %arg9: memref<32x32xbf16, #tpu.memory_space<vmem>>, %arg10: memref<1x32xf32, #tpu.memory_space<vmem>>, %arg11: memref<32x32xbf16, #tpu.memory_space<vmem>>, %arg12: memref<1x32xf32, #tpu.memory_space<vmem>>, %arg13: memref<1x32xf32, #tpu.memory_space<vmem>>, %arg14: memref<1x32xf32, #tpu.memory_space<vmem>>, %arg15: memref<32x64xbf16, #tpu.memory_space<vmem>>, %arg16: memref<1x64xf32, #tpu.memory_space<vmem>>, %arg17: memref<64x32xbf16, #tpu.memory_space<vmem>>, %arg18: memref<1x32xf32, #tpu.memory_space<vmem>>, %arg19: memref<1x32xf32, #tpu.memory_space<vmem>>, %arg20: memref<1x32xf32, #tpu.memory_space<vmem>>, %arg21: memref<1x8x32xf32, #tpu.memory_space<vmem>>, %arg22: memref<1x4x8x16xf32, #tpu.memory_space<vmem>>) attributes {dimension_semantics = [#tpu.dimension_semantics<parallel>, #tpu.dimension_semantics<parallel>], iteration_bounds = array<i64: 2, 2>, scalar_prefetch = 0 : i64, scratch_operands = 0 : i64, tpu.core_type = #tpu.core_type<tc>, window_params = [{transform_indices = @transform_0, window_bounds = array<i64: 1, 8, 32>}, {transform_indices = @transform_1, window_bounds = array<i64: 1, 16, 32>}, {transform_indices = @transform_2, window_bounds = array<i64: 1, 1, 16>}, {pipeline_mode = #tpu.pipeline_mode<synchronous>, transform_indices = @transform_3, window_bounds = array<i64: 32, 32>}, {pipeline_mode = #tpu.pipeline_mode<synchronous>, transform_indices = @transform_4, window_bounds = array<i64: 1, 32>}, {pipeline_mode = #tpu.pipeline_mode<synchronous>, transform_indices = @transform_5, window_bounds = array<i64: 32, 32>}, {pipeline_mode = #tpu.pipeline_mode<synchronous>, transform_indices = @transform_6, window_bounds = array<i64: 1, 32>}, {pipeline_mode = #tpu.pipeline_mode<synchronous>, transform_indices = @transform_7, window_bounds = array<i64: 32, 32>}, {pipeline_mode = #tpu.pipeline_mode<synchronous>, transform_indices = @transform_8, window_bounds = array<i64: 1, 32>}, {pipeline_mode = #tpu.pipeline_mode<synchronous>, transform_indices = @transform_9, window_bounds = array<i64: 32, 32>}, {pipeline_mode = #tpu.pipeline_mode<synchronous>, transform_indices = @transform_10, window_bounds = array<i64: 1, 32>}, {pipeline_mode = #tpu.pipeline_mode<synchronous>, transform_indices = @transform_11, window_bounds = array<i64: 1, 32>}, {pipeline_mode = #tpu.pipeline_mode<synchronous>, transform_indices = @transform_12, window_bounds = array<i64: 1, 32>}, {pipeline_mode = #tpu.pipeline_mode<synchronous>, transform_indices = @transform_13, window_bounds = array<i64: 32, 64>}, {pipeline_mode = #tpu.pipeline_mode<synchronous>, transform_indices = @transform_14, window_bounds = array<i64: 1, 64>}, {pipeline_mode = #tpu.pipeline_mode<synchronous>, transform_indices = @transform_15, window_bounds = array<i64: 64, 32>}, {pipeline_mode = #tpu.pipeline_mode<synchronous>, transform_indices = @transform_16, window_bounds = array<i64: 1, 32>}, {pipeline_mode = #tpu.pipeline_mode<synchronous>, transform_indices = @transform_17, window_bounds = array<i64: 1, 32>}, {pipeline_mode = #tpu.pipeline_mode<synchronous>, transform_indices = @transform_18, window_bounds = array<i64: 1, 32>}, {transform_indices = @transform_19, window_bounds = array<i64: 1, 8, 32>}, {transform_indices = @transform_20, window_bounds = array<i64: 1, 4, 8, 16>}]} {
    %c0 = arith.constant 0 : index
    %c0_0 = arith.constant 0 : index
    %c0_1 = arith.constant 0 : index
    %0 = vector.load %arg2[%c0, %c0_0, %c0_1] : memref<1x8x32xf32, #tpu.memory_space<vmem>>, vector<1x8x32xf32>
    %1 = vector.shape_cast %0 : vector<1x8x32xf32> to vector<8x32xf32>
    %c0_2 = arith.constant 0 : index
    %c0_3 = arith.constant 0 : index
    %c0_4 = arith.constant 0 : index
    %2 = vector.load %arg3[%c0_2, %c0_3, %c0_4] : memref<1x16x32xf32, #tpu.memory_space<vmem>>, vector<1x16x32xf32>
    %3 = vector.shape_cast %2 : vector<1x16x32xf32> to vector<16x32xf32>
    %c0_5 = arith.constant 0 : index
    %c0_6 = arith.constant 0 : index
    %c0_7 = arith.constant 0 : index
    %4 = vector.load %arg4[%c0_5, %c0_6, %c0_7] : memref<1x1x16xf32, #tpu.memory_space<vmem>>, vector<1x1x16xf32>
    %5 = vector.shape_cast %4 : vector<1x1x16xf32> to vector<1x16xf32>
    %cst = arith.constant 1.000000e+00 : f32
    %6 = vector.broadcast %cst : f32 to vector<1x16xf32>
    %7 = arith.subf %6, %5 : vector<1x16xf32>
    %cst_8 = arith.constant -1.000000e+09 : f32
    %8 = vector.broadcast %cst_8 : f32 to vector<1x16xf32>
    %9 = arith.mulf %7, %8 : vector<1x16xf32>
    %10 = arith.truncf %1 : vector<8x32xf32> to vector<8x32xbf16>
    %11 = arith.truncf %3 : vector<16x32xf32> to vector<16x32xbf16>
    %c0_9 = arith.constant 0 : index
    %c0_10 = arith.constant 0 : index
    %12 = vector.load %arg5[%c0_9, %c0_10] : memref<32x32xbf16, #tpu.memory_space<vmem>>, vector<32x32xbf16>
    %cst_11 = arith.constant dense<0.000000e+00> : vector<8x32xf32>
    %13 = tpu.matmul %10, %12, %cst_11 {dimension_numbers = #tpu.dot_dimension_numbers<[1], [0], [0], [1], [0, 0, 1, 1], [], []>} : vector<8x32xbf16>, vector<32x32xbf16>, vector<8x32xf32> -> vector<8x32xf32>
    %c0_12 = arith.constant 0 : index
    %c0_13 = arith.constant 0 : index
    %14 = vector.load %arg6[%c0_12, %c0_13] : memref<1x32xf32, #tpu.memory_space<vmem>>, vector<1x32xf32>
    %15 = vector.broadcast %14 : vector<1x32xf32> to vector<8x32xf32>
    %16 = arith.addf %13, %15 : vector<8x32xf32>
    %cst_14 = arith.constant 0.353553385 : f32
    %17 = vector.broadcast %cst_14 : f32 to vector<8x32xf32>
    %18 = arith.mulf %16, %17 : vector<8x32xf32>
    %c0_15 = arith.constant 0 : index
    %c0_16 = arith.constant 0 : index
    %19 = vector.load %arg7[%c0_15, %c0_16] : memref<32x32xbf16, #tpu.memory_space<vmem>>, vector<32x32xbf16>
    %cst_17 = arith.constant dense<0.000000e+00> : vector<16x32xf32>
    %20 = tpu.matmul %11, %19, %cst_17 {dimension_numbers = #tpu.dot_dimension_numbers<[1], [0], [0], [1], [0, 0, 1, 1], [], []>} : vector<16x32xbf16>, vector<32x32xbf16>, vector<16x32xf32> -> vector<16x32xf32>
    %c0_18 = arith.constant 0 : index
    %c0_19 = arith.constant 0 : index
    %21 = vector.load %arg8[%c0_18, %c0_19] : memref<1x32xf32, #tpu.memory_space<vmem>>, vector<1x32xf32>
    %22 = vector.broadcast %21 : vector<1x32xf32> to vector<16x32xf32>
    %23 = arith.addf %20, %22 : vector<16x32xf32>
    %c0_20 = arith.constant 0 : index
    %c0_21 = arith.constant 0 : index
    %24 = vector.load %arg9[%c0_20, %c0_21] : memref<32x32xbf16, #tpu.memory_space<vmem>>, vector<32x32xbf16>
    %cst_22 = arith.constant dense<0.000000e+00> : vector<16x32xf32>
    %25 = tpu.matmul %11, %24, %cst_22 {dimension_numbers = #tpu.dot_dimension_numbers<[1], [0], [0], [1], [0, 0, 1, 1], [], []>} : vector<16x32xbf16>, vector<32x32xbf16>, vector<16x32xf32> -> vector<16x32xf32>
    %c0_23 = arith.constant 0 : index
    %c0_24 = arith.constant 0 : index
    %26 = vector.load %arg10[%c0_23, %c0_24] : memref<1x32xf32, #tpu.memory_space<vmem>>, vector<1x32xf32>
    %27 = vector.broadcast %26 : vector<1x32xf32> to vector<16x32xf32>
    %28 = arith.addf %25, %27 : vector<16x32xf32>
    %29 = vector.shape_cast %18 : vector<8x32xf32> to vector<8x4x8xf32>
    %30 = tpu.transpose %29, [1, 0, 2] : vector<8x4x8xf32> -> vector<4x8x8xf32>
    %31 = arith.truncf %30 : vector<4x8x8xf32> to vector<4x8x8xbf16>
    %32 = vector.shape_cast %23 : vector<16x32xf32> to vector<16x4x8xf32>
    %33 = tpu.transpose %32, [1, 0, 2] : vector<16x4x8xf32> -> vector<4x16x8xf32>
    %34 = arith.truncf %33 : vector<4x16x8xf32> to vector<4x16x8xbf16>
    %35 = vector.shape_cast %28 : vector<16x32xf32> to vector<16x4x8xf32>
    %36 = tpu.transpose %35, [1, 0, 2] : vector<16x4x8xf32> -> vector<4x16x8xf32>
    %37 = arith.truncf %36 : vector<4x16x8xf32> to vector<4x16x8xbf16>
    "tpu.trace_start"() <{level = 10 : i32, message = "hqd,hkd->hqk"}> : () -> ()
    %cst_25 = arith.constant dense<0.000000e+00> : vector<4x8x16xf32>
    %38 = tpu.matmul %31, %34, %cst_25 {dimension_numbers = #tpu.dot_dimension_numbers<[2], [2], [1], [1], [0, 0, 0, 1, 1, 1], [0], [0]>} : vector<4x8x8xbf16>, vector<4x16x8xbf16>, vector<4x8x16xf32> -> vector<4x8x16xf32>
    "tpu.trace_stop"() : () -> ()
    %39 = vector.shape_cast %9 : vector<1x16xf32> to vector<1x1x16xf32>
    %40 = vector.broadcast %39 : vector<1x1x16xf32> to vector<4x8x16xf32>
    %41 = arith.addf %38, %40 : vector<4x8x16xf32>
    %cst_26 = arith.constant dense<0xFF800000> : vector<4x8xf32>
    %42 = vector.multi_reduction <maximumf>, %41, %cst_26 [2] : vector<4x8x16xf32> to vector<4x8xf32>
    %43 = vector.shape_cast %42 : vector<4x8xf32> to vector<4x8x1xf32>
    %44 = vector.broadcast %43 : vector<4x8x1xf32> to vector<4x8x16xf32>
    %45 = arith.subf %41, %44 : vector<4x8x16xf32>
    %46 = math.exp %45 : vector<4x8x16xf32>
    %cst_27 = arith.constant dense<0.000000e+00> : vector<4x8xf32>
    %47 = vector.multi_reduction <add>, %46, %cst_27 [2] : vector<4x8x16xf32> to vector<4x8xf32>
    %48 = vector.shape_cast %47 : vector<4x8xf32> to vector<4x8x1xf32>
    %49 = tpu.reciprocal %48 {approx = true} : vector<4x8x1xf32> -> vector<4x8x1xf32>
    %50 = arith.truncf %46 : vector<4x8x16xf32> to vector<4x8x16xbf16>
    "tpu.trace_start"() <{level = 10 : i32, message = "hqk,hkd->hqd"}> : () -> ()
    %cst_28 = arith.constant dense<0.000000e+00> : vector<4x8x8xf32>
    %51 = tpu.matmul %50, %37, %cst_28 {dimension_numbers = #tpu.dot_dimension_numbers<[2], [1], [1], [2], [0, 0, 0, 1, 1, 2], [0], [0]>} : vector<4x8x16xbf16>, vector<4x16x8xbf16>, vector<4x8x8xf32> -> vector<4x8x8xf32>
    "tpu.trace_stop"() : () -> ()
    %52 = vector.broadcast %49 : vector<4x8x1xf32> to vector<4x8x8xf32>
    %53 = arith.mulf %51, %52 : vector<4x8x8xf32>
    %54 = tpu.transpose %53, [1, 0, 2] : vector<4x8x8xf32> -> vector<8x4x8xf32>
    %55 = vector.shape_cast %54 : vector<8x4x8xf32> to vector<8x32xf32>
    %56 = vector.broadcast %49 : vector<4x8x1xf32> to vector<4x8x16xf32>
    %57 = arith.mulf %46, %56 : vector<4x8x16xf32>
    %c0_29 = arith.constant 0 : index
    %c0_30 = arith.constant 0 : index
    %c0_31 = arith.constant 0 : index
    %c0_32 = arith.constant 0 : index
    %58 = vector.load %arg22[%c0_29, %c0_30, %c0_31, %c0_32] : memref<1x4x8x16xf32, #tpu.memory_space<vmem>>, vector<1x4x8x16xf32>
    %59 = vector.shape_cast %58 : vector<1x4x8x16xf32> to vector<4x8x16xf32>
    %60 = vector.shape_cast %57 : vector<4x8x16xf32> to vector<1x4x8x16xf32>
    tpu.vector_store %arg22[%c0_29, %c0_30, %c0_31, %c0_32], %60 {strides = array<i32>} : memref<1x4x8x16xf32, #tpu.memory_space<vmem>>, vector<1x4x8x16xf32>,
    %61 = arith.truncf %55 : vector<8x32xf32> to vector<8x32xbf16>
    %c0_33 = arith.constant 0 : index
    %c0_34 = arith.constant 0 : index
    %62 = vector.load %arg11[%c0_33, %c0_34] : memref<32x32xbf16, #tpu.memory_space<vmem>>, vector<32x32xbf16>
    %cst_35 = arith.constant dense<0.000000e+00> : vector<8x32xf32>
    %63 = tpu.matmul %61, %62, %cst_35 {dimension_numbers = #tpu.dot_dimension_numbers<[1], [0], [0], [1], [0, 0, 1, 1], [], []>} : vector<8x32xbf16>, vector<32x32xbf16>, vector<8x32xf32> -> vector<8x32xf32>
    %c0_36 = arith.constant 0 : index
    %c0_37 = arith.constant 0 : index
    %64 = vector.load %arg12[%c0_36, %c0_37] : memref<1x32xf32, #tpu.memory_space<vmem>>, vector<1x32xf32>
    %65 = vector.broadcast %64 : vector<1x32xf32> to vector<8x32xf32>
    %66 = arith.addf %63, %65 : vector<8x32xf32>
    %67 = arith.addf %1, %66 : vector<8x32xf32>
    %c0_38 = arith.constant 0 : index
    %c0_39 = arith.constant 0 : index
    %68 = vector.load %arg13[%c0_38, %c0_39] : memref<1x32xf32, #tpu.memory_space<vmem>>, vector<1x32xf32>
    %c0_40 = arith.constant 0 : index
    %c0_41 = arith.constant 0 : index
    %69 = vector.load %arg14[%c0_40, %c0_41] : memref<1x32xf32, #tpu.memory_space<vmem>>, vector<1x32xf32>
    %cst_42 = arith.constant dense<0.000000e+00> : vector<8xf32>
    %70 = vector.multi_reduction <add>, %67, %cst_42 [1] : vector<8x32xf32> to vector<8xf32>
    %71 = vector.shape_cast %70 : vector<8xf32> to vector<8x1xf32>
    %72 = arith.mulf %67, %67 : vector<8x32xf32>
    %cst_43 = arith.constant dense<0.000000e+00> : vector<8xf32>
    %73 = vector.multi_reduction <add>, %72, %cst_43 [1] : vector<8x32xf32> to vector<8xf32>
    %74 = vector.shape_cast %73 : vector<8xf32> to vector<8x1xf32>
    %cst_44 = arith.constant 3.200000e+01 : f32
    %75 = vector.broadcast %cst_44 : f32 to vector<8x1xf32>
    %76 = arith.divf %71, %75 : vector<8x1xf32>
    %cst_45 = arith.constant 3.200000e+01 : f32
    %77 = vector.broadcast %cst_45 : f32 to vector<8x1xf32>
    %78 = arith.divf %74, %77 : vector<8x1xf32>
    %79 = arith.mulf %76, %76 : vector<8x1xf32>
    %80 = arith.subf %78, %79 : vector<8x1xf32>
    %81 = vector.broadcast %76 : vector<8x1xf32> to vector<8x32xf32>
    %82 = arith.subf %67, %81 : vector<8x32xf32>
    %cst_46 = arith.constant 9.99999974E-6 : f32
    %83 = vector.broadcast %cst_46 : f32 to vector<8x1xf32>
    %84 = arith.addf %80, %83 : vector<8x1xf32>
    %85 = math.rsqrt %84 : vector<8x1xf32>
    %86 = vector.broadcast %85 : vector<8x1xf32> to vector<8x32xf32>
    %87 = arith.mulf %82, %86 : vector<8x32xf32>
    %88 = vector.broadcast %68 : vector<1x32xf32> to vector<8x32xf32>
    %89 = arith.mulf %87, %88 : vector<8x32xf32>
    %90 = vector.broadcast %69 : vector<1x32xf32> to vector<8x32xf32>
    %91 = arith.addf %89, %90 : vector<8x32xf32>
    %92 = arith.truncf %91 : vector<8x32xf32> to vector<8x32xbf16>
    %c0_47 = arith.constant 0 : index
    %c0_48 = arith.constant 0 : index
    %93 = vector.load %arg15[%c0_47, %c0_48] : memref<32x64xbf16, #tpu.memory_space<vmem>>, vector<32x64xbf16>
    %cst_49 = arith.constant dense<0.000000e+00> : vector<8x64xf32>
    %94 = tpu.matmul %92, %93, %cst_49 {dimension_numbers = #tpu.dot_dimension_numbers<[1], [0], [0], [1], [0, 0, 1, 1], [], []>} : vector<8x32xbf16>, vector<32x64xbf16>, vector<8x64xf32> -> vector<8x64xf32>
    %c0_50 = arith.constant 0 : index
    %c0_51 = arith.constant 0 : index
    %95 = vector.load %arg16[%c0_50, %c0_51] : memref<1x64xf32, #tpu.memory_space<vmem>>, vector<1x64xf32>
    %96 = vector.broadcast %95 : vector<1x64xf32> to vector<8x64xf32>
    %97 = arith.addf %94, %96 : vector<8x64xf32>
    %cst_52 = arith.constant 0.000000e+00 : f32
    %98 = vector.broadcast %cst_52 : f32 to vector<8x64xf32>
    %99 = arith.maximumf %97, %98 : vector<8x64xf32>
    %100 = arith.truncf %99 : vector<8x64xf32> to vector<8x64xbf16>
    %c0_53 = arith.constant 0 : index
    %c0_54 = arith.constant 0 : index
    %101 = vector.load %arg17[%c0_53, %c0_54] : memref<64x32xbf16, #tpu.memory_space<vmem>>, vector<64x32xbf16>
    %cst_55 = arith.constant dense<0.000000e+00> : vector<8x32xf32>
    %102 = tpu.matmul %100, %101, %cst_55 {dimension_numbers = #tpu.dot_dimension_numbers<[1], [0], [0], [1], [0, 0, 1, 1], [], []>} : vector<8x64xbf16>, vector<64x32xbf16>, vector<8x32xf32> -> vector<8x32xf32>
    %c0_56 = arith.constant 0 : index
    %c0_57 = arith.constant 0 : index
    %103 = vector.load %arg18[%c0_56, %c0_57] : memref<1x32xf32, #tpu.memory_space<vmem>>, vector<1x32xf32>
    %104 = vector.broadcast %103 : vector<1x32xf32> to vector<8x32xf32>
    %105 = arith.addf %102, %104 : vector<8x32xf32>
    %106 = arith.addf %91, %105 : vector<8x32xf32>
    %c0_58 = arith.constant 0 : index
    %c0_59 = arith.constant 0 : index
    %107 = vector.load %arg19[%c0_58, %c0_59] : memref<1x32xf32, #tpu.memory_space<vmem>>, vector<1x32xf32>
    %c0_60 = arith.constant 0 : index
    %c0_61 = arith.constant 0 : index
    %108 = vector.load %arg20[%c0_60, %c0_61] : memref<1x32xf32, #tpu.memory_space<vmem>>, vector<1x32xf32>
    %cst_62 = arith.constant dense<0.000000e+00> : vector<8xf32>
    %109 = vector.multi_reduction <add>, %106, %cst_62 [1] : vector<8x32xf32> to vector<8xf32>
    %110 = vector.shape_cast %109 : vector<8xf32> to vector<8x1xf32>
    %111 = arith.mulf %106, %106 : vector<8x32xf32>
    %cst_63 = arith.constant dense<0.000000e+00> : vector<8xf32>
    %112 = vector.multi_reduction <add>, %111, %cst_63 [1] : vector<8x32xf32> to vector<8xf32>
    %113 = vector.shape_cast %112 : vector<8xf32> to vector<8x1xf32>
    %cst_64 = arith.constant 3.200000e+01 : f32
    %114 = vector.broadcast %cst_64 : f32 to vector<8x1xf32>
    %115 = arith.divf %110, %114 : vector<8x1xf32>
    %cst_65 = arith.constant 3.200000e+01 : f32
    %116 = vector.broadcast %cst_65 : f32 to vector<8x1xf32>
    %117 = arith.divf %113, %116 : vector<8x1xf32>
    %118 = arith.mulf %115, %115 : vector<8x1xf32>
    %119 = arith.subf %117, %118 : vector<8x1xf32>
    %120 = vector.broadcast %115 : vector<8x1xf32> to vector<8x32xf32>
    %121 = arith.subf %106, %120 : vector<8x32xf32>
    %cst_66 = arith.constant 9.99999974E-6 : f32
    %122 = vector.broadcast %cst_66 : f32 to vector<8x1xf32>
    %123 = arith.addf %119, %122 : vector<8x1xf32>
    %124 = math.rsqrt %123 : vector<8x1xf32>
    %125 = vector.broadcast %124 : vector<8x1xf32> to vector<8x32xf32>
    %126 = arith.mulf %121, %125 : vector<8x32xf32>
    %127 = vector.broadcast %107 : vector<1x32xf32> to vector<8x32xf32>
    %128 = arith.mulf %126, %127 : vector<8x32xf32>
    %129 = vector.broadcast %108 : vector<1x32xf32> to vector<8x32xf32>
    %130 = arith.addf %128, %129 : vector<8x32xf32>
    %c0_67 = arith.constant 0 : index
    %c0_68 = arith.constant 0 : index
    %c0_69 = arith.constant 0 : index
    %131 = vector.load %arg21[%c0_67, %c0_68, %c0_69] : memref<1x8x32xf32, #tpu.memory_space<vmem>>, vector<1x8x32xf32>
    %132 = vector.shape_cast %131 : vector<1x8x32xf32> to vector<8x32xf32>
    %133 = vector.shape_cast %130 : vector<8x32xf32> to vector<1x8x32xf32>
    tpu.vector_store %arg21[%c0_67, %c0_68, %c0_69], %133 {strides = array<i32>} : memref<1x8x32xf32, #tpu.memory_space<vmem>>, vector<1x8x32xf32>,
    return
  }
  func.func @transform_0(%arg0: i32, %arg1: i32) -> (i32, i32, i32) {
    %c0_i32 = arith.constant 0 : i32
    %c0_i32_0 = arith.constant 0 : i32
    return %arg0, %arg1, %c0_i32 : i32, i32, i32
  }
  func.func @transform_1(%arg0: i32, %arg1: i32) -> (i32, i32, i32) {
    %c0_i32 = arith.constant 0 : i32
    %c0_i32_0 = arith.constant 0 : i32
    %c0_i32_1 = arith.constant 0 : i32
    return %arg0, %c0_i32, %c0_i32_0 : i32, i32, i32
  }
  func.func @transform_2(%arg0: i32, %arg1: i32) -> (i32, i32, i32) {
    %c0_i32 = arith.constant 0 : i32
    %c0_i32_0 = arith.constant 0 : i32
    %c0_i32_1 = arith.constant 0 : i32
    return %arg0, %c0_i32, %c0_i32_0 : i32, i32, i32
  }
  func.func @transform_3(%arg0: i32, %arg1: i32) -> (i32, i32) {
    %c0_i32 = arith.constant 0 : i32
    %c0_i32_0 = arith.constant 0 : i32
    %c0_i32_1 = arith.constant 0 : i32
    return %c0_i32, %c0_i32_0 : i32, i32
  }
  func.func @transform_4(%arg0: i32, %arg1: i32) -> (i32, i32) {
    %c0_i32 = arith.constant 0 : i32
    %c0_i32_0 = arith.constant 0 : i32
    %c0_i32_1 = arith.constant 0 : i32
    return %c0_i32, %c0_i32_0 : i32, i32
  }
  func.func @transform_5(%arg0: i32, %arg1: i32) -> (i32, i32) {
    %c0_i32 = arith.constant 0 : i32
    %c0_i32_0 = arith.constant 0 : i32
    %c0_i32_1 = arith.constant 0 : i32
    return %c0_i32, %c0_i32_0 : i32, i32
  }
  func.func @transform_6(%arg0: i32, %arg1: i32) -> (i32, i32) {
    %c0_i32 = arith.constant 0 : i32
    %c0_i32_0 = arith.constant 0 : i32
    %c0_i32_1 = arith.constant 0 : i32
    return %c0_i32, %c0_i32_0 : i32, i32
  }
  func.func @transform_7(%arg0: i32, %arg1: i32) -> (i32, i32) {
    %c0_i32 = arith.constant 0 : i32
    %c0_i32_0 = arith.constant 0 : i32
    %c0_i32_1 = arith.constant 0 : i32
    return %c0_i32, %c0_i32_0 : i32, i32
  }
  func.func @transform_8(%arg0: i32, %arg1: i32) -> (i32, i32) {
    %c0_i32 = arith.constant 0 : i32
    %c0_i32_0 = arith.constant 0 : i32
    %c0_i32_1 = arith.constant 0 : i32
    return %c0_i32, %c0_i32_0 : i32, i32
  }
  func.func @transform_9(%arg0: i32, %arg1: i32) -> (i32, i32) {
    %c0_i32 = arith.constant 0 : i32
    %c0_i32_0 = arith.constant 0 : i32
    %c0_i32_1 = arith.constant 0 : i32
    return %c0_i32, %c0_i32_0 : i32, i32
  }
  func.func @transform_10(%arg0: i32, %arg1: i32) -> (i32, i32) {
    %c0_i32 = arith.constant 0 : i32
    %c0_i32_0 = arith.constant 0 : i32
    %c0_i32_1 = arith.constant 0 : i32
    return %c0_i32, %c0_i32_0 : i32, i32
  }
  func.func @transform_11(%arg0: i32, %arg1: i32) -> (i32, i32) {
    %c0_i32 = arith.constant 0 : i32
    %c0_i32_0 = arith.constant 0 : i32
    %c0_i32_1 = arith.constant 0 : i32
    return %c0_i32, %c0_i32_0 : i32, i32
  }
  func.func @transform_12(%arg0: i32, %arg1: i32) -> (i32, i32) {
    %c0_i32 = arith.constant 0 : i32
    %c0_i32_0 = arith.constant 0 : i32
    %c0_i32_1 = arith.constant 0 : i32
    return %c0_i32, %c0_i32_0 : i32, i32
  }
  func.func @transform_13(%arg0: i32, %arg1: i32) -> (i32, i32) {
    %c0_i32 = arith.constant 0 : i32
    %c0_i32_0 = arith.constant 0 : i32
    %c0_i32_1 = arith.constant 0 : i32
    return %c0_i32, %c0_i32_0 : i32, i32
  }
  func.func @transform_14(%arg0: i32, %arg1: i32) -> (i32, i32) {
    %c0_i32 = arith.constant 0 : i32
    %c0_i32_0 = arith.constant 0 : i32
    %c0_i32_1 = arith.constant 0 : i32
    return %c0_i32, %c0_i32_0 : i32, i32
  }
  func.func @transform_15(%arg0: i32, %arg1: i32) -> (i32, i32) {
    %c0_i32 = arith.constant 0 : i32
    %c0_i32_0 = arith.constant 0 : i32
    %c0_i32_1 = arith.constant 0 : i32
    return %c0_i32, %c0_i32_0 : i32, i32
  }
  func.func @transform_16(%arg0: i32, %arg1: i32) -> (i32, i32) {
    %c0_i32 = arith.constant 0 : i32
    %c0_i32_0 = arith.constant 0 : i32
    %c0_i32_1 = arith.constant 0 : i32
    return %c0_i32, %c0_i32_0 : i32, i32
  }
  func.func @transform_17(%arg0: i32, %arg1: i32) -> (i32, i32) {
    %c0_i32 = arith.constant 0 : i32
    %c0_i32_0 = arith.constant 0 : i32
    %c0_i32_1 = arith.constant 0 : i32
    return %c0_i32, %c0_i32_0 : i32, i32
  }
  func.func @transform_18(%arg0: i32, %arg1: i32) -> (i32, i32) {
    %c0_i32 = arith.constant 0 : i32
    %c0_i32_0 = arith.constant 0 : i32
    %c0_i32_1 = arith.constant 0 : i32
    return %c0_i32, %c0_i32_0 : i32, i32
  }
  func.func @transform_19(%arg0: i32, %arg1: i32) -> (i32, i32, i32) {
    %c0_i32 = arith.constant 0 : i32
    %c0_i32_0 = arith.constant 0 : i32
    return %arg0, %arg1, %c0_i32 : i32, i32, i32
  }
  func.func @transform_20(%arg0: i32, %arg1: i32) -> (i32, i32, i32, i32) {
    %c0_i32 = arith.constant 0 : i32
    %c0_i32_0 = arith.constant 0 : i32
    %c0_i32_1 = arith.constant 0 : i32
    return %arg0, %c0_i32, %arg1, %c0_i32_0 : i32, i32, i32, i32
  }
}

module attributes {stable_mosaic.version = 11 : i64} {
  func.func @_encoder_layer_kernel(%arg0: i32, %arg1: i32, %arg2: memref<1x8x32xf32, #tpu.memory_space<vmem>>, %arg3: memref<1x16x32xf32, #tpu.memory_space<vmem>>, %arg4: memref<1x1x16xf32, #tpu.memory_space<vmem>>, %arg5: memref<32x32xbf16, #tpu.memory_space<vmem>>, %arg6: memref<1x32xf32, #tpu.memory_space<vmem>>, %arg7: memref<32x32xbf16, #tpu.memory_space<vmem>>, %arg8: memref<1x32xf32, #tpu.memory_space<vmem>>, %arg9: memref<32x32xbf16, #tpu.memory_space<vmem>>, %arg10: memref<1x32xf32, #tpu.memory_space<vmem>>, %arg11: memref<32x32xbf16, #tpu.memory_space<vmem>>, %arg12: memref<1x32xf32, #tpu.memory_space<vmem>>, %arg13: memref<1x32xf32, #tpu.memory_space<vmem>>, %arg14: memref<1x32xf32, #tpu.memory_space<vmem>>, %arg15: memref<32x64xbf16, #tpu.memory_space<vmem>>, %arg16: memref<1x64xf32, #tpu.memory_space<vmem>>, %arg17: memref<64x32xbf16, #tpu.memory_space<vmem>>, %arg18: memref<1x32xf32, #tpu.memory_space<vmem>>, %arg19: memref<1x32xf32, #tpu.memory_space<vmem>>, %arg20: memref<1x32xf32, #tpu.memory_space<vmem>>, %arg21: memref<1x8x32xf32, #tpu.memory_space<vmem>>, %arg22: memref<1x4x8x16xf32, #tpu.memory_space<vmem>>) attributes {dimension_semantics = [#tpu.dimension_semantics<parallel>, #tpu.dimension_semantics<parallel>], iteration_bounds = array<i64: 2, 2>, scalar_prefetch = 0 : i64, scratch_operands = 0 : i64, tpu.core_type = #tpu.core_type<tc>, window_params = [{transform_indices = @transform_0, window_bounds = array<i64: 1, 8, 32>}, {transform_indices = @transform_1, window_bounds = array<i64: 1, 16, 32>}, {transform_indices = @transform_2, window_bounds = array<i64: 1, 1, 16>}, {pipeline_mode = #tpu.pipeline_mode<synchronous>, transform_indices = @transform_3, window_bounds = array<i64: 32, 32>}, {pipeline_mode = #tpu.pipeline_mode<synchronous>, transform_indices = @transform_4, window_bounds = array<i64: 1, 32>}, {pipeline_mode = #tpu.pipeline_mode<synchronous>, transform_indices = @transform_5, window_bounds = array<i64: 32, 32>}, {pipeline_mode = #tpu.pipeline_mode<synchronous>, transform_indices = @transform_6, window_bounds = array<i64: 1, 32>}, {pipeline_mode = #tpu.pipeline_mode<synchronous>, transform_indices = @transform_7, window_bounds = array<i64: 32, 32>}, {pipeline_mode = #tpu.pipeline_mode<synchronous>, transform_indices = @transform_8, window_bounds = array<i64: 1, 32>}, {pipeline_mode = #tpu.pipeline_mode<synchronous>, transform_indices = @transform_9, window_bounds = array<i64: 32, 32>}, {pipeline_mode = #tpu.pipeline_mode<synchronous>, transform_indices = @transform_10, window_bounds = array<i64: 1, 32>}, {pipeline_mode = #tpu.pipeline_mode<synchronous>, transform_indices = @transform_11, window_bounds = array<i64: 1, 32>}, {pipeline_mode = #tpu.pipeline_mode<synchronous>, transform_indices = @transform_12, window_bounds = array<i64: 1, 32>}, {pipeline_mode = #tpu.pipeline_mode<synchronous>, transform_indices = @transform_13, window_bounds = array<i64: 32, 64>}, {pipeline_mode = #tpu.pipeline_mode<synchronous>, transform_indices = @transform_14, window_bounds = array<i64: 1, 64>}, {pipeline_mode = #tpu.pipeline_mode<synchronous>, transform_indices = @transform_15, window_bounds = array<i64: 64, 32>}, {pipeline_mode = #tpu.pipeline_mode<synchronous>, transform_indices = @transform_16, window_bounds = array<i64: 1, 32>}, {pipeline_mode = #tpu.pipeline_mode<synchronous>, transform_indices = @transform_17, window_bounds = array<i64: 1, 32>}, {pipeline_mode = #tpu.pipeline_mode<synchronous>, transform_indices = @transform_18, window_bounds = array<i64: 1, 32>}, {transform_indices = @transform_19, window_bounds = array<i64: 1, 8, 32>}, {transform_indices = @transform_20, window_bounds = array<i64: 1, 4, 8, 16>}]} {
    %c0 = arith.constant 0 : index
    %c0_0 = arith.constant 0 : index
    %c0_1 = arith.constant 0 : index
    %0 = vector.load %arg2[%c0, %c0_0, %c0_1] : memref<1x8x32xf32, #tpu.memory_space<vmem>>, vector<1x8x32xf32>
    %1 = vector.shape_cast %0 : vector<1x8x32xf32> to vector<8x32xf32>
    %c0_2 = arith.constant 0 : index
    %c0_3 = arith.constant 0 : index
    %c0_4 = arith.constant 0 : index
    %2 = vector.load %arg3[%c0_2, %c0_3, %c0_4] : memref<1x16x32xf32, #tpu.memory_space<vmem>>, vector<1x16x32xf32>
    %3 = vector.shape_cast %2 : vector<1x16x32xf32> to vector<16x32xf32>
    %c0_5 = arith.constant 0 : index
    %c0_6 = arith.constant 0 : index
    %c0_7 = arith.constant 0 : index
    %4 = vector.load %arg4[%c0_5, %c0_6, %c0_7] : memref<1x1x16xf32, #tpu.memory_space<vmem>>, vector<1x1x16xf32>
    %5 = vector.shape_cast %4 : vector<1x1x16xf32> to vector<1x16xf32>
    %cst = arith.constant 1.000000e+00 : f32
    %6 = vector.broadcast %cst : f32 to vector<1x16xf32>
    %7 = arith.subf %6, %5 : vector<1x16xf32>
    %cst_8 = arith.constant -1.000000e+09 : f32
    %8 = vector.broadcast %cst_8 : f32 to vector<1x16xf32>
    %9 = arith.mulf %7, %8 : vector<1x16xf32>
    %10 = arith.truncf %1 : vector<8x32xf32> to vector<8x32xbf16>
    %11 = arith.truncf %3 : vector<16x32xf32> to vector<16x32xbf16>
    %c0_9 = arith.constant 0 : index
    %c0_10 = arith.constant 0 : index
    %12 = vector.load %arg5[%c0_9, %c0_10] : memref<32x32xbf16, #tpu.memory_space<vmem>>, vector<32x32xbf16>
    %cst_11 = arith.constant dense<0.000000e+00> : vector<8x32xf32>
    %13 = tpu.matmul %10, %12, %cst_11 {dimension_numbers = #tpu.dot_dimension_numbers<[1], [0], [0], [1], [0, 0, 1, 1], [], []>} : vector<8x32xbf16>, vector<32x32xbf16>, vector<8x32xf32> -> vector<8x32xf32>
    %c0_12 = arith.constant 0 : index
    %c0_13 = arith.constant 0 : index
    %14 = vector.load %arg6[%c0_12, %c0_13] : memref<1x32xf32, #tpu.memory_space<vmem>>, vector<1x32xf32>
    %15 = vector.broadcast %14 : vector<1x32xf32> to vector<8x32xf32>
    %16 = arith.addf %13, %15 : vector<8x32xf32>
    %cst_14 = arith.constant 0.353553385 : f32
    %17 = vector.broadcast %cst_14 : f32 to vector<8x32xf32>
    %18 = arith.mulf %16, %17 : vector<8x32xf32>
    %c0_15 = arith.constant 0 : index
    %c0_16 = arith.constant 0 : index
    %19 = vector.load %arg7[%c0_15, %c0_16] : memref<32x32xbf16, #tpu.memory_space<vmem>>, vector<32x32xbf16>
    %cst_17 = arith.constant dense<0.000000e+00> : vector<16x32xf32>
    %20 = tpu.matmul %11, %19, %cst_17 {dimension_numbers = #tpu.dot_dimension_numbers<[1], [0], [0], [1], [0, 0, 1, 1], [], []>} : vector<16x32xbf16>, vector<32x32xbf16>, vector<16x32xf32> -> vector<16x32xf32>
    %c0_18 = arith.constant 0 : index
    %c0_19 = arith.constant 0 : index
    %21 = vector.load %arg8[%c0_18, %c0_19] : memref<1x32xf32, #tpu.memory_space<vmem>>, vector<1x32xf32>
    %22 = vector.broadcast %21 : vector<1x32xf32> to vector<16x32xf32>
    %23 = arith.addf %20, %22 : vector<16x32xf32>
    %c0_20 = arith.constant 0 : index
    %c0_21 = arith.constant 0 : index
    %24 = vector.load %arg9[%c0_20, %c0_21] : memref<32x32xbf16, #tpu.memory_space<vmem>>, vector<32x32xbf16>
    %cst_22 = arith.constant dense<0.000000e+00> : vector<16x32xf32>
    %25 = tpu.matmul %11, %24, %cst_22 {dimension_numbers = #tpu.dot_dimension_numbers<[1], [0], [0], [1], [0, 0, 1, 1], [], []>} : vector<16x32xbf16>, vector<32x32xbf16>, vector<16x32xf32> -> vector<16x32xf32>
    %c0_23 = arith.constant 0 : index
    %c0_24 = arith.constant 0 : index
    %26 = vector.load %arg10[%c0_23, %c0_24] : memref<1x32xf32, #tpu.memory_space<vmem>>, vector<1x32xf32>
    %27 = vector.broadcast %26 : vector<1x32xf32> to vector<16x32xf32>
    %28 = arith.addf %25, %27 : vector<16x32xf32>
    %29 = vector.shape_cast %18 : vector<8x32xf32> to vector<8x4x8xf32>
    %30 = tpu.transpose %29, [1, 0, 2] : vector<8x4x8xf32> -> vector<4x8x8xf32>
    %31 = arith.truncf %30 : vector<4x8x8xf32> to vector<4x8x8xbf16>
    %32 = vector.shape_cast %23 : vector<16x32xf32> to vector<16x4x8xf32>
    %33 = tpu.transpose %32, [1, 0, 2] : vector<16x4x8xf32> -> vector<4x16x8xf32>
    %34 = arith.truncf %33 : vector<4x16x8xf32> to vector<4x16x8xbf16>
    %35 = vector.shape_cast %28 : vector<16x32xf32> to vector<16x4x8xf32>
    %36 = tpu.transpose %35, [1, 0, 2] : vector<16x4x8xf32> -> vector<4x16x8xf32>
    %37 = arith.truncf %36 : vector<4x16x8xf32> to vector<4x16x8xbf16>
    "tpu.trace_start"() <{level = 10 : i32, message = "hqd,hkd->hqk"}> : () -> ()
    %cst_25 = arith.constant dense<0.000000e+00> : vector<4x8x16xf32>
    %38 = tpu.matmul %31, %34, %cst_25 {dimension_numbers = #tpu.dot_dimension_numbers<[2], [2], [1], [1], [0, 0, 0, 1, 1, 1], [0], [0]>} : vector<4x8x8xbf16>, vector<4x16x8xbf16>, vector<4x8x16xf32> -> vector<4x8x16xf32>
    "tpu.trace_stop"() : () -> ()
    %39 = vector.shape_cast %9 : vector<1x16xf32> to vector<1x1x16xf32>
    %40 = vector.broadcast %39 : vector<1x1x16xf32> to vector<4x8x16xf32>
    %41 = arith.addf %38, %40 : vector<4x8x16xf32>
    %cst_26 = arith.constant dense<0xFF800000> : vector<4x8xf32>
    %42 = vector.multi_reduction <maximumf>, %41, %cst_26 [2] : vector<4x8x16xf32> to vector<4x8xf32>
    %43 = vector.shape_cast %42 : vector<4x8xf32> to vector<4x8x1xf32>
    %44 = vector.broadcast %43 : vector<4x8x1xf32> to vector<4x8x16xf32>
    %45 = arith.subf %41, %44 : vector<4x8x16xf32>
    %46 = math.exp %45 : vector<4x8x16xf32>
    %cst_27 = arith.constant dense<0.000000e+00> : vector<4x8xf32>
    %47 = vector.multi_reduction <add>, %46, %cst_27 [2] : vector<4x8x16xf32> to vector<4x8xf32>
    %48 = vector.shape_cast %47 : vector<4x8xf32> to vector<4x8x1xf32>
    %49 = tpu.reciprocal %48 {approx = true} : vector<4x8x1xf32> -> vector<4x8x1xf32>
    %50 = arith.truncf %46 : vector<4x8x16xf32> to vector<4x8x16xbf16>
    "tpu.trace_start"() <{level = 10 : i32, message = "hqk,hkd->hqd"}> : () -> ()
    %cst_28 = arith.constant dense<0.000000e+00> : vector<4x8x8xf32>
    %51 = tpu.matmul %50, %37, %cst_28 {dimension_numbers = #tpu.dot_dimension_numbers<[2], [1], [1], [2], [0, 0, 0, 1, 1, 2], [0], [0]>} : vector<4x8x16xbf16>, vector<4x16x8xbf16>, vector<4x8x8xf32> -> vector<4x8x8xf32>
    "tpu.trace_stop"() : () -> ()
    %52 = vector.broadcast %49 : vector<4x8x1xf32> to vector<4x8x8xf32>
    %53 = arith.mulf %51, %52 : vector<4x8x8xf32>
    %54 = tpu.transpose %53, [1, 0, 2] : vector<4x8x8xf32> -> vector<8x4x8xf32>
    %55 = vector.shape_cast %54 : vector<8x4x8xf32> to vector<8x32xf32>
    %56 = vector.broadcast %49 : vector<4x8x1xf32> to vector<4x8x16xf32>
    %57 = arith.mulf %46, %56 : vector<4x8x16xf32>
    %c0_29 = arith.constant 0 : index
    %c0_30 = arith.constant 0 : index
    %c0_31 = arith.constant 0 : index
    %c0_32 = arith.constant 0 : index
    %58 = vector.load %arg22[%c0_29, %c0_30, %c0_31, %c0_32] : memref<1x4x8x16xf32, #tpu.memory_space<vmem>>, vector<1x4x8x16xf32>
    %59 = vector.shape_cast %58 : vector<1x4x8x16xf32> to vector<4x8x16xf32>
    %60 = vector.shape_cast %57 : vector<4x8x16xf32> to vector<1x4x8x16xf32>
    tpu.vector_store %arg22[%c0_29, %c0_30, %c0_31, %c0_32], %60 {strides = array<i32>} : memref<1x4x8x16xf32, #tpu.memory_space<vmem>>, vector<1x4x8x16xf32>,
    %61 = arith.truncf %55 : vector<8x32xf32> to vector<8x32xbf16>
    %c0_33 = arith.constant 0 : index
    %c0_34 = arith.constant 0 : index
    %62 = vector.load %arg11[%c0_33, %c0_34] : memref<32x32xbf16, #tpu.memory_space<vmem>>, vector<32x32xbf16>
    %cst_35 = arith.constant dense<0.000000e+00> : vector<8x32xf32>
    %63 = tpu.matmul %61, %62, %cst_35 {dimension_numbers = #tpu.dot_dimension_numbers<[1], [0], [0], [1], [0, 0, 1, 1], [], []>} : vector<8x32xbf16>, vector<32x32xbf16>, vector<8x32xf32> -> vector<8x32xf32>
    %c0_36 = arith.constant 0 : index
    %c0_37 = arith.constant 0 : index
    %64 = vector.load %arg12[%c0_36, %c0_37] : memref<1x32xf32, #tpu.memory_space<vmem>>, vector<1x32xf32>
    %65 = vector.broadcast %64 : vector<1x32xf32> to vector<8x32xf32>
    %66 = arith.addf %63, %65 : vector<8x32xf32>
    %67 = arith.addf %1, %66 : vector<8x32xf32>
    %c0_38 = arith.constant 0 : index
    %c0_39 = arith.constant 0 : index
    %68 = vector.load %arg13[%c0_38, %c0_39] : memref<1x32xf32, #tpu.memory_space<vmem>>, vector<1x32xf32>
    %c0_40 = arith.constant 0 : index
    %c0_41 = arith.constant 0 : index
    %69 = vector.load %arg14[%c0_40, %c0_41] : memref<1x32xf32, #tpu.memory_space<vmem>>, vector<1x32xf32>
    %cst_42 = arith.constant dense<0.000000e+00> : vector<8xf32>
    %70 = vector.multi_reduction <add>, %67, %cst_42 [1] : vector<8x32xf32> to vector<8xf32>
    %71 = vector.shape_cast %70 : vector<8xf32> to vector<8x1xf32>
    %72 = arith.mulf %67, %67 : vector<8x32xf32>
    %cst_43 = arith.constant dense<0.000000e+00> : vector<8xf32>
    %73 = vector.multi_reduction <add>, %72, %cst_43 [1] : vector<8x32xf32> to vector<8xf32>
    %74 = vector.shape_cast %73 : vector<8xf32> to vector<8x1xf32>
    %cst_44 = arith.constant 3.200000e+01 : f32
    %75 = vector.broadcast %cst_44 : f32 to vector<8x1xf32>
    %76 = arith.divf %71, %75 : vector<8x1xf32>
    %cst_45 = arith.constant 3.200000e+01 : f32
    %77 = vector.broadcast %cst_45 : f32 to vector<8x1xf32>
    %78 = arith.divf %74, %77 : vector<8x1xf32>
    %79 = arith.mulf %76, %76 : vector<8x1xf32>
    %80 = arith.subf %78, %79 : vector<8x1xf32>
    %81 = vector.broadcast %76 : vector<8x1xf32> to vector<8x32xf32>
    %82 = arith.subf %67, %81 : vector<8x32xf32>
    %cst_46 = arith.constant 9.99999974E-6 : f32
    %83 = vector.broadcast %cst_46 : f32 to vector<8x1xf32>
    %84 = arith.addf %80, %83 : vector<8x1xf32>
    %85 = math.rsqrt %84 : vector<8x1xf32>
    %86 = vector.broadcast %85 : vector<8x1xf32> to vector<8x32xf32>
    %87 = arith.mulf %82, %86 : vector<8x32xf32>
    %88 = vector.broadcast %68 : vector<1x32xf32> to vector<8x32xf32>
    %89 = arith.mulf %87, %88 : vector<8x32xf32>
    %90 = vector.broadcast %69 : vector<1x32xf32> to vector<8x32xf32>
    %91 = arith.addf %89, %90 : vector<8x32xf32>
    %92 = arith.truncf %91 : vector<8x32xf32> to vector<8x32xbf16>
    %c0_47 = arith.constant 0 : index
    %c0_48 = arith.constant 0 : index
    %93 = vector.load %arg15[%c0_47, %c0_48] : memref<32x64xbf16, #tpu.memory_space<vmem>>, vector<32x64xbf16>
    %cst_49 = arith.constant dense<0.000000e+00> : vector<8x64xf32>
    %94 = tpu.matmul %92, %93, %cst_49 {dimension_numbers = #tpu.dot_dimension_numbers<[1], [0], [0], [1], [0, 0, 1, 1], [], []>} : vector<8x32xbf16>, vector<32x64xbf16>, vector<8x64xf32> -> vector<8x64xf32>
    %c0_50 = arith.constant 0 : index
    %c0_51 = arith.constant 0 : index
    %95 = vector.load %arg16[%c0_50, %c0_51] : memref<1x64xf32, #tpu.memory_space<vmem>>, vector<1x64xf32>
    %96 = vector.broadcast %95 : vector<1x64xf32> to vector<8x64xf32>
    %97 = arith.addf %94, %96 : vector<8x64xf32>
    %cst_52 = arith.constant 0.000000e+00 : f32
    %98 = vector.broadcast %cst_52 : f32 to vector<8x64xf32>
    %99 = arith.maximumf %97, %98 : vector<8x64xf32>
    %100 = arith.truncf %99 : vector<8x64xf32> to vector<8x64xbf16>
    %c0_53 = arith.constant 0 : index
    %c0_54 = arith.constant 0 : index
    %101 = vector.load %arg17[%c0_53, %c0_54] : memref<64x32xbf16, #tpu.memory_space<vmem>>, vector<64x32xbf16>
    %cst_55 = arith.constant dense<0.000000e+00> : vector<8x32xf32>
    %102 = tpu.matmul %100, %101, %cst_55 {dimension_numbers = #tpu.dot_dimension_numbers<[1], [0], [0], [1], [0, 0, 1, 1], [], []>} : vector<8x64xbf16>, vector<64x32xbf16>, vector<8x32xf32> -> vector<8x32xf32>
    %c0_56 = arith.constant 0 : index
    %c0_57 = arith.constant 0 : index
    %103 = vector.load %arg18[%c0_56, %c0_57] : memref<1x32xf32, #tpu.memory_space<vmem>>, vector<1x32xf32>
    %104 = vector.broadcast %103 : vector<1x32xf32> to vector<8x32xf32>
    %105 = arith.addf %102, %104 : vector<8x32xf32>
    %106 = arith.addf %91, %105 : vector<8x32xf32>
    %c0_58 = arith.constant 0 : index
    %c0_59 = arith.constant 0 : index
    %107 = vector.load %arg19[%c0_58, %c0_59] : memref<1x32xf32, #tpu.memory_space<vmem>>, vector<1x32xf32>
    %c0_60 = arith.constant 0 : index
    %c0_61 = arith.constant 0 : index
    %108 = vector.load %arg20[%c0_60, %c0_61] : memref<1x32xf32, #tpu.memory_space<vmem>>, vector<1x32xf32>
    %cst_62 = arith.constant dense<0.000000e+00> : vector<8xf32>
    %109 = vector.multi_reduction <add>, %106, %cst_62 [1] : vector<8x32xf32> to vector<8xf32>
    %110 = vector.shape_cast %109 : vector<8xf32> to vector<8x1xf32>
    %111 = arith.mulf %106, %106 : vector<8x32xf32>
    %cst_63 = arith.constant dense<0.000000e+00> : vector<8xf32>
    %112 = vector.multi_reduction <add>, %111, %cst_63 [1] : vector<8x32xf32> to vector<8xf32>
    %113 = vector.shape_cast %112 : vector<8xf32> to vector<8x1xf32>
    %cst_64 = arith.constant 3.200000e+01 : f32
    %114 = vector.broadcast %cst_64 : f32 to vector<8x1xf32>
    %115 = arith.divf %110, %114 : vector<8x1xf32>
    %cst_65 = arith.constant 3.200000e+01 : f32
    %116 = vector.broadcast %cst_65 : f32 to vector<8x1xf32>
    %117 = arith.divf %113, %116 : vector<8x1xf32>
    %118 = arith.mulf %115, %115 : vector<8x1xf32>
    %119 = arith.subf %117, %118 : vector<8x1xf32>
    %120 = vector.broadcast %115 : vector<8x1xf32> to vector<8x32xf32>
    %121 = arith.subf %106, %120 : vector<8x32xf32>
    %cst_66 = arith.constant 9.99999974E-6 : f32
    %122 = vector.broadcast %cst_66 : f32 to vector<8x1xf32>
    %123 = arith.addf %119, %122 : vector<8x1xf32>
    %124 = math.rsqrt %123 : vector<8x1xf32>
    %125 = vector.broadcast %124 : vector<8x1xf32> to vector<8x32xf32>
    %126 = arith.mulf %121, %125 : vector<8x32xf32>
    %127 = vector.broadcast %107 : vector<1x32xf32> to vector<8x32xf32>
    %128 = arith.mulf %126, %127 : vector<8x32xf32>
    %129 = vector.broadcast %108 : vector<1x32xf32> to vector<8x32xf32>
    %130 = arith.addf %128, %129 : vector<8x32xf32>
    %c0_67 = arith.constant 0 : index
    %c0_68 = arith.constant 0 : index
    %c0_69 = arith.constant 0 : index
    %131 = vector.load %arg21[%c0_67, %c0_68, %c0_69] : memref<1x8x32xf32, #tpu.memory_space<vmem>>, vector<1x8x32xf32>
    %132 = vector.shape_cast %131 : vector<1x8x32xf32> to vector<8x32xf32>
    %133 = vector.shape_cast %130 : vector<8x32xf32> to vector<1x8x32xf32>
    tpu.vector_store %arg21[%c0_67, %c0_68, %c0_69], %133 {strides = array<i32>} : memref<1x8x32xf32, #tpu.memory_space<vmem>>, vector<1x8x32xf32>,
    return
  }
  func.func @transform_0(%arg0: i32, %arg1: i32) -> (i32, i32, i32) {
    %c0_i32 = arith.constant 0 : i32
    %c0_i32_0 = arith.constant 0 : i32
    return %arg0, %arg1, %c0_i32 : i32, i32, i32
  }
  func.func @transform_1(%arg0: i32, %arg1: i32) -> (i32, i32, i32) {
    %c0_i32 = arith.constant 0 : i32
    %c0_i32_0 = arith.constant 0 : i32
    %c0_i32_1 = arith.constant 0 : i32
    return %arg0, %c0_i32, %c0_i32_0 : i32, i32, i32
  }
  func.func @transform_2(%arg0: i32, %arg1: i32) -> (i32, i32, i32) {
    %c0_i32 = arith.constant 0 : i32
    %c0_i32_0 = arith.constant 0 : i32
    %c0_i32_1 = arith.constant 0 : i32
    return %arg0, %c0_i32, %c0_i32_0 : i32, i32, i32
  }
  func.func @transform_3(%arg0: i32, %arg1: i32) -> (i32, i32) {
    %c0_i32 = arith.constant 0 : i32
    %c0_i32_0 = arith.constant 0 : i32
    %c0_i32_1 = arith.constant 0 : i32
    return %c0_i32, %c0_i32_0 : i32, i32
  }
  func.func @transform_4(%arg0: i32, %arg1: i32) -> (i32, i32) {
    %c0_i32 = arith.constant 0 : i32
    %c0_i32_0 = arith.constant 0 : i32
    %c0_i32_1 = arith.constant 0 : i32
    return %c0_i32, %c0_i32_0 : i32, i32
  }
  func.func @transform_5(%arg0: i32, %arg1: i32) -> (i32, i32) {
    %c0_i32 = arith.constant 0 : i32
    %c0_i32_0 = arith.constant 0 : i32
    %c0_i32_1 = arith.constant 0 : i32
    return %c0_i32, %c0_i32_0 : i32, i32
  }
  func.func @transform_6(%arg0: i32, %arg1: i32) -> (i32, i32) {
    %c0_i32 = arith.constant 0 : i32
    %c0_i32_0 = arith.constant 0 : i32
    %c0_i32_1 = arith.constant 0 : i32
    return %c0_i32, %c0_i32_0 : i32, i32
  }
  func.func @transform_7(%arg0: i32, %arg1: i32) -> (i32, i32) {
    %c0_i32 = arith.constant 0 : i32
    %c0_i32_0 = arith.constant 0 : i32
    %c0_i32_1 = arith.constant 0 : i32
    return %c0_i32, %c0_i32_0 : i32, i32
  }
  func.func @transform_8(%arg0: i32, %arg1: i32) -> (i32, i32) {
    %c0_i32 = arith.constant 0 : i32
    %c0_i32_0 = arith.constant 0 : i32
    %c0_i32_1 = arith.constant 0 : i32
    return %c0_i32, %c0_i32_0 : i32, i32
  }
  func.func @transform_9(%arg0: i32, %arg1: i32) -> (i32, i32) {
    %c0_i32 = arith.constant 0 : i32
    %c0_i32_0 = arith.constant 0 : i32
    %c0_i32_1 = arith.constant 0 : i32
    return %c0_i32, %c0_i32_0 : i32, i32
  }
  func.func @transform_10(%arg0: i32, %arg1: i32) -> (i32, i32) {
    %c0_i32 = arith.constant 0 : i32
    %c0_i32_0 = arith.constant 0 : i32
    %c0_i32_1 = arith.constant 0 : i32
    return %c0_i32, %c0_i32_0 : i32, i32
  }
  func.func @transform_11(%arg0: i32, %arg1: i32) -> (i32, i32) {
    %c0_i32 = arith.constant 0 : i32
    %c0_i32_0 = arith.constant 0 : i32
    %c0_i32_1 = arith.constant 0 : i32
    return %c0_i32, %c0_i32_0 : i32, i32
  }
  func.func @transform_12(%arg0: i32, %arg1: i32) -> (i32, i32) {
    %c0_i32 = arith.constant 0 : i32
    %c0_i32_0 = arith.constant 0 : i32
    %c0_i32_1 = arith.constant 0 : i32
    return %c0_i32, %c0_i32_0 : i32, i32
  }
  func.func @transform_13(%arg0: i32, %arg1: i32) -> (i32, i32) {
    %c0_i32 = arith.constant 0 : i32
    %c0_i32_0 = arith.constant 0 : i32
    %c0_i32_1 = arith.constant 0 : i32
    return %c0_i32, %c0_i32_0 : i32, i32
  }
  func.func @transform_14(%arg0: i32, %arg1: i32) -> (i32, i32) {
    %c0_i32 = arith.constant 0 : i32
    %c0_i32_0 = arith.constant 0 : i32
    %c0_i32_1 = arith.constant 0 : i32
    return %c0_i32, %c0_i32_0 : i32, i32
  }
  func.func @transform_15(%arg0: i32, %arg1: i32) -> (i32, i32) {
    %c0_i32 = arith.constant 0 : i32
    %c0_i32_0 = arith.constant 0 : i32
    %c0_i32_1 = arith.constant 0 : i32
    return %c0_i32, %c0_i32_0 : i32, i32
  }
  func.func @transform_16(%arg0: i32, %arg1: i32) -> (i32, i32) {
    %c0_i32 = arith.constant 0 : i32
    %c0_i32_0 = arith.constant 0 : i32
    %c0_i32_1 = arith.constant 0 : i32
    return %c0_i32, %c0_i32_0 : i32, i32
  }
  func.func @transform_17(%arg0: i32, %arg1: i32) -> (i32, i32) {
    %c0_i32 = arith.constant 0 : i32
    %c0_i32_0 = arith.constant 0 : i32
    %c0_i32_1 = arith.constant 0 : i32
    return %c0_i32, %c0_i32_0 : i32, i32
  }
  func.func @transform_18(%arg0: i32, %arg1: i32) -> (i32, i32) {
    %c0_i32 = arith.constant 0 : i32
    %c0_i32_0 = arith.constant 0 : i32
    %c0_i32_1 = arith.constant 0 : i32
    return %c0_i32, %c0_i32_0 : i32, i32
  }
  func.func @transform_19(%arg0: i32, %arg1: i32) -> (i32, i32, i32) {
    %c0_i32 = arith.constant 0 : i32
    %c0_i32_0 = arith.constant 0 : i32
    return %arg0, %arg1, %c0_i32 : i32, i32, i32
  }
  func.func @transform_20(%arg0: i32, %arg1: i32) -> (i32, i32, i32, i32) {
    %c0_i32 = arith.constant 0 : i32
    %c0_i32_0 = arith.constant 0 : i32
    %c0_i32_1 = arith.constant 0 : i32
    return %arg0, %c0_i32, %arg1, %c0_i32_0 : i32, i32, i32, i32
  }
}

</mosaic_0001>

<llo_original>
// kernel: tpu_custom_call.1
$region0: #{tpu_custom_call.1}
  #allocation0 [shape = 'u32[]', space=smem, size = 0x4, offset = 0x4, fixed_abs, tag = 'smem constant byte address 0x4 - core index']
  #allocation1 [shape = 'u32[144,128]{1,0:T(1,128)}', space=vmem, size = 0x12000, scoped, tag = 'internal scratch']
  %s0 = inlined_call_operand.vmem [shape: f32[2,16,32], index: 0, kind: input, shape index: {}]
  %s1 = inlined_call_operand.hbm [shape: f32[2,16,32], index: 1, kind: input, shape index: {}]
  %s2 = inlined_call_operand.hbm [shape: f32[2,1,16], index: 2, kind: input, shape index: {}]
  %s3 = inlined_call_operand.vmem [shape: bf16[32,32], index: 3, kind: input, shape index: {}]
  %s4 = inlined_call_operand.vmem [shape: f32[1,32], index: 4, kind: input, shape index: {}]
  %s5 = inlined_call_operand.hbm [shape: bf16[32,32], index: 5, kind: input, shape index: {}]
  %s6 = inlined_call_operand.hbm [shape: f32[1,32], index: 6, kind: input, shape index: {}]
  %s7 = inlined_call_operand.hbm [shape: bf16[32,32], index: 7, kind: input, shape index: {}]
  %s8 = inlined_call_operand.hbm [shape: f32[1,32], index: 8, kind: input, shape index: {}]
  %s9 = inlined_call_operand.vmem [shape: bf16[32,32], index: 9, kind: input, shape index: {}]
  %s10 = inlined_call_operand.hbm [shape: f32[1,32], index: 10, kind: input, shape index: {}]
  %s11 = inlined_call_operand.hbm [shape: f32[1,32], index: 11, kind: input, shape index: {}]
  %s12 = inlined_call_operand.hbm [shape: f32[1,32], index: 12, kind: input, shape index: {}]
  %s13 = inlined_call_operand.vmem [shape: bf16[32,64], index: 13, kind: input, shape index: {}]
  %s14 = inlined_call_operand.vmem [shape: f32[1,64], index: 14, kind: input, shape index: {}]
  %s15 = inlined_call_operand.vmem [shape: bf16[64,32], index: 15, kind: input, shape index: {}]
  %s16 = inlined_call_operand.vmem [shape: f32[1,32], index: 16, kind: input, shape index: {}]
  %s17 = inlined_call_operand.vmem [shape: f32[1,32], index: 17, kind: input, shape index: {}]
  %s18 = inlined_call_operand.vmem [shape: f32[1,32], index: 18, kind: input, shape index: {}]
  %s19 = inlined_call_operand.hbm [shape: f32[2,16,32], index: 19, kind: output, shape index: {0}]
  %s20 = inlined_call_operand.hbm [shape: f32[2,4,16,16], index: 20, kind: output, shape index: {1}]
  %21 = xla_tuple %s19, %s20
  %s22 = sld [smem:[#allocation0]]
  $region153: #{tpu_custom_call.1} parent=0
    _
  %s24 = ssub.s32 1, %s22
  %s25 = scalar_select 0, %s24, %s22
  $region1: #{tpu_custom_call.1} parent=0
    #allocation2 [shape = 'u8[16384]{0}', space=vmem, size = 0x4000, scoped, tag = 'input window, operand 1']
    #allocation3 [shape = 's32[2]{0}', space=sflag, size = 0x8, scoped, tag = 'scoped memory for tpu_custom_call.1']
    #allocation4 [shape = 's32[2]{0}', space=sflag, size = 0x8, scoped, tag = 'scoped memory for tpu_custom_call.1']
    #allocation5 [shape = 'u8[1024]{0}', space=vmem, size = 0x400, scoped, tag = 'input window, operand 2']
    #allocation6 [shape = 's32[2]{0}', space=sflag, size = 0x8, scoped, tag = 'scoped memory for tpu_custom_call.1']
    #allocation7 [shape = 'u8[8192]{0}', space=vmem, size = 0x2000, scoped, tag = 'input window, operand 5, single buffered']
    #allocation8 [shape = 'u8[512]{0}', space=vmem, size = 0x400, scoped, tag = 'input window, operand 6, single buffered']
    #allocation9 [shape = 's32[1]{0}', space=sflag, size = 0x4, scoped, tag = 'scoped memory for tpu_custom_call.1']
    #allocation10 [shape = 'u8[8192]{0}', space=vmem, size = 0x2000, scoped, tag = 'input window, operand 7, single buffered']
    #allocation11 [shape = 'u8[512]{0}', space=vmem, size = 0x400, scoped, tag = 'input window, operand 8, single buffered']
    #allocation12 [shape = 's32[1]{0}', space=sflag, size = 0x4, scoped, tag = 'scoped memory for tpu_custom_call.1']
    #allocation13 [shape = 'u8[512]{0}', space=vmem, size = 0x400, scoped, tag = 'input window, operand 10, single buffered']
    #allocation14 [shape = 'u8[512]{0}', space=vmem, size = 0x400, scoped, tag = 'input window, operand 11, single buffered']
    #allocation15 [shape = 's32[1]{0}', space=sflag, size = 0x4, scoped, tag = 'scoped memory for tpu_custom_call.1']
    #allocation16 [shape = 'u8[512]{0}', space=vmem, size = 0x400, scoped, tag = 'input window, operand 12, single buffered']
    #allocation17 [shape = 'u8[8192]{0}', space=vmem, size = 0x2000, scoped, tag = 'output window, operand 0']
    #allocation18 [shape = 'u8[32768]{0}', space=vmem, size = 0x8000, scoped, tag = 'output window, operand 1']
    #allocation19 [shape = 's32[2]{0}', space=sflag, size = 0x8, scoped, tag = 'scoped memory for tpu_custom_call.1']
    %26 = vsyncpa [#allocation3], 0
    %s27 = scalar_lea.sflag [#allocation3], 1
    %28 = vsyncpa %s27, 0
    %29 = vsyncpa [#allocation6], 0
    %s30 = scalar_lea.sflag [#allocation6], 1
    %31 = vsyncpa %s30, 0
    %32 = vsyncpa [#allocation9], 0
    %33 = vsyncpa [#allocation12], 0
    %34 = vsyncpa [#allocation15], 0
    %35 = vsyncpa [#allocation4], 0
    %s36 = scalar_lea.sflag [#allocation4], 1
    %37 = vsyncpa %s36, 0
    %38 = vsyncpa [#allocation19], 0
    %s39 = scalar_lea.sflag [#allocation19], 1
    %40 = vsyncpa %s39, 0
    loop: start=0, step=1, limit=6
    $region2: #{tpu_custom_call.1} parent=1 // loop_pre_header
      _
    $region3: #{tpu_custom_call.1} parent=1 // loop_header
      %s42 = sphi 0, %s46
      %p43 = scmp.ge.s32.totalorder %s42, 6
      %s49 = sphi 0, %s61
      %s50 = sphi 0, %s57
      %s51 = sphi 0, %s49
      %s52 = sphi 0, %s50
      %s53 = sphi 0, %s51
      %s54 = sphi 0, %s52
      %s66 = sphi 0, %s68
      %s69 = sphi 0, %s66
      %s70 = sphi 0, %s69
      %s86 = sphi 0, %s70
      %s92 = sphi 0, %s94
      %s95 = sphi 0, %s92
      %s96 = sphi 0, %s95
      %s112 = sphi 0, %s96
      %s118 = sphi 0, %s120
      %s121 = sphi 0, %s118
      %s122 = sphi 0, %s121
      %s138 = sphi 0, %s122
      %s142 = sphi 0, %s142
      %s144 = sphi 0, %s142
      %s145 = sphi 0, %s144
      %s159 = sphi 0, %s145
      %s163 = sphi 0, %s163
      %s165 = sphi 0, %s163
      %s166 = sphi 0, %s165
      %s180 = sphi 0, %s166
      %s184 = sphi 0, %s184
      %s186 = sphi 0, %s184
      %s187 = sphi 0, %s186
      %s201 = sphi 0, %s187
      %s205 = sphi 0, %s205
      %s207 = sphi 0, %s205
      %s208 = sphi 0, %s207
      %s222 = sphi 0, %s208
      %s226 = sphi 0, %s226
      %s228 = sphi 0, %s226
      %s229 = sphi 0, %s228
      %s243 = sphi 0, %s229
      %s247 = sphi 0, %s247
      %s249 = sphi 0, %s247
      %s250 = sphi 0, %s249
      %s264 = sphi 0, %s250
      %s268 = sphi 0, %s268
      %s270 = sphi 0, %s268
      %s271 = sphi 0, %s270
      %s285 = sphi 0, %s271
      %s289 = sphi 0, %s289
      %s291 = sphi 0, %s289
      %s292 = sphi 0, %s291
      %s306 = sphi 0, %s292
      %s310 = sphi 0, %s310
      %s312 = sphi 0, %s310
      %s313 = sphi 0, %s312
      %s327 = sphi 0, %s313
      %s331 = sphi 0, %s331
      %s333 = sphi 0, %s331
      %s334 = sphi 0, %s333
      %s348 = sphi 0, %s334
      %s352 = sphi 0, %s352
      %s354 = sphi 0, %s352
      %s355 = sphi 0, %s354
      %s369 = sphi 0, %s355
      %s373 = sphi 0, %s373
      %s375 = sphi 0, %s373
      %s376 = sphi 0, %s375
      %s390 = sphi 0, %s376
      %s394 = sphi 0, %s394
      %s396 = sphi 0, %s394
      %s397 = sphi 0, %s396
      %s411 = sphi 0, %s397
      %s415 = sphi 0, %s415
      %s417 = sphi 0, %s415
      %s418 = sphi 0, %s417
      %s432 = sphi 0, %s418
      %s436 = sphi 0, %s436
      %s438 = sphi 0, %s436
      %s439 = sphi 0, %s438
      %s453 = sphi 0, %s439
      %s457 = sphi 0, %s457
      %s459 = sphi 0, %s457
      %s460 = sphi 0, %s459
      %s474 = sphi 0, %s460
      %s482 = sphi 0, %s484
      %s485 = sphi 0, %s482
      %s486 = sphi 0, %s485
      %s502 = sphi 0, %s486
      %s510 = sphi 0, %s512
      %s513 = sphi 0, %s510
      %s514 = sphi 0, %s513
      %s530 = sphi 0, %s514
    $region4: #{tpu_custom_call.1} parent=1 // loop_header_branch
      %45 = sbr.rel (%p43) target = $region8
    $region5: #{tpu_custom_call.1} parent=1 // loop_body
      %s47 = ssub.s32 %s42, 1
      %s48 = ssub.s32 %s42, 2
      %s55 = sadd.s32 1, %s50
      %p56 = scmp.ge.s32.totalorder %s55, 2
      %s57 = scalar_select %p56, 0, %s55
      %s58 = sadd.s32 1, %s49
      %s59 = scalar_select %p56, %s58, %s49
      %p60 = scmp.ge.s32.totalorder %s59, 2
      %s61 = scalar_select %p60, 0, %s59
      %s62 = ssub.s32 %s49, %s61
      %s63 = ssub.s32 %s50, %s57
      %s64 = sor.u32 %s62, %s63
      %p65 = scmp.eq.s32.totalorder %s64, 0
      %s67 = sadd.s32 %s66, 1
      %s68 = scalar_select %p65, %s66, %s67
      %p71 = pneg %p65
      %p72 = scmp.eq.s32.totalorder %s42, 3
      %p73 = por %p71, %p72
      %p74 = scmp.ne.s32.totalorder %s66, %s69
      %p75 = scmp.eq.s32.totalorder %s42, 0
      %p76 = por %p74, %p75
      %p77 = scmp.ne.s32.totalorder %s66, %s69
      %p78 = scmp.eq.s32.totalorder %s47, 3
      %p79 = por %p77, %p78
      %p80 = scmp.ne.s32.totalorder %s69, %s70
      %p81 = scmp.eq.s32.totalorder %s47, 0
      %p82 = por %p80, %p81
      %p83 = scmp.ne.s32.totalorder %s69, %s70
      %p84 = scmp.eq.s32.totalorder %s48, 3
      %p85 = por %p83, %p84
      %p87 = scmp.ne.s32.totalorder %s70, %s86
      %p88 = scmp.eq.s32.totalorder %s48, 0
      %p89 = por %p87, %p88
      %s90 = ssub.s32 %s49, %s61
      %p91 = scmp.eq.s32.totalorder %s90, 0
      %s93 = sadd.s32 %s92, 1
      %s94 = scalar_select %p91, %s92, %s93
      %p97 = pneg %p91
      %p98 = scmp.eq.s32.totalorder %s42, 3
      %p99 = por %p97, %p98
      %p100 = scmp.ne.s32.totalorder %s92, %s95
      %p101 = scmp.eq.s32.totalorder %s42, 0
      %p102 = por %p100, %p101
      %p103 = scmp.ne.s32.totalorder %s92, %s95
      %p104 = scmp.eq.s32.totalorder %s47, 3
      %p105 = por %p103, %p104
      %p106 = scmp.ne.s32.totalorder %s95, %s96
      %p107 = scmp.eq.s32.totalorder %s47, 0
      %p108 = por %p106, %p107
      %p109 = scmp.ne.s32.totalorder %s95, %s96
      %p110 = scmp.eq.s32.totalorder %s48, 3
      %p111 = por %p109, %p110
      %p113 = scmp.ne.s32.totalorder %s96, %s112
      %p114 = scmp.eq.s32.totalorder %s48, 0
      %p115 = por %p113, %p114
      %s116 = ssub.s32 %s49, %s61
      %p117 = scmp.eq.s32.totalorder %s116, 0
      %s119 = sadd.s32 %s118, 1
      %s120 = scalar_select %p117, %s118, %s119
      %p123 = pneg %p117
      %p124 = scmp.eq.s32.totalorder %s42, 3
      %p125 = por %p123, %p124
      %p126 = scmp.ne.s32.totalorder %s118, %s121
      %p127 = scmp.eq.s32.totalorder %s42, 0
      %p128 = por %p126, %p127
      %p129 = scmp.ne.s32.totalorder %s118, %s121
      %p130 = scmp.eq.s32.totalorder %s47, 3
      %p131 = por %p129, %p130
      %p132 = scmp.ne.s32.totalorder %s121, %s122
      %p133 = scmp.eq.s32.totalorder %s47, 0
      %p134 = por %p132, %p133
      %p135 = scmp.ne.s32.totalorder %s121, %s122
      %p136 = scmp.eq.s32.totalorder %s48, 3
      %p137 = por %p135, %p136
      %p139 = scmp.ne.s32.totalorder %s122, %s138
      %p140 = scmp.eq.s32.totalorder %s48, 0
      %p141 = por %p139, %p140
      %s143 = sadd.s32 %s142, 1
      %p146 = scmp.eq.s32.totalorder %s42, 3
      %p147 = scmp.ne.s32.totalorder %s142, %s144
      %p148 = scmp.eq.s32.totalorder %s42, 0
      %p149 = por %p147, %p148
      %p150 = scmp.ne.s32.totalorder %s142, %s144
      %p151 = scmp.eq.s32.totalorder %s47, 3
      %p152 = por %p150, %p151
      %p153 = scmp.ne.s32.totalorder %s144, %s145
      %p154 = scmp.eq.s32.totalorder %s47, 0
      %p155 = por %p153, %p154
      %p156 = scmp.ne.s32.totalorder %s144, %s145
      %p157 = scmp.eq.s32.totalorder %s48, 3
      %p158 = por %p156, %p157
      %p160 = scmp.ne.s32.totalorder %s145, %s159
      %p161 = scmp.eq.s32.totalorder %s48, 0
      %p162 = por %p160, %p161
      %s164 = sadd.s32 %s163, 1
      %p167 = scmp.eq.s32.totalorder %s42, 3
      %p168 = scmp.ne.s32.totalorder %s163, %s165
      %p169 = scmp.eq.s32.totalorder %s42, 0
      %p170 = por %p168, %p169
      %p171 = scmp.ne.s32.totalorder %s163, %s165
      %p172 = scmp.eq.s32.totalorder %s47, 3
      %p173 = por %p171, %p172
      %p174 = scmp.ne.s32.totalorder %s165, %s166
      %p175 = scmp.eq.s32.totalorder %s47, 0
      %p176 = por %p174, %p175
      %p177 = scmp.ne.s32.totalorder %s165, %s166
      %p178 = scmp.eq.s32.totalorder %s48, 3
      %p179 = por %p177, %p178
      %p181 = scmp.ne.s32.totalorder %s166, %s180
      %p182 = scmp.eq.s32.totalorder %s48, 0
      %p183 = por %p181, %p182
      %s185 = sadd.s32 %s184, 1
      %p188 = scmp.eq.s32.totalorder %s42, 3
      %p189 = scmp.ne.s32.totalorder %s184, %s186
      %p190 = scmp.eq.s32.totalorder %s42, 0
      %p191 = por %p189, %p190
      %p192 = scmp.ne.s32.totalorder %s184, %s186
      %p193 = scmp.eq.s32.totalorder %s47, 3
      %p194 = por %p192, %p193
      %p195 = scmp.ne.s32.totalorder %s186, %s187
      %p196 = scmp.eq.s32.totalorder %s47, 0
      %p197 = por %p195, %p196
      %p198 = scmp.ne.s32.totalorder %s186, %s187
      %p199 = scmp.eq.s32.totalorder %s48, 3
      %p200 = por %p198, %p199
      %p202 = scmp.ne.s32.totalorder %s187, %s201
      %p203 = scmp.eq.s32.totalorder %s48, 0
      %p204 = por %p202, %p203
      %s206 = sadd.s32 %s205, 1
      %p209 = scmp.eq.s32.totalorder %s42, 3
      %p210 = scmp.ne.s32.totalorder %s205, %s207
      %p211 = scmp.eq.s32.totalorder %s42, 0
      %p212 = por %p210, %p211
      %p213 = scmp.ne.s32.totalorder %s205, %s207
      %p214 = scmp.eq.s32.totalorder %s47, 3
      %p215 = por %p213, %p214
      %p216 = scmp.ne.s32.totalorder %s207, %s208
      %p217 = scmp.eq.s32.totalorder %s47, 0
      %p218 = por %p216, %p217
      %p219 = scmp.ne.s32.totalorder %s207, %s208
      %p220 = scmp.eq.s32.totalorder %s48, 3
      %p221 = por %p219, %p220
      %p223 = scmp.ne.s32.totalorder %s208, %s222
      %p224 = scmp.eq.s32.totalorder %s48, 0
      %p225 = por %p223, %p224
      %s227 = sadd.s32 %s226, 1
      %p230 = scmp.eq.s32.totalorder %s42, 3
      %p231 = scmp.ne.s32.totalorder %s226, %s228
      %p232 = scmp.eq.s32.totalorder %s42, 0
      %p233 = por %p231, %p232
      %p234 = scmp.ne.s32.totalorder %s226, %s228
      %p235 = scmp.eq.s32.totalorder %s47, 3
      %p236 = por %p234, %p235
      %p237 = scmp.ne.s32.totalorder %s228, %s229
      %p238 = scmp.eq.s32.totalorder %s47, 0
      %p239 = por %p237, %p238
      %p240 = scmp.ne.s32.totalorder %s228, %s229
      %p241 = scmp.eq.s32.totalorder %s48, 3
      %p242 = por %p240, %p241
      %p244 = scmp.ne.s32.totalorder %s229, %s243
      %p245 = scmp.eq.s32.totalorder %s48, 0
      %p246 = por %p244, %p245
      %s248 = sadd.s32 %s247, 1
      %p251 = scmp.eq.s32.totalorder %s42, 3
      %p252 = scmp.ne.s32.totalorder %s247, %s249
      %p253 = scmp.eq.s32.totalorder %s42, 0
      %p254 = por %p252, %p253
      %p255 = scmp.ne.s32.totalorder %s247, %s249
      %p256 = scmp.eq.s32.totalorder %s47, 3
      %p257 = por %p255, %p256
      %p258 = scmp.ne.s32.totalorder %s249, %s250
      %p259 = scmp.eq.s32.totalorder %s47, 0
      %p260 = por %p258, %p259
      %p261 = scmp.ne.s32.totalorder %s249, %s250
      %p262 = scmp.eq.s32.totalorder %s48, 3
      %p263 = por %p261, %p262
      %p265 = scmp.ne.s32.totalorder %s250, %s264
      %p266 = scmp.eq.s32.totalorder %s48, 0
      %p267 = por %p265, %p266
      %s269 = sadd.s32 %s268, 1
      %p272 = scmp.eq.s32.totalorder %s42, 3
      %p273 = scmp.ne.s32.totalorder %s268, %s270
      %p274 = scmp.eq.s32.totalorder %s42, 0
      %p275 = por %p273, %p274
      %p276 = scmp.ne.s32.totalorder %s268, %s270
      %p277 = scmp.eq.s32.totalorder %s47, 3
      %p278 = por %p276, %p277
      %p279 = scmp.ne.s32.totalorder %s270, %s271
      %p280 = scmp.eq.s32.totalorder %s47, 0
      %p281 = por %p279, %p280
      %p282 = scmp.ne.s32.totalorder %s270, %s271
      %p283 = scmp.eq.s32.totalorder %s48, 3
      %p284 = por %p282, %p283
      %p286 = scmp.ne.s32.totalorder %s271, %s285
      %p287 = scmp.eq.s32.totalorder %s48, 0
      %p288 = por %p286, %p287
      %s290 = sadd.s32 %s289, 1
      %p293 = scmp.eq.s32.totalorder %s42, 3
      %p294 = scmp.ne.s32.totalorder %s289, %s291
      %p295 = scmp.eq.s32.totalorder %s42, 0
      %p296 = por %p294, %p295
      %p297 = scmp.ne.s32.totalorder %s289, %s291
      %p298 = scmp.eq.s32.totalorder %s47, 3
      %p299 = por %p297, %p298
      %p300 = scmp.ne.s32.totalorder %s291, %s292
      %p301 = scmp.eq.s32.totalorder %s47, 0
      %p302 = por %p300, %p301
      %p303 = scmp.ne.s32.totalorder %s291, %s292
      %p304 = scmp.eq.s32.totalorder %s48, 3
      %p305 = por %p303, %p304
      %p307 = scmp.ne.s32.totalorder %s292, %s306
      %p308 = scmp.eq.s32.totalorder %s48, 0
      %p309 = por %p307, %p308
      %s311 = sadd.s32 %s310, 1
      %p314 = scmp.eq.s32.totalorder %s42, 3
      %p315 = scmp.ne.s32.totalorder %s310, %s312
      %p316 = scmp.eq.s32.totalorder %s42, 0
      %p317 = por %p315, %p316
      %p318 = scmp.ne.s32.totalorder %s310, %s312
      %p319 = scmp.eq.s32.totalorder %s47, 3
      %p320 = por %p318, %p319
      %p321 = scmp.ne.s32.totalorder %s312, %s313
      %p322 = scmp.eq.s32.totalorder %s47, 0
      %p323 = por %p321, %p322
      %p324 = scmp.ne.s32.totalorder %s312, %s313
      %p325 = scmp.eq.s32.totalorder %s48, 3
      %p326 = por %p324, %p325
      %p328 = scmp.ne.s32.totalorder %s313, %s327
      %p329 = scmp.eq.s32.totalorder %s48, 0
      %p330 = por %p328, %p329
      %s332 = sadd.s32 %s331, 1
      %p335 = scmp.eq.s32.totalorder %s42, 3
      %p336 = scmp.ne.s32.totalorder %s331, %s333
      %p337 = scmp.eq.s32.totalorder %s42, 0
      %p338 = por %p336, %p337
      %p339 = scmp.ne.s32.totalorder %s331, %s333
      %p340 = scmp.eq.s32.totalorder %s47, 3
      %p341 = por %p339, %p340
      %p342 = scmp.ne.s32.totalorder %s333, %s334
      %p343 = scmp.eq.s32.totalorder %s47, 0
      %p344 = por %p342, %p343
      %p345 = scmp.ne.s32.totalorder %s333, %s334
      %p346 = scmp.eq.s32.totalorder %s48, 3
      %p347 = por %p345, %p346
      %p349 = scmp.ne.s32.totalorder %s334, %s348
      %p350 = scmp.eq.s32.totalorder %s48, 0
      %p351 = por %p349, %p350
      %s353 = sadd.s32 %s352, 1
      %p356 = scmp.eq.s32.totalorder %s42, 3
      %p357 = scmp.ne.s32.totalorder %s352, %s354
      %p358 = scmp.eq.s32.totalorder %s42, 0
      %p359 = por %p357, %p358
      %p360 = scmp.ne.s32.totalorder %s352, %s354
      %p361 = scmp.eq.s32.totalorder %s47, 3
      %p362 = por %p360, %p361
      %p363 = scmp.ne.s32.totalorder %s354, %s355
      %p364 = scmp.eq.s32.totalorder %s47, 0
      %p365 = por %p363, %p364
      %p366 = scmp.ne.s32.totalorder %s354, %s355
      %p367 = scmp.eq.s32.totalorder %s48, 3
      %p368 = por %p366, %p367
      %p370 = scmp.ne.s32.totalorder %s355, %s369
      %p371 = scmp.eq.s32.totalorder %s48, 0
      %p372 = por %p370, %p371
      %s374 = sadd.s32 %s373, 1
      %p377 = scmp.eq.s32.totalorder %s42, 3
      %p378 = scmp.ne.s32.totalorder %s373, %s375
      %p379 = scmp.eq.s32.totalorder %s42, 0
      %p380 = por %p378, %p379
      %p381 = scmp.ne.s32.totalorder %s373, %s375
      %p382 = scmp.eq.s32.totalorder %s47, 3
      %p383 = por %p381, %p382
      %p384 = scmp.ne.s32.totalorder %s375, %s376
      %p385 = scmp.eq.s32.totalorder %s47, 0
      %p386 = por %p384, %p385
      %p387 = scmp.ne.s32.totalorder %s375, %s376
      %p388 = scmp.eq.s32.totalorder %s48, 3
      %p389 = por %p387, %p388
      %p391 = scmp.ne.s32.totalorder %s376, %s390
      %p392 = scmp.eq.s32.totalorder %s48, 0
      %p393 = por %p391, %p392
      %s395 = sadd.s32 %s394, 1
      %p398 = scmp.eq.s32.totalorder %s42, 3
      %p399 = scmp.ne.s32.totalorder %s394, %s396
      %p400 = scmp.eq.s32.totalorder %s42, 0
      %p401 = por %p399, %p400
      %p402 = scmp.ne.s32.totalorder %s394, %s396
      %p403 = scmp.eq.s32.totalorder %s47, 3
      %p404 = por %p402, %p403
      %p405 = scmp.ne.s32.totalorder %s396, %s397
      %p406 = scmp.eq.s32.totalorder %s47, 0
      %p407 = por %p405, %p406
      %p408 = scmp.ne.s32.totalorder %s396, %s397
      %p409 = scmp.eq.s32.totalorder %s48, 3
      %p410 = por %p408, %p409
      %p412 = scmp.ne.s32.totalorder %s397, %s411
      %p413 = scmp.eq.s32.totalorder %s48, 0
      %p414 = por %p412, %p413
      %s416 = sadd.s32 %s415, 1
      %p419 = scmp.eq.s32.totalorder %s42, 3
      %p420 = scmp.ne.s32.totalorder %s415, %s417
      %p421 = scmp.eq.s32.totalorder %s42, 0
      %p422 = por %p420, %p421
      %p423 = scmp.ne.s32.totalorder %s415, %s417
      %p424 = scmp.eq.s32.totalorder %s47, 3
      %p425 = por %p423, %p424
      %p426 = scmp.ne.s32.totalorder %s417, %s418
      %p427 = scmp.eq.s32.totalorder %s47, 0
      %p428 = por %p426, %p427
      %p429 = scmp.ne.s32.totalorder %s417, %s418
      %p430 = scmp.eq.s32.totalorder %s48, 3
      %p431 = por %p429, %p430
      %p433 = scmp.ne.s32.totalorder %s418, %s432
      %p434 = scmp.eq.s32.totalorder %s48, 0
      %p435 = por %p433, %p434
      %s437 = sadd.s32 %s436, 1
      %p440 = scmp.eq.s32.totalorder %s42, 3
      %p441 = scmp.ne.s32.totalorder %s436, %s438
      %p442 = scmp.eq.s32.totalorder %s42, 0
      %p443 = por %p441, %p442
      %p444 = scmp.ne.s32.totalorder %s436, %s438
      %p445 = scmp.eq.s32.totalorder %s47, 3
      %p446 = por %p444, %p445
      %p447 = scmp.ne.s32.totalorder %s438, %s439
      %p448 = scmp.eq.s32.totalorder %s47, 0
      %p449 = por %p447, %p448
      %p450 = scmp.ne.s32.totalorder %s438, %s439
      %p451 = scmp.eq.s32.totalorder %s48, 3
      %p452 = por %p450, %p451
      %p454 = scmp.ne.s32.totalorder %s439, %s453
      %p455 = scmp.eq.s32.totalorder %s48, 0
      %p456 = por %p454, %p455
      %s458 = sadd.s32 %s457, 1
      %p461 = scmp.eq.s32.totalorder %s42, 3
      %p462 = scmp.ne.s32.totalorder %s457, %s459
      %p463 = scmp.eq.s32.totalorder %s42, 0
      %p464 = por %p462, %p463
      %p465 = scmp.ne.s32.totalorder %s457, %s459
      %p466 = scmp.eq.s32.totalorder %s47, 3
      %p467 = por %p465, %p466
      %p468 = scmp.ne.s32.totalorder %s459, %s460
      %p469 = scmp.eq.s32.totalorder %s47, 0
      %p470 = por %p468, %p469
      %p471 = scmp.ne.s32.totalorder %s459, %s460
      %p472 = scmp.eq.s32.totalorder %s48, 3
      %p473 = por %p471, %p472
      %p475 = scmp.ne.s32.totalorder %s460, %s474
      %p476 = scmp.eq.s32.totalorder %s48, 0
      %p477 = por %p475, %p476
      %s478 = ssub.s32 %s49, %s61
      %s479 = ssub.s32 %s50, %s57
      %s480 = sor.u32 %s478, %s479
      %p481 = scmp.eq.s32.totalorder %s480, 0
      %s483 = sadd.s32 %s482, 1
      %s484 = scalar_select %p481, %s482, %s483
      %p487 = pneg %p481
      %p488 = scmp.eq.s32.totalorder %s42, 3
      %p489 = por %p487, %p488
      %p490 = scmp.ne.s32.totalorder %s482, %s485
      %p491 = scmp.eq.s32.totalorder %s42, 0
      %p492 = por %p490, %p491
      %p493 = scmp.ne.s32.totalorder %s482, %s485
      %p494 = scmp.eq.s32.totalorder %s47, 3
      %p495 = por %p493, %p494
      %p496 = scmp.ne.s32.totalorder %s485, %s486
      %p497 = scmp.eq.s32.totalorder %s47, 0
      %p498 = por %p496, %p497
      %p499 = scmp.ne.s32.totalorder %s485, %s486
      %p500 = scmp.eq.s32.totalorder %s48, 3
      %p501 = por %p499, %p500
      %p503 = scmp.ne.s32.totalorder %s486, %s502
      %p504 = scmp.eq.s32.totalorder %s48, 0
      %p505 = por %p503, %p504
      %s506 = ssub.s32 %s49, %s61
      %s507 = ssub.s32 %s50, %s57
      %s508 = sor.u32 %s506, %s507
      %p509 = scmp.eq.s32.totalorder %s508, 0
      %s511 = sadd.s32 %s510, 1
      %s512 = scalar_select %p509, %s510, %s511
      %p515 = pneg %p509
      %p516 = scmp.eq.s32.totalorder %s42, 3
      %p517 = por %p515, %p516
      %p518 = scmp.ne.s32.totalorder %s510, %s513
      %p519 = scmp.eq.s32.totalorder %s42, 0
      %p520 = por %p518, %p519
      %p521 = scmp.ne.s32.totalorder %s510, %s513
      %p522 = scmp.eq.s32.totalorder %s47, 3
      %p523 = por %p521, %p522
      %p524 = scmp.ne.s32.totalorder %s513, %s514
      %p525 = scmp.eq.s32.totalorder %s47, 0
      %p526 = por %p524, %p525
      %p527 = scmp.ne.s32.totalorder %s513, %s514
      %p528 = scmp.eq.s32.totalorder %s48, 3
      %p529 = por %p527, %p528
      %p531 = scmp.ne.s32.totalorder %s514, %s530
      %p532 = scmp.eq.s32.totalorder %s48, 0
      %p533 = por %p531, %p532
      %p534 = scmp.le.s32.totalorder 1, %s42
      %p535 = scmp.lt.s32.totalorder %s42, 5
      %p536 = pnand %p534, %p535
      %p537 = pneg %p536
      // Predicated region
      $region9: #{tpu_custom_call.1} parent=5 // pred_check
        _
      $region10: #{tpu_custom_call.1} parent=5 // pred_check_branch
        %539 = sbr.rel (%p536) target = $region12
      $region11: #{tpu_custom_call.1} parent=5 // pred_region
        %s540 = ssub.s32 %s42, 1
        // Predicated region
        $region13: #{tpu_custom_call.1} parent=11 // pred_check
          %p541 = pneg %p155
        $region14: #{tpu_custom_call.1} parent=11 // pred_check_branch
          %543 = sbr.rel (%p541) target = $region16
        $region15: #{tpu_custom_call.1} parent=11 // pred_region
          _
        $region16: #{tpu_custom_call.1} parent=11 // pred_fallthru
          _
        // Predicated region
        $region17: #{tpu_custom_call.1} parent=11 // pred_check
          %p544 = pneg %p176
        $region18: #{tpu_custom_call.1} parent=11 // pred_check_branch
          %546 = sbr.rel (%p544) target = $region20
        $region19: #{tpu_custom_call.1} parent=11 // pred_region
          _
        $region20: #{tpu_custom_call.1} parent=11 // pred_fallthru
          _
        // Predicated region
        $region21: #{tpu_custom_call.1} parent=11 // pred_check
          %p547 = pneg %p197
        $region22: #{tpu_custom_call.1} parent=11 // pred_check_branch
          %549 = sbr.rel (%p547) target = $region24
        $region23: #{tpu_custom_call.1} parent=11 // pred_region
          %s551 = ssub.s32 256, 256
          %552 = vsyncadd [#allocation6], %s551
          %s553 = sshll.u32 [#allocation7], 4
          %s554 = int_to_ptr.vmem [resolvable:$true] %s553
          %559 = dma.hbm_to_vmem [thread:$0]  %s5, 256, %s554, [#allocation6], 64, 64, 4
        $region24: #{tpu_custom_call.1} parent=11 // pred_fallthru
          _
        // Predicated region
        $region25: #{tpu_custom_call.1} parent=11 // pred_check
          %p560 = pneg %p218
        $region26: #{tpu_custom_call.1} parent=11 // pred_check_branch
          %562 = sbr.rel (%p560) target = $region28
        $region27: #{tpu_custom_call.1} parent=11 // pred_region
          %s564 = ssub.s32 16, 16
          %565 = vsyncadd [#allocation9], %s564
          %s567 = sshll.u32 [#allocation8], 4
          %s568 = int_to_ptr.vmem [resolvable:$true] %s567
          %570 = dma.hbm_to_vmem [thread:$0]  %s6, 16, %s568, [#allocation9]
        $region28: #{tpu_custom_call.1} parent=11 // pred_fallthru
          _
        // Predicated region
        $region29: #{tpu_custom_call.1} parent=11 // pred_check
          %p571 = pneg %p239
        $region30: #{tpu_custom_call.1} parent=11 // pred_check_branch
          %573 = sbr.rel (%p571) target = $region32
        $region31: #{tpu_custom_call.1} parent=11 // pred_region
          %s575 = ssub.s32 256, 256
          %576 = vsyncadd [#allocation9], %s575
          %s577 = sshll.u32 [#allocation10], 4
          %s578 = int_to_ptr.vmem [resolvable:$true] %s577
          %583 = dma.hbm_to_vmem [thread:$0]  %s7, 256, %s578, [#allocation9], 64, 64, 4
        $region32: #{tpu_custom_call.1} parent=11 // pred_fallthru
          _
        // Predicated region
        $region33: #{tpu_custom_call.1} parent=11 // pred_check
          %p584 = pneg %p260
        $region34: #{tpu_custom_call.1} parent=11 // pred_check_branch
          %586 = sbr.rel (%p584) target = $region36
        $region35: #{tpu_custom_call.1} parent=11 // pred_region
          %s588 = ssub.s32 16, 16
          %589 = vsyncadd [#allocation12], %s588
          %s591 = sshll.u32 [#allocation11], 4
          %s592 = int_to_ptr.vmem [resolvable:$true] %s591
          %594 = dma.hbm_to_vmem [thread:$0]  %s8, 16, %s592, [#allocation12]
        $region36: #{tpu_custom_call.1} parent=11 // pred_fallthru
          _
        // Predicated region
        $region37: #{tpu_custom_call.1} parent=11 // pred_check
          %p595 = pneg %p281
        $region38: #{tpu_custom_call.1} parent=11 // pred_check_branch
          %597 = sbr.rel (%p595) target = $region40
        $region39: #{tpu_custom_call.1} parent=11 // pred_region
          _
        $region40: #{tpu_custom_call.1} parent=11 // pred_fallthru
          _
        // Predicated region
        $region41: #{tpu_custom_call.1} parent=11 // pred_check
          %p598 = pneg %p302
        $region42: #{tpu_custom_call.1} parent=11 // pred_check_branch
          %600 = sbr.rel (%p598) target = $region44
        $region43: #{tpu_custom_call.1} parent=11 // pred_region
          %s602 = ssub.s32 16, 16
          %603 = vsyncadd [#allocation12], %s602
          %s605 = sshll.u32 [#allocation13], 4
          %s606 = int_to_ptr.vmem [resolvable:$true] %s605
          %608 = dma.hbm_to_vmem [thread:$0]  %s10, 16, %s606, [#allocation12]
        $region44: #{tpu_custom_call.1} parent=11 // pred_fallthru
          _
        // Predicated region
        $region45: #{tpu_custom_call.1} parent=11 // pred_check
          %p609 = pneg %p323
        $region46: #{tpu_custom_call.1} parent=11 // pred_check_branch
          %611 = sbr.rel (%p609) target = $region48
        $region47: #{tpu_custom_call.1} parent=11 // pred_region
          %s613 = ssub.s32 16, 16
          %614 = vsyncadd [#allocation15], %s613
          %s616 = sshll.u32 [#allocation14], 4
          %s617 = int_to_ptr.vmem [resolvable:$true] %s616
          %619 = dma.hbm_to_vmem [thread:$0]  %s11, 16, %s617, [#allocation15]
        $region48: #{tpu_custom_call.1} parent=11 // pred_fallthru
          _
        // Predicated region
        $region49: #{tpu_custom_call.1} parent=11 // pred_check
          %p620 = pneg %p344
        $region50: #{tpu_custom_call.1} parent=11 // pred_check_branch
          %622 = sbr.rel (%p620) target = $region52
        $region51: #{tpu_custom_call.1} parent=11 // pred_region
          %s624 = ssub.s32 16, 16
          %625 = vsyncadd [#allocation15], %s624
          %s627 = sshll.u32 [#allocation16], 4
          %s628 = int_to_ptr.vmem [resolvable:$true] %s627
          %630 = dma.hbm_to_vmem [thread:$0]  %s12, 16, %s628, [#allocation15]
        $region52: #{tpu_custom_call.1} parent=11 // pred_fallthru
          _
        // Predicated region
        $region53: #{tpu_custom_call.1} parent=11 // pred_check
          %p631 = pneg %p365
        $region54: #{tpu_custom_call.1} parent=11 // pred_check_branch
          %633 = sbr.rel (%p631) target = $region56
        $region55: #{tpu_custom_call.1} parent=11 // pred_region
          _
        $region56: #{tpu_custom_call.1} parent=11 // pred_fallthru
          _
        // Predicated region
        $region57: #{tpu_custom_call.1} parent=11 // pred_check
          %p634 = pneg %p386
        $region58: #{tpu_custom_call.1} parent=11 // pred_check_branch
          %636 = sbr.rel (%p634) target = $region60
        $region59: #{tpu_custom_call.1} parent=11 // pred_region
          _
        $region60: #{tpu_custom_call.1} parent=11 // pred_fallthru
          _
        // Predicated region
        $region61: #{tpu_custom_call.1} parent=11 // pred_check
          %p637 = pneg %p407
        $region62: #{tpu_custom_call.1} parent=11 // pred_check_branch
          %639 = sbr.rel (%p637) target = $region64
        $region63: #{tpu_custom_call.1} parent=11 // pred_region
          _
        $region64: #{tpu_custom_call.1} parent=11 // pred_fallthru
          _
        // Predicated region
        $region65: #{tpu_custom_call.1} parent=11 // pred_check
          %p640 = pneg %p428
        $region66: #{tpu_custom_call.1} parent=11 // pred_check_branch
          %642 = sbr.rel (%p640) target = $region68
        $region67: #{tpu_custom_call.1} parent=11 // pred_region
          _
        $region68: #{tpu_custom_call.1} parent=11 // pred_fallthru
          _
        // Predicated region
        $region69: #{tpu_custom_call.1} parent=11 // pred_check
          %p643 = pneg %p449
        $region70: #{tpu_custom_call.1} parent=11 // pred_check_branch
          %645 = sbr.rel (%p643) target = $region72
        $region71: #{tpu_custom_call.1} parent=11 // pred_region
          _
        $region72: #{tpu_custom_call.1} parent=11 // pred_fallthru
          _
        // Predicated region
        $region73: #{tpu_custom_call.1} parent=11 // pred_check
          %p646 = pneg %p470
        $region74: #{tpu_custom_call.1} parent=11 // pred_check_branch
          %648 = sbr.rel (%p646) target = $region76
        $region75: #{tpu_custom_call.1} parent=11 // pred_region
          _
        $region76: #{tpu_custom_call.1} parent=11 // pred_fallthru
          _
      $region12: #{tpu_custom_call.1} parent=5 // pred_fallthru
        _
      %p649 = scmp.lt.s32.totalorder %s42, 4
      // Predicated region
      $region77: #{tpu_custom_call.1} parent=5 // pred_check
        %p650 = pneg %p649
      $region78: #{tpu_custom_call.1} parent=5 // pred_check_branch
        %652 = sbr.rel (%p650) target = $region80
      $region79: #{tpu_custom_call.1} parent=5 // pred_region
        // Predicated region
        $region81: #{tpu_custom_call.1} parent=79 // pred_check
          %p653 = pneg %p76
        $region82: #{tpu_custom_call.1} parent=79 // pred_check_branch
          %655 = sbr.rel (%p653) target = $region84
        $region83: #{tpu_custom_call.1} parent=79 // pred_region
          %p656 = scmp.lt.s32.totalorder %s49, 1
          %s657 = scalar_select %p656, %s49, 1
          %p658 = scmp.lt.s32.totalorder %s50, 1
          %s659 = scalar_select %p658, %s50, 1
          %s660 = smul.addr %s657, 2
          %s661 = sadd.s32 %s659, %s660
          %s662 = smul.addr %s661, 8
          %s663 = scalar_lea.vmem %s0, %s662
        $region84: #{tpu_custom_call.1} parent=79 // pred_fallthru
          _
        // Predicated region
        $region85: #{tpu_custom_call.1} parent=79 // pred_check
          %p664 = pneg %p102
        $region86: #{tpu_custom_call.1} parent=79 // pred_check_branch
          %666 = sbr.rel (%p664) target = $region88
        $region87: #{tpu_custom_call.1} parent=79 // pred_region
          %s667 = sand.u32 %s92, 1
          %s668 = scalar_lea.sflag [#allocation3], %s667
          %s669 = sand.u32 %s92, 1
          %s670 = smul.addr %s669, 16
          %s671 = scalar_lea.vmem [#allocation2], %s670
          %s673 = ssub.s32 256, 256
          %674 = vsyncadd %s668, %s673
          %s675 = smul.addr %s49, 2
          %s676 = smul.addr %s675, 128
          %s677 = scalar_lea.hbm %s1, %s676
          %s678 = sshll.u32 %s671, 4
          %s679 = int_to_ptr.vmem [resolvable:$true] %s678
          %684 = dma.hbm_to_vmem [thread:$0]  %s677, 256, %s679, %s668, 128, 128, 8
        $region88: #{tpu_custom_call.1} parent=79 // pred_fallthru
          _
        // Predicated region
        $region89: #{tpu_custom_call.1} parent=79 // pred_check
          %p685 = pneg %p128
        $region90: #{tpu_custom_call.1} parent=79 // pred_check_branch
          %687 = sbr.rel (%p685) target = $region92
        $region91: #{tpu_custom_call.1} parent=79 // pred_region
          %s688 = sand.u32 %s42, 1
          %s689 = scalar_lea.sflag [#allocation6], %s688
          %s690 = sand.u32 %s118, 1
          %s691 = scalar_lea.vmem [#allocation5], %s690
          %s693 = ssub.s32 16, 16
          %694 = vsyncadd %s689, %s693
          %s695 = smul.addr %s49, 16
          %s696 = scalar_lea.hbm %s2, %s695
          %s698 = sshll.u32 %s691, 4
          %s699 = int_to_ptr.vmem [resolvable:$true] %s698
          %701 = dma.hbm_to_vmem [thread:$0]  %s696, 16, %s699, %s689
        $region92: #{tpu_custom_call.1} parent=79 // pred_fallthru
          _
      $region80: #{tpu_custom_call.1} parent=5 // pred_fallthru
        _
      %p702 = scmp.le.s32.totalorder 1, %s42
      %p703 = scmp.lt.s32.totalorder %s42, 5
      %p704 = pnand %p702, %p703
      %p705 = pneg %p704
      // Predicated region
      $region93: #{tpu_custom_call.1} parent=5 // pred_check
        _
      $region94: #{tpu_custom_call.1} parent=5 // pred_check_branch
        %707 = sbr.rel (%p704) target = $region96
      $region95: #{tpu_custom_call.1} parent=5 // pred_region
        %s708 = ssub.s32 %s42, 1
        %s709 = sand.u32 %s95, 1
        %s710 = scalar_lea.sflag [#allocation3], %s709
        %s711 = sand.u32 %s95, 1
        %s712 = smul.addr %s711, 16
        %s713 = scalar_lea.vmem [#allocation2], %s712
        // Predicated region
        $region97: #{tpu_custom_call.1} parent=95 // pred_check
          %p714 = pneg %p108
        $region98: #{tpu_custom_call.1} parent=95 // pred_check_branch
          %716 = sbr.rel (%p714) target = $region100
        $region99: #{tpu_custom_call.1} parent=95 // pred_region
          %717 = dma.done %s710, 256
        $region100: #{tpu_custom_call.1} parent=95 // pred_fallthru
          _
        %s718 = sand.u32 %s47, 1
        %s719 = scalar_lea.sflag [#allocation6], %s718
        %s720 = sand.u32 %s121, 1
        %s721 = scalar_lea.vmem [#allocation5], %s720
        // Predicated region
        $region101: #{tpu_custom_call.1} parent=95 // pred_check
          %p722 = pneg %p134
        $region102: #{tpu_custom_call.1} parent=95 // pred_check_branch
          %724 = sbr.rel (%p722) target = $region104
        $region103: #{tpu_custom_call.1} parent=95 // pred_region
          %725 = dma.done %s719, 16
        $region104: #{tpu_custom_call.1} parent=95 // pred_fallthru
          _
        // Predicated region
        $region105: #{tpu_custom_call.1} parent=95 // pred_check
          %p726 = pneg %p197
        $region106: #{tpu_custom_call.1} parent=95 // pred_check_branch
          %728 = sbr.rel (%p726) target = $region108
        $region107: #{tpu_custom_call.1} parent=95 // pred_region
          %729 = dma.done [#allocation6], 256
        $region108: #{tpu_custom_call.1} parent=95 // pred_fallthru
          _
        // Predicated region
        $region109: #{tpu_custom_call.1} parent=95 // pred_check
          %p730 = pneg %p218
        $region110: #{tpu_custom_call.1} parent=95 // pred_check_branch
          %732 = sbr.rel (%p730) target = $region112
        $region111: #{tpu_custom_call.1} parent=95 // pred_region
          %733 = dma.done [#allocation9], 16
        $region112: #{tpu_custom_call.1} parent=95 // pred_fallthru
          _
        // Predicated region
        $region113: #{tpu_custom_call.1} parent=95 // pred_check
          %p734 = pneg %p239
        $region114: #{tpu_custom_call.1} parent=95 // pred_check_branch
          %736 = sbr.rel (%p734) target = $region116
        $region115: #{tpu_custom_call.1} parent=95 // pred_region
          %737 = dma.done [#allocation9], 256
        $region116: #{tpu_custom_call.1} parent=95 // pred_fallthru
          _
        // Predicated region
        $region117: #{tpu_custom_call.1} parent=95 // pred_check
          %p738 = pneg %p260
        $region118: #{tpu_custom_call.1} parent=95 // pred_check_branch
          %740 = sbr.rel (%p738) target = $region120
        $region119: #{tpu_custom_call.1} parent=95 // pred_region
          %741 = dma.done [#allocation12], 16
        $region120: #{tpu_custom_call.1} parent=95 // pred_fallthru
          _
        // Predicated region
        $region121: #{tpu_custom_call.1} parent=95 // pred_check
          %p742 = pneg %p302
        $region122: #{tpu_custom_call.1} parent=95 // pred_check_branch
          %744 = sbr.rel (%p742) target = $region124
        $region123: #{tpu_custom_call.1} parent=95 // pred_region
          %745 = dma.done [#allocation12], 16
        $region124: #{tpu_custom_call.1} parent=95 // pred_fallthru
          _
        // Predicated region
        $region125: #{tpu_custom_call.1} parent=95 // pred_check
          %p746 = pneg %p323
        $region126: #{tpu_custom_call.1} parent=95 // pred_check_branch
          %748 = sbr.rel (%p746) target = $region128
        $region127: #{tpu_custom_call.1} parent=95 // pred_region
          %749 = dma.done [#allocation15], 16
        $region128: #{tpu_custom_call.1} parent=95 // pred_fallthru
          _
        // Predicated region
        $region129: #{tpu_custom_call.1} parent=95 // pred_check
          %p750 = pneg %p344
        $region130: #{tpu_custom_call.1} parent=95 // pred_check_branch
          %752 = sbr.rel (%p750) target = $region132
        $region131: #{tpu_custom_call.1} parent=95 // pred_region
          %753 = dma.done [#allocation15], 16
        $region132: #{tpu_custom_call.1} parent=95 // pred_fallthru
          _
        %p754 = scmp.lt.s32.totalorder %s51, 1
        %s755 = scalar_select %p754, %s51, 1
        %p756 = scmp.lt.s32.totalorder %s52, 1
        %s757 = scalar_select %p756, %s52, 1
        %s758 = smul.addr %s755, 2
        %s759 = sadd.s32 %s757, %s758
        %s760 = smul.addr %s759, 8
        %s761 = scalar_lea.vmem %s0, %s760
        %p762 = pneg %p82
        %p763 = pneg %p79
        %s764 = sand.u32 %s95, 1
        %s765 = scalar_lea.sflag [#allocation3], %s764
        %s766 = sand.u32 %s95, 1
        %s767 = smul.addr %s766, 16
        %s768 = scalar_lea.vmem [#allocation2], %s767
        %p769 = pneg %p108
        %p770 = pneg %p105
        %s771 = sand.u32 %s47, 1
        %s772 = scalar_lea.sflag [#allocation6], %s771
        %s773 = sand.u32 %s121, 1
        %s774 = scalar_lea.vmem [#allocation5], %s773
        %p775 = pneg %p134
        %p776 = pneg %p131
        %p777 = pneg %p155
        %p778 = pneg %p152
        %p779 = pneg %p176
        %p780 = pneg %p173
        %p781 = pneg %p197
        %p782 = pneg %p194
        %p783 = pneg %p218
        %p784 = pneg %p215
        %p785 = pneg %p239
        %p786 = pneg %p236
        %p787 = pneg %p260
        %p788 = pneg %p257
        %p789 = pneg %p281
        %p790 = pneg %p278
        %p791 = pneg %p302
        %p792 = pneg %p299
        %p793 = pneg %p323
        %p794 = pneg %p320
        %p795 = pneg %p344
        %p796 = pneg %p341
        %p797 = pneg %p365
        %p798 = pneg %p362
        %p799 = pneg %p386
        %p800 = pneg %p383
        %p801 = pneg %p407
        %p802 = pneg %p404
        %p803 = pneg %p428
        %p804 = pneg %p425
        %p805 = pneg %p449
        %p806 = pneg %p446
        %p807 = pneg %p470
        %p808 = pneg %p467
        %p809 = pneg %p498
        %p810 = pneg %p495
        %s811 = sand.u32 %s485, 1
        %s812 = scalar_lea.sflag [#allocation4], %s811
        %s813 = sand.u32 %s485, 1
        %s814 = smul.addr %s813, 8
        %s815 = scalar_lea.vmem [#allocation17], %s814
        %p816 = pneg %p526
        %p817 = pneg %p523
        %s818 = sand.u32 %s513, 1
        %s819 = scalar_lea.sflag [#allocation19], %s818
        %s820 = sand.u32 %s513, 1
        %s821 = smul.addr %s820, 32
        %s822 = scalar_lea.vmem [#allocation18], %s821
        %p823 = scmp.lt.s32.totalorder %s51, 1
        %s824 = scalar_select %p823, %s51, 1
        %p825 = scmp.lt.s32.totalorder %s52, 1
        %s826 = scalar_select %p825, %s52, 1
        %s827 = smul.addr %s824, 2
        %s828 = sadd.s32 %s826, %s827
        %s829 = smul.addr %s828, 8
        %s830 = scalar_lea.vmem %s0, %s829
        %v832 = vld [vmem:[%s830] sm:$0xff]
        %v833 = vld [vmem:[%s713] sm:$0xff]
        %v834 = vld [vmem:[%s713 + $0x8] sm:$0xff]
        %v835 = vld [vmem:[%s721] sm:$0x1]
        %v836 = vsub.f32 1.0, %v835
        %v837 = vmul.f32 %v836, -1e+09
        %v838 = vpack.c.bf16 %v832, %v832
        %v839 = vpack.c.bf16 %v834, %v833
        %v840 = vld [vmem:[%s3] sm:$0xf]
        %v841 = vld [vmem:[%s3 + $0x4] sm:$0xf]
        %v842 = vld [vmem:[%s3 + $0x8] sm:$0xf]
        %v843 = vld [vmem:[%s3 + $0xc] sm:$0xf]
        %v844 = vld [vmem:[%s4] sm:$0x1]
        %v846 = vlaneseq
        %v847 = vshrl.u32 %v846, 7
        %v848 = vsub.s32 0, %v847
        %v849 = vrot.slane %v844, %v848
        %v855 = vunpack.c.l.b16 %v840
        %v856 = vunpack.c.l.b16 %v841
        %v857 = vunpack.c.l.b16 %v842
        %v858 = vunpack.c.l.b16 %v843
        %v859 = vpack.c.b16 %v856, %v855
        %v860 = vpack.c.b16 %v858, %v857
        %vm863 = vcmask 261120
        %v865 = vsel %vm863, %v838, 0
        %867 = vmatprep.subr.bf16.mxu0 0
        %868 = vmatpush1.bf16.msra.mxu0 %v859
        %869 = vmatprep.subr.bf16.mxu0 0
        %870 = vmatpush1.bf16.msra.mxu0 %v860
        %871 = vmatprep.subr.bf16.mxu0 0
        %872 = vmatpush1.bf16.msra.mxu0 0
        %873 = vmatprep.subr.bf16.mxu0 0
        %874 = vmatpush1.bf16.msra.mxu0 0
        %875 = vmatprep.subr.bf16.mxu0 0
        %876 = vmatpush1.bf16.msra.mxu0 0
        %877 = vmatprep.subr.bf16.mxu0 0
        %878 = vmatpush1.bf16.msra.mxu0 0
        %879 = vmatprep.subr.bf16.mxu0 0
        %880 = vmatpush1.bf16.msra.mxu0 0
        %881 = vmatprep.subr.bf16.mxu0 0
        %882 = vmatpush1.bf16.msra.mxu0 0
        %883 = vmatprep.subr.bf16.mxu0 0
        %884 = vmatpush1.bf16.msra.mxu0 0
        %885 = vmatprep.subr.bf16.mxu0 0
        %886 = vmatpush1.bf16.msra.mxu0 0
        %887 = vmatprep.subr.bf16.mxu0 0
        %888 = vmatpush1.bf16.msra.mxu0 0
        %889 = vmatprep.subr.bf16.mxu0 0
        %890 = vmatpush1.bf16.msra.mxu0 0
        %891 = vmatprep.subr.bf16.mxu0 0
        %892 = vmatpush1.bf16.msra.mxu0 0
        %893 = vmatprep.subr.bf16.mxu0 0
        %894 = vmatpush1.bf16.msra.mxu0 0
        %895 = vmatprep.subr.bf16.mxu0 0
        %896 = vmatpush1.bf16.msra.mxu0 0
        %897 = vmatprep.subr.bf16.mxu0 0
        %898 = vmatpush1.bf16.msra.mxu0 0
        %899 = vmatprep.mubr.bf16.mxu0 0
        %900 = vmatmul.mubr.bf16.gmra.mrb[0].mxu0 %v865
        %v901 = vpop.f32.mrb[0].mxu0
        %v902 = vadd.f32 %v849, %v901
        %v903 = vpop.f32.mrb[0].mxu0
        %v904 = vpop.f32.mrb[0].mxu0
        %v905 = vpop.f32.mrb[0].mxu0
        %906 = vdwg.mxu0
        %v907 = vmul.f32 %v902, 0.35355338
        %v908 = vld [vmem:[#allocation7] sm:$0xf]
        %v909 = vld [vmem:[#allocation7 + $0x4] sm:$0xf]
        %v910 = vld [vmem:[#allocation7 + $0x8] sm:$0xf]
        %v911 = vld [vmem:[#allocation7 + $0xc] sm:$0xf]
        %v912 = vld [vmem:[#allocation8] sm:$0x1]
        %v914 = vlaneseq
        %v915 = vshrl.u32 %v914, 7
        %v916 = vsub.s32 0, %v915
        %v917 = vrot.slane %v912, %v916
        %v923 = vunpack.c.l.b16 %v908
        %v924 = vunpack.c.l.b16 %v909
        %v925 = vunpack.c.l.b16 %v910
        %v926 = vunpack.c.l.b16 %v911
        %v927 = vpack.c.b16 %v924, %v923
        %v928 = vpack.c.b16 %v926, %v925
        %v932 = vsel %vm863, %v839, 0
        %934 = vmatprep.subr.bf16.mxu0 0
        %935 = vmatpush1.bf16.msra.mxu0 %v927
        %936 = vmatprep.subr.bf16.mxu0 0
        %937 = vmatpush1.bf16.msra.mxu0 %v928
        %938 = vmatprep.subr.bf16.mxu0 0
        %939 = vmatpush1.bf16.msra.mxu0 0
        %940 = vmatprep.subr.bf16.mxu0 0
        %941 = vmatpush1.bf16.msra.mxu0 0
        %942 = vmatprep.subr.bf16.mxu0 0
        %943 = vmatpush1.bf16.msra.mxu0 0
        %944 = vmatprep.subr.bf16.mxu0 0
        %945 = vmatpush1.bf16.msra.mxu0 0
        %946 = vmatprep.subr.bf16.mxu0 0
        %947 = vmatpush1.bf16.msra.mxu0 0
        %948 = vmatprep.subr.bf16.mxu0 0
        %949 = vmatpush1.bf16.msra.mxu0 0
        %950 = vmatprep.subr.bf16.mxu0 0
        %951 = vmatpush1.bf16.msra.mxu0 0
        %952 = vmatprep.subr.bf16.mxu0 0
        %953 = vmatpush1.bf16.msra.mxu0 0
        %954 = vmatprep.subr.bf16.mxu0 0
        %955 = vmatpush1.bf16.msra.mxu0 0
        %956 = vmatprep.subr.bf16.mxu0 0
        %957 = vmatpush1.bf16.msra.mxu0 0
        %958 = vmatprep.subr.bf16.mxu0 0
        %959 = vmatpush1.bf16.msra.mxu0 0
        %960 = vmatprep.subr.bf16.mxu0 0
        %961 = vmatpush1.bf16.msra.mxu0 0
        %962 = vmatprep.subr.bf16.mxu0 0
        %963 = vmatpush1.bf16.msra.mxu0 0
        %964 = vmatprep.subr.bf16.mxu0 0
        %965 = vmatpush1.bf16.msra.mxu0 0
        %966 = vmatprep.mubr.bf16.mxu0 0
        %967 = vmatmul.mubr.bf16.gmra.mrb[0].mxu0 %v932
        %v968 = vpop.f32.mrb[0].mxu0
        %v969 = vadd.f32 %v917, %v968
        %v970 = vpop.f32.mrb[0].mxu0
        %v971 = vpop.f32.mrb[0].mxu0
        %v972 = vadd.f32 %v917, %v971
        %v973 = vpop.f32.mrb[0].mxu0
        %974 = vdwg.mxu0
        %v975 = vld [vmem:[#allocation10] sm:$0xf]
        %v976 = vld [vmem:[#allocation10 + $0x4] sm:$0xf]
        %v977 = vld [vmem:[#allocation10 + $0x8] sm:$0xf]
        %v978 = vld [vmem:[#allocation10 + $0xc] sm:$0xf]
        %v979 = vld [vmem:[#allocation11] sm:$0x1]
        %v981 = vlaneseq
        %v982 = vshrl.u32 %v981, 7
        %v983 = vsub.s32 0, %v982
        %v984 = vrot.slane %v979, %v983
        %v990 = vunpack.c.l.b16 %v975
        %v991 = vunpack.c.l.b16 %v976
        %v992 = vunpack.c.l.b16 %v977
        %v993 = vunpack.c.l.b16 %v978
        %v994 = vpack.c.b16 %v991, %v990
        %v995 = vpack.c.b16 %v993, %v992
        %998 = vmatprep.subr.bf16.mxu0 0
        %999 = vmatpush1.bf16.msra.mxu0 %v994
        %1000 = vmatprep.subr.bf16.mxu0 0
        %1001 = vmatpush1.bf16.msra.mxu0 %v995
        %1002 = vmatprep.subr.bf16.mxu0 0
        %1003 = vmatpush1.bf16.msra.mxu0 0
        %1004 = vmatprep.subr.bf16.mxu0 0
        %1005 = vmatpush1.bf16.msra.mxu0 0
        %1006 = vmatprep.subr.bf16.mxu0 0
        %1007 = vmatpush1.bf16.msra.mxu0 0
        %1008 = vmatprep.subr.bf16.mxu0 0
        %1009 = vmatpush1.bf16.msra.mxu0 0
        %1010 = vmatprep.subr.bf16.mxu0 0
        %1011 = vmatpush1.bf16.msra.mxu0 0
        %1012 = vmatprep.subr.bf16.mxu0 0
        %1013 = vmatpush1.bf16.msra.mxu0 0
        %1014 = vmatprep.subr.bf16.mxu0 0
        %1015 = vmatpush1.bf16.msra.mxu0 0
        %1016 = vmatprep.subr.bf16.mxu0 0
        %1017 = vmatpush1.bf16.msra.mxu0 0
        %1018 = vmatprep.subr.bf16.mxu0 0
        %1019 = vmatpush1.bf16.msra.mxu0 0
        %1020 = vmatprep.subr.bf16.mxu0 0
        %1021 = vmatpush1.bf16.msra.mxu0 0
        %1022 = vmatprep.subr.bf16.mxu0 0
        %1023 = vmatpush1.bf16.msra.mxu0 0
        %1024 = vmatprep.subr.bf16.mxu0 0
        %1025 = vmatpush1.bf16.msra.mxu0 0
        %1026 = vmatprep.subr.bf16.mxu0 0
        %1027 = vmatpush1.bf16.msra.mxu0 0
        %1028 = vmatprep.subr.bf16.mxu0 0
        %1029 = vmatpush1.bf16.msra.mxu0 0
        %1030 = vmatprep.mubr.bf16.mxu0 0
        %1031 = vmatmul.mubr.bf16.gmra.mrb[0].mxu0 %v932
        %v1032 = vpop.f32.mrb[0].mxu0
        %v1033 = vadd.f32 %v984, %v1032
        %v1034 = vpop.f32.mrb[0].mxu0
        %v1035 = vpop.f32.mrb[0].mxu0
        %v1036 = vadd.f32 %v984, %v1035
        %v1037 = vpop.f32.mrb[0].mxu0
        %1038 = vdwg.mxu0
        %1040 = vrot.lane.b32.xlu0 %v907, 120
        %v1041 = vpop.permute.xlu0 %1040
        %1043 = vrot.lane.b32.xlu0 %v907, 112
        %v1044 = vpop.permute.xlu0 %1043
        %1046 = vrot.lane.b32.xlu0 %v907, 104
        %v1047 = vpop.permute.xlu0 %1046
        %v1049 = vcombine.low %v907, %v1044
        %v1050 = vcombine.high %v907, %v1044
        %v1052 = vunpack.c.l.s4 1983009808
        %v1053 = vunpack.c.0.s8 %v1052
        %v1054 = vlaneseq
        %v1055 = vshrl.u32 %v1054, 7
        %v1056 = vsub.s32 %v1053, %v1055
        %v1057 = vrot.slane %v1049, %v1056
        %v1059 = vunpack.c.l.s4 1983009808
        %v1060 = vunpack.c.0.s8 %v1059
        %v1061 = vlaneseq
        %v1062 = vshrl.u32 %v1061, 7
        %v1063 = vsub.s32 %v1060, %v1062
        %v1064 = vrot.slane %v1050, %v1063
        %v1065 = vcombine.low %v1041, %v1047
        %v1066 = vcombine.high %v1041, %v1047
        %v1068 = vunpack.c.l.s4 1983009808
        %v1069 = vunpack.c.0.s8 %v1068
        %v1070 = vlaneseq
        %v1071 = vshrl.u32 %v1070, 7
        %v1072 = vsub.s32 %v1069, %v1071
        %v1073 = vrot.slane %v1065, %v1072
        %v1075 = vunpack.c.l.s4 1983009808
        %v1076 = vunpack.c.0.s8 %v1075
        %v1077 = vlaneseq
        %v1078 = vshrl.u32 %v1077, 7
        %v1079 = vsub.s32 %v1076, %v1078
        %v1080 = vrot.slane %v1066, %v1079
        %v1081 = vcombine.low %v1057, %v1073
        %v1082 = vcombine.high %v1057, %v1073
        %v1084 = vunpack.c.l.s4 1934713408
        %v1085 = vunpack.c.0.s8 %v1084
        %v1086 = vlaneseq
        %v1087 = vshrl.u32 %v1086, 7
        %v1088 = vsub.s32 %v1085, %v1087
        %v1089 = vrot.slane %v1081, %v1088
        %v1091 = vunpack.c.l.s4 1934713408
        %v1092 = vunpack.c.0.s8 %v1091
        %v1093 = vlaneseq
        %v1094 = vshrl.u32 %v1093, 7
        %v1095 = vsub.s32 %v1092, %v1094
        %v1096 = vrot.slane %v1082, %v1095
        %v1097 = vcombine.low %v1064, %v1080
        %v1098 = vcombine.high %v1064, %v1080
        %v1100 = vunpack.c.l.s4 1934713408
        %v1101 = vunpack.c.0.s8 %v1100
        %v1102 = vlaneseq
        %v1103 = vshrl.u32 %v1102, 7
        %v1104 = vsub.s32 %v1101, %v1103
        %v1105 = vrot.slane %v1097, %v1104
        %v1107 = vunpack.c.l.s4 1934713408
        %v1108 = vunpack.c.0.s8 %v1107
        %v1109 = vlaneseq
        %v1110 = vshrl.u32 %v1109, 7
        %v1111 = vsub.s32 %v1108, %v1110
        %v1112 = vrot.slane %v1098, %v1111
        %v1113 = vcombine.high %v1089, 0.0
        %v1114 = vcombine.high %v1096, 0.0
        %v1115 = vcombine.high %v1105, 0.0
        %v1116 = vcombine.high %v1112, 0.0
        %v1117 = vcombine.low %v1089, %v1096
        %v1119 = vunpack.c.l.s4 1983009808
        %v1120 = vunpack.c.0.s8 %v1119
        %v1121 = vlaneseq
        %v1122 = vshrl.u32 %v1121, 7
        %v1123 = vsub.s32 %v1120, %v1122
        %v1124 = vrot.slane %v1117, %v1123
        %v1125 = vcombine.low %v1113, %v1114
        %v1127 = vunpack.c.l.s4 1983009808
        %v1128 = vunpack.c.0.s8 %v1127
        %v1129 = vlaneseq
        %v1130 = vshrl.u32 %v1129, 7
        %v1131 = vsub.s32 %v1128, %v1130
        %v1132 = vrot.slane %v1125, %v1131
        %v1133 = vcombine.low %v1105, %v1112
        %v1135 = vunpack.c.l.s4 1983009808
        %v1136 = vunpack.c.0.s8 %v1135
        %v1137 = vlaneseq
        %v1138 = vshrl.u32 %v1137, 7
        %v1139 = vsub.s32 %v1136, %v1138
        %v1140 = vrot.slane %v1133, %v1139
        %v1141 = vcombine.low %v1115, %v1116
        %v1143 = vunpack.c.l.s4 1983009808
        %v1144 = vunpack.c.0.s8 %v1143
        %v1145 = vlaneseq
        %v1146 = vshrl.u32 %v1145, 7
        %v1147 = vsub.s32 %v1144, %v1146
        %v1148 = vrot.slane %v1141, %v1147
        %v1149 = vcombine.low %v1124, %v1132
        %v1150 = vcombine.high %v1124, %v1132
        %v1152 = vunpack.c.l.s4 1934713408
        %v1153 = vunpack.c.0.s8 %v1152
        %v1154 = vlaneseq
        %v1155 = vshrl.u32 %v1154, 7
        %v1156 = vsub.s32 %v1153, %v1155
        %v1157 = vrot.slane %v1149, %v1156
        %v1159 = vunpack.c.l.s4 1934713408
        %v1160 = vunpack.c.0.s8 %v1159
        %v1161 = vlaneseq
        %v1162 = vshrl.u32 %v1161, 7
        %v1163 = vsub.s32 %v1160, %v1162
        %v1164 = vrot.slane %v1150, %v1163
        %v1165 = vcombine.low %v1140, %v1148
        %v1166 = vcombine.high %v1140, %v1148
        %v1168 = vunpack.c.l.s4 1934713408
        %v1169 = vunpack.c.0.s8 %v1168
        %v1170 = vlaneseq
        %v1171 = vshrl.u32 %v1170, 7
        %v1172 = vsub.s32 %v1169, %v1171
        %v1173 = vrot.slane %v1165, %v1172
        %v1175 = vunpack.c.l.s4 1934713408
        %v1176 = vunpack.c.0.s8 %v1175
        %v1177 = vlaneseq
        %v1178 = vshrl.u32 %v1177, 7
        %v1179 = vsub.s32 %v1176, %v1178
        %v1180 = vrot.slane %v1166, %v1179
        %v1181 = vcombine.low %v1157, %v1173
        %v1182 = vcombine.high %v1157, %v1173
        %v1183 = vcombine.low %v1164, %v1180
        %v1184 = vcombine.high %v1164, %v1180
        %v1185 = vpack.c.bf16 %v1181, %v1181
        %v1186 = vpack.c.bf16 %v1182, %v1182
        %v1187 = vpack.c.bf16 %v1183, %v1183
        %v1188 = vpack.c.bf16 %v1184, %v1184
        %1191 = vrot.lane.b32.xlu0 %v969, 120
        %v1192 = vpop.permute.xlu0 %1191
        %1193 = vrot.lane.b32.xlu0 %v972, 120
        %v1194 = vpop.permute.xlu0 %1193
        %1197 = vrot.lane.b32.xlu0 %v969, 112
        %v1198 = vpop.permute.xlu0 %1197
        %1199 = vrot.lane.b32.xlu0 %v972, 112
        %v1200 = vpop.permute.xlu0 %1199
        %1203 = vrot.lane.b32.xlu0 %v969, 104
        %v1204 = vpop.permute.xlu0 %1203
        %1205 = vrot.lane.b32.xlu0 %v972, 104
        %v1206 = vpop.permute.xlu0 %1205
        %v1209 = vcombine.low %v969, %v1198
        %v1210 = vcombine.high %v969, %v1198
        %v1212 = vunpack.c.l.s4 1983009808
        %v1213 = vunpack.c.0.s8 %v1212
        %v1214 = vlaneseq
        %v1215 = vshrl.u32 %v1214, 7
        %v1216 = vsub.s32 %v1213, %v1215
        %v1217 = vrot.slane %v1209, %v1216
        %v1219 = vunpack.c.l.s4 1983009808
        %v1220 = vunpack.c.0.s8 %v1219
        %v1221 = vlaneseq
        %v1222 = vshrl.u32 %v1221, 7
        %v1223 = vsub.s32 %v1220, %v1222
        %v1224 = vrot.slane %v1210, %v1223
        %v1225 = vcombine.low %v1192, %v1204
        %v1226 = vcombine.high %v1192, %v1204
        %v1228 = vunpack.c.l.s4 1983009808
        %v1229 = vunpack.c.0.s8 %v1228
        %v1230 = vlaneseq
        %v1231 = vshrl.u32 %v1230, 7
        %v1232 = vsub.s32 %v1229, %v1231
        %v1233 = vrot.slane %v1225, %v1232
        %v1235 = vunpack.c.l.s4 1983009808
        %v1236 = vunpack.c.0.s8 %v1235
        %v1237 = vlaneseq
        %v1238 = vshrl.u32 %v1237, 7
        %v1239 = vsub.s32 %v1236, %v1238
        %v1240 = vrot.slane %v1226, %v1239
        %v1241 = vcombine.low %v1217, %v1233
        %v1242 = vcombine.high %v1217, %v1233
        %v1244 = vunpack.c.l.s4 1934713408
        %v1245 = vunpack.c.0.s8 %v1244
        %v1246 = vlaneseq
        %v1247 = vshrl.u32 %v1246, 7
        %v1248 = vsub.s32 %v1245, %v1247
        %v1249 = vrot.slane %v1241, %v1248
        %v1251 = vunpack.c.l.s4 1934713408
        %v1252 = vunpack.c.0.s8 %v1251
        %v1253 = vlaneseq
        %v1254 = vshrl.u32 %v1253, 7
        %v1255 = vsub.s32 %v1252, %v1254
        %v1256 = vrot.slane %v1242, %v1255
        %v1257 = vcombine.low %v1224, %v1240
        %v1258 = vcombine.high %v1224, %v1240
        %v1260 = vunpack.c.l.s4 1934713408
        %v1261 = vunpack.c.0.s8 %v1260
        %v1262 = vlaneseq
        %v1263 = vshrl.u32 %v1262, 7
        %v1264 = vsub.s32 %v1261, %v1263
        %v1265 = vrot.slane %v1257, %v1264
        %v1267 = vunpack.c.l.s4 1934713408
        %v1268 = vunpack.c.0.s8 %v1267
        %v1269 = vlaneseq
        %v1270 = vshrl.u32 %v1269, 7
        %v1271 = vsub.s32 %v1268, %v1270
        %v1272 = vrot.slane %v1258, %v1271
        %v1273 = vcombine.high %v1249, 0.0
        %v1274 = vcombine.high %v1256, 0.0
        %v1275 = vcombine.high %v1265, 0.0
        %v1276 = vcombine.high %v1272, 0.0
        %v1277 = vcombine.low %v972, %v1200
        %v1278 = vcombine.high %v972, %v1200
        %v1280 = vunpack.c.l.s4 1983009808
        %v1281 = vunpack.c.0.s8 %v1280
        %v1282 = vlaneseq
        %v1283 = vshrl.u32 %v1282, 7
        %v1284 = vsub.s32 %v1281, %v1283
        %v1285 = vrot.slane %v1277, %v1284
        %v1287 = vunpack.c.l.s4 1983009808
        %v1288 = vunpack.c.0.s8 %v1287
        %v1289 = vlaneseq
        %v1290 = vshrl.u32 %v1289, 7
        %v1291 = vsub.s32 %v1288, %v1290
        %v1292 = vrot.slane %v1278, %v1291
        %v1293 = vcombine.low %v1194, %v1206
        %v1294 = vcombine.high %v1194, %v1206
        %v1296 = vunpack.c.l.s4 1983009808
        %v1297 = vunpack.c.0.s8 %v1296
        %v1298 = vlaneseq
        %v1299 = vshrl.u32 %v1298, 7
        %v1300 = vsub.s32 %v1297, %v1299
        %v1301 = vrot.slane %v1293, %v1300
        %v1303 = vunpack.c.l.s4 1983009808
        %v1304 = vunpack.c.0.s8 %v1303
        %v1305 = vlaneseq
        %v1306 = vshrl.u32 %v1305, 7
        %v1307 = vsub.s32 %v1304, %v1306
        %v1308 = vrot.slane %v1294, %v1307
        %v1309 = vcombine.low %v1285, %v1301
        %v1310 = vcombine.high %v1285, %v1301
        %v1312 = vunpack.c.l.s4 1934713408
        %v1313 = vunpack.c.0.s8 %v1312
        %v1314 = vlaneseq
        %v1315 = vshrl.u32 %v1314, 7
        %v1316 = vsub.s32 %v1313, %v1315
        %v1317 = vrot.slane %v1309, %v1316
        %v1319 = vunpack.c.l.s4 1934713408
        %v1320 = vunpack.c.0.s8 %v1319
        %v1321 = vlaneseq
        %v1322 = vshrl.u32 %v1321, 7
        %v1323 = vsub.s32 %v1320, %v1322
        %v1324 = vrot.slane %v1310, %v1323
        %v1325 = vcombine.low %v1292, %v1308
        %v1326 = vcombine.high %v1292, %v1308
        %v1328 = vunpack.c.l.s4 1934713408
        %v1329 = vunpack.c.0.s8 %v1328
        %v1330 = vlaneseq
        %v1331 = vshrl.u32 %v1330, 7
        %v1332 = vsub.s32 %v1329, %v1331
        %v1333 = vrot.slane %v1325, %v1332
        %v1335 = vunpack.c.l.s4 1934713408
        %v1336 = vunpack.c.0.s8 %v1335
        %v1337 = vlaneseq
        %v1338 = vshrl.u32 %v1337, 7
        %v1339 = vsub.s32 %v1336, %v1338
        %v1340 = vrot.slane %v1326, %v1339
        %v1341 = vcombine.high %v1317, 0.0
        %v1342 = vcombine.high %v1324, 0.0
        %v1343 = vcombine.high %v1333, 0.0
        %v1344 = vcombine.high %v1340, 0.0
        %v1345 = vcombine.low %v1249, %v1256
        %v1347 = vunpack.c.l.s4 1983009808
        %v1348 = vunpack.c.0.s8 %v1347
        %v1349 = vlaneseq
        %v1350 = vshrl.u32 %v1349, 7
        %v1351 = vsub.s32 %v1348, %v1350
        %v1352 = vrot.slane %v1345, %v1351
        %v1353 = vcombine.low %v1273, %v1274
        %v1355 = vunpack.c.l.s4 1983009808
        %v1356 = vunpack.c.0.s8 %v1355
        %v1357 = vlaneseq
        %v1358 = vshrl.u32 %v1357, 7
        %v1359 = vsub.s32 %v1356, %v1358
        %v1360 = vrot.slane %v1353, %v1359
        %v1361 = vcombine.low %v1265, %v1272
        %v1363 = vunpack.c.l.s4 1983009808
        %v1364 = vunpack.c.0.s8 %v1363
        %v1365 = vlaneseq
        %v1366 = vshrl.u32 %v1365, 7
        %v1367 = vsub.s32 %v1364, %v1366
        %v1368 = vrot.slane %v1361, %v1367
        %v1369 = vcombine.low %v1275, %v1276
        %v1371 = vunpack.c.l.s4 1983009808
        %v1372 = vunpack.c.0.s8 %v1371
        %v1373 = vlaneseq
        %v1374 = vshrl.u32 %v1373, 7
        %v1375 = vsub.s32 %v1372, %v1374
        %v1376 = vrot.slane %v1369, %v1375
        %v1377 = vcombine.low %v1352, %v1360
        %v1378 = vcombine.high %v1352, %v1360
        %v1380 = vunpack.c.l.s4 1934713408
        %v1381 = vunpack.c.0.s8 %v1380
        %v1382 = vlaneseq
        %v1383 = vshrl.u32 %v1382, 7
        %v1384 = vsub.s32 %v1381, %v1383
        %v1385 = vrot.slane %v1377, %v1384
        %v1387 = vunpack.c.l.s4 1934713408
        %v1388 = vunpack.c.0.s8 %v1387
        %v1389 = vlaneseq
        %v1390 = vshrl.u32 %v1389, 7
        %v1391 = vsub.s32 %v1388, %v1390
        %v1392 = vrot.slane %v1378, %v1391
        %v1393 = vcombine.low %v1368, %v1376
        %v1394 = vcombine.high %v1368, %v1376
        %v1396 = vunpack.c.l.s4 1934713408
        %v1397 = vunpack.c.0.s8 %v1396
        %v1398 = vlaneseq
        %v1399 = vshrl.u32 %v1398, 7
        %v1400 = vsub.s32 %v1397, %v1399
        %v1401 = vrot.slane %v1393, %v1400
        %v1403 = vunpack.c.l.s4 1934713408
        %v1404 = vunpack.c.0.s8 %v1403
        %v1405 = vlaneseq
        %v1406 = vshrl.u32 %v1405, 7
        %v1407 = vsub.s32 %v1404, %v1406
        %v1408 = vrot.slane %v1394, %v1407
        %v1409 = vcombine.low %v1385, %v1401
        %v1410 = vcombine.high %v1385, %v1401
        %v1411 = vcombine.low %v1392, %v1408
        %v1412 = vcombine.high %v1392, %v1408
        %v1413 = vcombine.low %v1317, %v1324
        %v1415 = vunpack.c.l.s4 1983009808
        %v1416 = vunpack.c.0.s8 %v1415
        %v1417 = vlaneseq
        %v1418 = vshrl.u32 %v1417, 7
        %v1419 = vsub.s32 %v1416, %v1418
        %v1420 = vrot.slane %v1413, %v1419
        %v1421 = vcombine.low %v1341, %v1342
        %v1423 = vunpack.c.l.s4 1983009808
        %v1424 = vunpack.c.0.s8 %v1423
        %v1425 = vlaneseq
        %v1426 = vshrl.u32 %v1425, 7
        %v1427 = vsub.s32 %v1424, %v1426
        %v1428 = vrot.slane %v1421, %v1427
        %v1429 = vcombine.low %v1333, %v1340
        %v1431 = vunpack.c.l.s4 1983009808
        %v1432 = vunpack.c.0.s8 %v1431
        %v1433 = vlaneseq
        %v1434 = vshrl.u32 %v1433, 7
        %v1435 = vsub.s32 %v1432, %v1434
        %v1436 = vrot.slane %v1429, %v1435
        %v1437 = vcombine.low %v1343, %v1344
        %v1439 = vunpack.c.l.s4 1983009808
        %v1440 = vunpack.c.0.s8 %v1439
        %v1441 = vlaneseq
        %v1442 = vshrl.u32 %v1441, 7
        %v1443 = vsub.s32 %v1440, %v1442
        %v1444 = vrot.slane %v1437, %v1443
        %v1445 = vcombine.low %v1420, %v1428
        %v1446 = vcombine.high %v1420, %v1428
        %v1448 = vunpack.c.l.s4 1934713408
        %v1449 = vunpack.c.0.s8 %v1448
        %v1450 = vlaneseq
        %v1451 = vshrl.u32 %v1450, 7
        %v1452 = vsub.s32 %v1449, %v1451
        %v1453 = vrot.slane %v1445, %v1452
        %v1455 = vunpack.c.l.s4 1934713408
        %v1456 = vunpack.c.0.s8 %v1455
        %v1457 = vlaneseq
        %v1458 = vshrl.u32 %v1457, 7
        %v1459 = vsub.s32 %v1456, %v1458
        %v1460 = vrot.slane %v1446, %v1459
        %v1461 = vcombine.low %v1436, %v1444
        %v1462 = vcombine.high %v1436, %v1444
        %v1464 = vunpack.c.l.s4 1934713408
        %v1465 = vunpack.c.0.s8 %v1464
        %v1466 = vlaneseq
        %v1467 = vshrl.u32 %v1466, 7
        %v1468 = vsub.s32 %v1465, %v1467
        %v1469 = vrot.slane %v1461, %v1468
        %v1471 = vunpack.c.l.s4 1934713408
        %v1472 = vunpack.c.0.s8 %v1471
        %v1473 = vlaneseq
        %v1474 = vshrl.u32 %v1473, 7
        %v1475 = vsub.s32 %v1472, %v1474
        %v1476 = vrot.slane %v1462, %v1475
        %v1477 = vcombine.low %v1453, %v1469
        %v1478 = vcombine.high %v1453, %v1469
        %v1479 = vcombine.low %v1460, %v1476
        %v1480 = vcombine.high %v1460, %v1476
        %v1481 = vpack.c.bf16 %v1477, %v1409
        %v1482 = vpack.c.bf16 %v1478, %v1410
        %v1483 = vpack.c.bf16 %v1479, %v1411
        %v1484 = vpack.c.bf16 %v1480, %v1412
        %1487 = vrot.lane.b32.xlu0 %v1033, 120
        %v1488 = vpop.permute.xlu0 %1487
        %1489 = vrot.lane.b32.xlu0 %v1036, 120
        %v1490 = vpop.permute.xlu0 %1489
        %1493 = vrot.lane.b32.xlu0 %v1033, 112
        %v1494 = vpop.permute.xlu0 %1493
        %1495 = vrot.lane.b32.xlu0 %v1036, 112
        %v1496 = vpop.permute.xlu0 %1495
        %1499 = vrot.lane.b32.xlu0 %v1033, 104
        %v1500 = vpop.permute.xlu0 %1499
        %1501 = vrot.lane.b32.xlu0 %v1036, 104
        %v1502 = vpop.permute.xlu0 %1501
        %v1505 = vcombine.low %v1033, %v1494
        %v1506 = vcombine.high %v1033, %v1494
        %v1508 = vunpack.c.l.s4 1983009808
        %v1509 = vunpack.c.0.s8 %v1508
        %v1510 = vlaneseq
        %v1511 = vshrl.u32 %v1510, 7
        %v1512 = vsub.s32 %v1509, %v1511
        %v1513 = vrot.slane %v1505, %v1512
        %v1515 = vunpack.c.l.s4 1983009808
        %v1516 = vunpack.c.0.s8 %v1515
        %v1517 = vlaneseq
        %v1518 = vshrl.u32 %v1517, 7
        %v1519 = vsub.s32 %v1516, %v1518
        %v1520 = vrot.slane %v1506, %v1519
        %v1521 = vcombine.low %v1488, %v1500
        %v1522 = vcombine.high %v1488, %v1500
        %v1524 = vunpack.c.l.s4 1983009808
        %v1525 = vunpack.c.0.s8 %v1524
        %v1526 = vlaneseq
        %v1527 = vshrl.u32 %v1526, 7
        %v1528 = vsub.s32 %v1525, %v1527
        %v1529 = vrot.slane %v1521, %v1528
        %v1531 = vunpack.c.l.s4 1983009808
        %v1532 = vunpack.c.0.s8 %v1531
        %v1533 = vlaneseq
        %v1534 = vshrl.u32 %v1533, 7
        %v1535 = vsub.s32 %v1532, %v1534
        %v1536 = vrot.slane %v1522, %v1535
        %v1537 = vcombine.low %v1513, %v1529
        %v1538 = vcombine.high %v1513, %v1529
        %v1540 = vunpack.c.l.s4 1934713408
        %v1541 = vunpack.c.0.s8 %v1540
        %v1542 = vlaneseq
        %v1543 = vshrl.u32 %v1542, 7
        %v1544 = vsub.s32 %v1541, %v1543
        %v1545 = vrot.slane %v1537, %v1544
        %v1547 = vunpack.c.l.s4 1934713408
        %v1548 = vunpack.c.0.s8 %v1547
        %v1549 = vlaneseq
        %v1550 = vshrl.u32 %v1549, 7
        %v1551 = vsub.s32 %v1548, %v1550
        %v1552 = vrot.slane %v1538, %v1551
        %v1553 = vcombine.low %v1520, %v1536
        %v1554 = vcombine.high %v1520, %v1536
        %v1556 = vunpack.c.l.s4 1934713408
        %v1557 = vunpack.c.0.s8 %v1556
        %v1558 = vlaneseq
        %v1559 = vshrl.u32 %v1558, 7
        %v1560 = vsub.s32 %v1557, %v1559
        %v1561 = vrot.slane %v1553, %v1560
        %v1563 = vunpack.c.l.s4 1934713408
        %v1564 = vunpack.c.0.s8 %v1563
        %v1565 = vlaneseq
        %v1566 = vshrl.u32 %v1565, 7
        %v1567 = vsub.s32 %v1564, %v1566
        %v1568 = vrot.slane %v1554, %v1567
        %v1569 = vcombine.high %v1545, 0.0
        %v1570 = vcombine.high %v1552, 0.0
        %v1571 = vcombine.high %v1561, 0.0
        %v1572 = vcombine.high %v1568, 0.0
        %v1573 = vcombine.low %v1036, %v1496
        %v1574 = vcombine.high %v1036, %v1496
        %v1576 = vunpack.c.l.s4 1983009808
        %v1577 = vunpack.c.0.s8 %v1576
        %v1578 = vlaneseq
        %v1579 = vshrl.u32 %v1578, 7
        %v1580 = vsub.s32 %v1577, %v1579
        %v1581 = vrot.slane %v1573, %v1580
        %v1583 = vunpack.c.l.s4 1983009808
        %v1584 = vunpack.c.0.s8 %v1583
        %v1585 = vlaneseq
        %v1586 = vshrl.u32 %v1585, 7
        %v1587 = vsub.s32 %v1584, %v1586
        %v1588 = vrot.slane %v1574, %v1587
        %v1589 = vcombine.low %v1490, %v1502
        %v1590 = vcombine.high %v1490, %v1502
        %v1592 = vunpack.c.l.s4 1983009808
        %v1593 = vunpack.c.0.s8 %v1592
        %v1594 = vlaneseq
        %v1595 = vshrl.u32 %v1594, 7
        %v1596 = vsub.s32 %v1593, %v1595
        %v1597 = vrot.slane %v1589, %v1596
        %v1599 = vunpack.c.l.s4 1983009808
        %v1600 = vunpack.c.0.s8 %v1599
        %v1601 = vlaneseq
        %v1602 = vshrl.u32 %v1601, 7
        %v1603 = vsub.s32 %v1600, %v1602
        %v1604 = vrot.slane %v1590, %v1603
        %v1605 = vcombine.low %v1581, %v1597
        %v1606 = vcombine.high %v1581, %v1597
        %v1608 = vunpack.c.l.s4 1934713408
        %v1609 = vunpack.c.0.s8 %v1608
        %v1610 = vlaneseq
        %v1611 = vshrl.u32 %v1610, 7
        %v1612 = vsub.s32 %v1609, %v1611
        %v1613 = vrot.slane %v1605, %v1612
        %v1615 = vunpack.c.l.s4 1934713408
        %v1616 = vunpack.c.0.s8 %v1615
        %v1617 = vlaneseq
        %v1618 = vshrl.u32 %v1617, 7
        %v1619 = vsub.s32 %v1616, %v1618
        %v1620 = vrot.slane %v1606, %v1619
        %v1621 = vcombine.low %v1588, %v1604
        %v1622 = vcombine.high %v1588, %v1604
        %v1624 = vunpack.c.l.s4 1934713408
        %v1625 = vunpack.c.0.s8 %v1624
        %v1626 = vlaneseq
        %v1627 = vshrl.u32 %v1626, 7
        %v1628 = vsub.s32 %v1625, %v1627
        %v1629 = vrot.slane %v1621, %v1628
        %v1631 = vunpack.c.l.s4 1934713408
        %v1632 = vunpack.c.0.s8 %v1631
        %v1633 = vlaneseq
        %v1634 = vshrl.u32 %v1633, 7
        %v1635 = vsub.s32 %v1632, %v1634
        %v1636 = vrot.slane %v1622, %v1635
        %v1637 = vcombine.high %v1613, 0.0
        %v1638 = vcombine.high %v1620, 0.0
        %v1639 = vcombine.high %v1629, 0.0
        %v1640 = vcombine.high %v1636, 0.0
        %v1641 = vcombine.low %v1545, %v1552
        %v1643 = vunpack.c.l.s4 1983009808
        %v1644 = vunpack.c.0.s8 %v1643
        %v1645 = vlaneseq
        %v1646 = vshrl.u32 %v1645, 7
        %v1647 = vsub.s32 %v1644, %v1646
        %v1648 = vrot.slane %v1641, %v1647
        %v1649 = vcombine.low %v1569, %v1570
        %v1651 = vunpack.c.l.s4 1983009808
        %v1652 = vunpack.c.0.s8 %v1651
        %v1653 = vlaneseq
        %v1654 = vshrl.u32 %v1653, 7
        %v1655 = vsub.s32 %v1652, %v1654
        %v1656 = vrot.slane %v1649, %v1655
        %v1657 = vcombine.low %v1561, %v1568
        %v1659 = vunpack.c.l.s4 1983009808
        %v1660 = vunpack.c.0.s8 %v1659
        %v1661 = vlaneseq
        %v1662 = vshrl.u32 %v1661, 7
        %v1663 = vsub.s32 %v1660, %v1662
        %v1664 = vrot.slane %v1657, %v1663
        %v1665 = vcombine.low %v1571, %v1572
        %v1667 = vunpack.c.l.s4 1983009808
        %v1668 = vunpack.c.0.s8 %v1667
        %v1669 = vlaneseq
        %v1670 = vshrl.u32 %v1669, 7
        %v1671 = vsub.s32 %v1668, %v1670
        %v1672 = vrot.slane %v1665, %v1671
        %v1673 = vcombine.low %v1648, %v1656
        %v1674 = vcombine.high %v1648, %v1656
        %v1676 = vunpack.c.l.s4 1934713408
        %v1677 = vunpack.c.0.s8 %v1676
        %v1678 = vlaneseq
        %v1679 = vshrl.u32 %v1678, 7
        %v1680 = vsub.s32 %v1677, %v1679
        %v1681 = vrot.slane %v1673, %v1680
        %v1683 = vunpack.c.l.s4 1934713408
        %v1684 = vunpack.c.0.s8 %v1683
        %v1685 = vlaneseq
        %v1686 = vshrl.u32 %v1685, 7
        %v1687 = vsub.s32 %v1684, %v1686
        %v1688 = vrot.slane %v1674, %v1687
        %v1689 = vcombine.low %v1664, %v1672
        %v1690 = vcombine.high %v1664, %v1672
        %v1692 = vunpack.c.l.s4 1934713408
        %v1693 = vunpack.c.0.s8 %v1692
        %v1694 = vlaneseq
        %v1695 = vshrl.u32 %v1694, 7
        %v1696 = vsub.s32 %v1693, %v1695
        %v1697 = vrot.slane %v1689, %v1696
        %v1699 = vunpack.c.l.s4 1934713408
        %v1700 = vunpack.c.0.s8 %v1699
        %v1701 = vlaneseq
        %v1702 = vshrl.u32 %v1701, 7
        %v1703 = vsub.s32 %v1700, %v1702
        %v1704 = vrot.slane %v1690, %v1703
        %v1705 = vcombine.low %v1681, %v1697
        %v1706 = vcombine.high %v1681, %v1697
        %v1707 = vcombine.low %v1688, %v1704
        %v1708 = vcombine.high %v1688, %v1704
        %v1709 = vcombine.low %v1613, %v1620
        %v1711 = vunpack.c.l.s4 1983009808
        %v1712 = vunpack.c.0.s8 %v1711
        %v1713 = vlaneseq
        %v1714 = vshrl.u32 %v1713, 7
        %v1715 = vsub.s32 %v1712, %v1714
        %v1716 = vrot.slane %v1709, %v1715
        %v1717 = vcombine.low %v1637, %v1638
        %v1719 = vunpack.c.l.s4 1983009808
        %v1720 = vunpack.c.0.s8 %v1719
        %v1721 = vlaneseq
        %v1722 = vshrl.u32 %v1721, 7
        %v1723 = vsub.s32 %v1720, %v1722
        %v1724 = vrot.slane %v1717, %v1723
        %v1725 = vcombine.low %v1629, %v1636
        %v1727 = vunpack.c.l.s4 1983009808
        %v1728 = vunpack.c.0.s8 %v1727
        %v1729 = vlaneseq
        %v1730 = vshrl.u32 %v1729, 7
        %v1731 = vsub.s32 %v1728, %v1730
        %v1732 = vrot.slane %v1725, %v1731
        %v1733 = vcombine.low %v1639, %v1640
        %v1735 = vunpack.c.l.s4 1983009808
        %v1736 = vunpack.c.0.s8 %v1735
        %v1737 = vlaneseq
        %v1738 = vshrl.u32 %v1737, 7
        %v1739 = vsub.s32 %v1736, %v1738
        %v1740 = vrot.slane %v1733, %v1739
        %v1741 = vcombine.low %v1716, %v1724
        %v1742 = vcombine.high %v1716, %v1724
        %v1744 = vunpack.c.l.s4 1934713408
        %v1745 = vunpack.c.0.s8 %v1744
        %v1746 = vlaneseq
        %v1747 = vshrl.u32 %v1746, 7
        %v1748 = vsub.s32 %v1745, %v1747
        %v1749 = vrot.slane %v1741, %v1748
        %v1751 = vunpack.c.l.s4 1934713408
        %v1752 = vunpack.c.0.s8 %v1751
        %v1753 = vlaneseq
        %v1754 = vshrl.u32 %v1753, 7
        %v1755 = vsub.s32 %v1752, %v1754
        %v1756 = vrot.slane %v1742, %v1755
        %v1757 = vcombine.low %v1732, %v1740
        %v1758 = vcombine.high %v1732, %v1740
        %v1760 = vunpack.c.l.s4 1934713408
        %v1761 = vunpack.c.0.s8 %v1760
        %v1762 = vlaneseq
        %v1763 = vshrl.u32 %v1762, 7
        %v1764 = vsub.s32 %v1761, %v1763
        %v1765 = vrot.slane %v1757, %v1764
        %v1767 = vunpack.c.l.s4 1934713408
        %v1768 = vunpack.c.0.s8 %v1767
        %v1769 = vlaneseq
        %v1770 = vshrl.u32 %v1769, 7
        %v1771 = vsub.s32 %v1768, %v1770
        %v1772 = vrot.slane %v1758, %v1771
        %v1773 = vcombine.low %v1749, %v1765
        %v1774 = vcombine.high %v1749, %v1765
        %v1775 = vcombine.low %v1756, %v1772
        %v1776 = vcombine.high %v1756, %v1772
        %v1777 = vpack.c.bf16 %v1773, %v1705
        %v1778 = vpack.c.bf16 %v1774, %v1706
        %v1779 = vpack.c.bf16 %v1775, %v1707
        %v1780 = vpack.c.bf16 %v1776, %v1708
        %v1782 = vlaneseq
        %v1783 = vshrl.u32 %v1782, 7
        %v1784 = vsub.s32 0, %v1783
        %v1785 = vrot.slane %v837, %v1784
        %vm1787 = vcmask 64512
        %v1789 = vsel %vm1787, %v1185, 0
        %v1792 = vsel %vm1787, %v1481, 0
        %1794 = vmatprep.subr.bf16.mxu0 0
        %1795 = vmatpush1.bf16.xpose.msra.mxu0 %v1792
        %1796 = vmatprep.subr.bf16.mxu0 0
        %1797 = vmatpush1.bf16.xpose.msra.mxu0 0
        %1798 = vmatprep.subr.bf16.mxu0 0
        %1799 = vmatpush1.bf16.xpose.msra.mxu0 0
        %1800 = vmatprep.subr.bf16.mxu0 0
        %1801 = vmatpush1.bf16.xpose.msra.mxu0 0
        %1802 = vmatprep.subr.bf16.mxu0 0
        %1803 = vmatpush1.bf16.xpose.msra.mxu0 0
        %1804 = vmatprep.subr.bf16.mxu0 0
        %1805 = vmatpush1.bf16.xpose.msra.mxu0 0
        %1806 = vmatprep.subr.bf16.mxu0 0
        %1807 = vmatpush1.bf16.xpose.msra.mxu0 0
        %1808 = vmatprep.subr.bf16.mxu0 0
        %1809 = vmatpush1.bf16.xpose.msra.mxu0 0
        %1810 = vmatprep.subr.bf16.mxu0 0
        %1811 = vmatpush1.bf16.xpose.msra.mxu0 0
        %1812 = vmatprep.subr.bf16.mxu0 0
        %1813 = vmatpush1.bf16.xpose.msra.mxu0 0
        %1814 = vmatprep.subr.bf16.mxu0 0
        %1815 = vmatpush1.bf16.xpose.msra.mxu0 0
        %1816 = vmatprep.subr.bf16.mxu0 0
        %1817 = vmatpush1.bf16.xpose.msra.mxu0 0
        %1818 = vmatprep.subr.bf16.mxu0 0
        %1819 = vmatpush1.bf16.xpose.msra.mxu0 0
        %1820 = vmatprep.subr.bf16.mxu0 0
        %1821 = vmatpush1.bf16.xpose.msra.mxu0 0
        %1822 = vmatprep.subr.bf16.mxu0 0
        %1823 = vmatpush1.bf16.xpose.msra.mxu0 0
        %1824 = vmatprep.subr.bf16.mxu0 0
        %1825 = vmatpush1.bf16.xpose.msra.mxu0 0
        %1826 = vmatprep.mubr.bf16.mxu0 0
        %1827 = vmatmul.mubr.bf16.gmra.mrb[0].mxu0 %v1789
        %v1828 = vpop.f32.mrb[0].mxu0
        %v1829 = vadd.f32 %v1785, %v1828
        %v1830 = vpop.f32.mrb[0].mxu0
        %v1831 = vpop.f32.mrb[0].mxu0
        %v1832 = vpop.f32.mrb[0].mxu0
        %1833 = vdwg.mxu0
        %v1835 = vsel %vm1787, %v1186, 0
        %v1838 = vsel %vm1787, %v1482, 0
        %1840 = vmatprep.subr.bf16.mxu0 0
        %1841 = vmatpush1.bf16.xpose.msra.mxu0 %v1838
        %1842 = vmatprep.subr.bf16.mxu0 0
        %1843 = vmatpush1.bf16.xpose.msra.mxu0 0
        %1844 = vmatprep.subr.bf16.mxu0 0
        %1845 = vmatpush1.bf16.xpose.msra.mxu0 0
        %1846 = vmatprep.subr.bf16.mxu0 0
        %1847 = vmatpush1.bf16.xpose.msra.mxu0 0
        %1848 = vmatprep.subr.bf16.mxu0 0
        %1849 = vmatpush1.bf16.xpose.msra.mxu0 0
        %1850 = vmatprep.subr.bf16.mxu0 0
        %1851 = vmatpush1.bf16.xpose.msra.mxu0 0
        %1852 = vmatprep.subr.bf16.mxu0 0
        %1853 = vmatpush1.bf16.xpose.msra.mxu0 0
        %1854 = vmatprep.subr.bf16.mxu0 0
        %1855 = vmatpush1.bf16.xpose.msra.mxu0 0
        %1856 = vmatprep.subr.bf16.mxu0 0
        %1857 = vmatpush1.bf16.xpose.msra.mxu0 0
        %1858 = vmatprep.subr.bf16.mxu0 0
        %1859 = vmatpush1.bf16.xpose.msra.mxu0 0
        %1860 = vmatprep.subr.bf16.mxu0 0
        %1861 = vmatpush1.bf16.xpose.msra.mxu0 0
        %1862 = vmatprep.subr.bf16.mxu0 0
        %1863 = vmatpush1.bf16.xpose.msra.mxu0 0
        %1864 = vmatprep.subr.bf16.mxu0 0
        %1865 = vmatpush1.bf16.xpose.msra.mxu0 0
        %1866 = vmatprep.subr.bf16.mxu0 0
        %1867 = vmatpush1.bf16.xpose.msra.mxu0 0
        %1868 = vmatprep.subr.bf16.mxu0 0
        %1869 = vmatpush1.bf16.xpose.msra.mxu0 0
        %1870 = vmatprep.subr.bf16.mxu0 0
        %1871 = vmatpush1.bf16.xpose.msra.mxu0 0
        %1872 = vmatprep.mubr.bf16.mxu0 0
        %1873 = vmatmul.mubr.bf16.gmra.mrb[0].mxu0 %v1835
        %v1874 = vpop.f32.mrb[0].mxu0
        %v1875 = vadd.f32 %v1785, %v1874
        %v1876 = vpop.f32.mrb[0].mxu0
        %v1877 = vpop.f32.mrb[0].mxu0
        %v1878 = vpop.f32.mrb[0].mxu0
        %1879 = vdwg.mxu0
        %v1881 = vsel %vm1787, %v1187, 0
        %v1884 = vsel %vm1787, %v1483, 0
        %1886 = vmatprep.subr.bf16.mxu0 0
        %1887 = vmatpush1.bf16.xpose.msra.mxu0 %v1884
        %1888 = vmatprep.subr.bf16.mxu0 0
        %1889 = vmatpush1.bf16.xpose.msra.mxu0 0
        %1890 = vmatprep.subr.bf16.mxu0 0
        %1891 = vmatpush1.bf16.xpose.msra.mxu0 0
        %1892 = vmatprep.subr.bf16.mxu0 0
        %1893 = vmatpush1.bf16.xpose.msra.mxu0 0
        %1894 = vmatprep.subr.bf16.mxu0 0
        %1895 = vmatpush1.bf16.xpose.msra.mxu0 0
        %1896 = vmatprep.subr.bf16.mxu0 0
        %1897 = vmatpush1.bf16.xpose.msra.mxu0 0
        %1898 = vmatprep.subr.bf16.mxu0 0
        %1899 = vmatpush1.bf16.xpose.msra.mxu0 0
        %1900 = vmatprep.subr.bf16.mxu0 0
        %1901 = vmatpush1.bf16.xpose.msra.mxu0 0
        %1902 = vmatprep.subr.bf16.mxu0 0
        %1903 = vmatpush1.bf16.xpose.msra.mxu0 0
        %1904 = vmatprep.subr.bf16.mxu0 0
        %1905 = vmatpush1.bf16.xpose.msra.mxu0 0
        %1906 = vmatprep.subr.bf16.mxu0 0
        %1907 = vmatpush1.bf16.xpose.msra.mxu0 0
        %1908 = vmatprep.subr.bf16.mxu0 0
        %1909 = vmatpush1.bf16.xpose.msra.mxu0 0
        %1910 = vmatprep.subr.bf16.mxu0 0
        %1911 = vmatpush1.bf16.xpose.msra.mxu0 0
        %1912 = vmatprep.subr.bf16.mxu0 0
        %1913 = vmatpush1.bf16.xpose.msra.mxu0 0
        %1914 = vmatprep.subr.bf16.mxu0 0
        %1915 = vmatpush1.bf16.xpose.msra.mxu0 0
        %1916 = vmatprep.subr.bf16.mxu0 0
        %1917 = vmatpush1.bf16.xpose.msra.mxu0 0
        %1918 = vmatprep.mubr.bf16.mxu0 0
        %1919 = vmatmul.mubr.bf16.gmra.mrb[0].mxu0 %v1881
        %v1920 = vpop.f32.mrb[0].mxu0
        %v1921 = vadd.f32 %v1785, %v1920
        %v1922 = vpop.f32.mrb[0].mxu0
        %v1923 = vpop.f32.mrb[0].mxu0
        %v1924 = vpop.f32.mrb[0].mxu0
        %1925 = vdwg.mxu0
        %v1927 = vsel %vm1787, %v1188, 0
        %v1930 = vsel %vm1787, %v1484, 0
        %1932 = vmatprep.subr.bf16.mxu0 0
        %1933 = vmatpush1.bf16.xpose.msra.mxu0 %v1930
        %1934 = vmatprep.subr.bf16.mxu0 0
        %1935 = vmatpush1.bf16.xpose.msra.mxu0 0
        %1936 = vmatprep.subr.bf16.mxu0 0
        %1937 = vmatpush1.bf16.xpose.msra.mxu0 0
        %1938 = vmatprep.subr.bf16.mxu0 0
        %1939 = vmatpush1.bf16.xpose.msra.mxu0 0
        %1940 = vmatprep.subr.bf16.mxu0 0
        %1941 = vmatpush1.bf16.xpose.msra.mxu0 0
        %1942 = vmatprep.subr.bf16.mxu0 0
        %1943 = vmatpush1.bf16.xpose.msra.mxu0 0
        %1944 = vmatprep.subr.bf16.mxu0 0
        %1945 = vmatpush1.bf16.xpose.msra.mxu0 0
        %1946 = vmatprep.subr.bf16.mxu0 0
        %1947 = vmatpush1.bf16.xpose.msra.mxu0 0
        %1948 = vmatprep.subr.bf16.mxu0 0
        %1949 = vmatpush1.bf16.xpose.msra.mxu0 0
        %1950 = vmatprep.subr.bf16.mxu0 0
        %1951 = vmatpush1.bf16.xpose.msra.mxu0 0
        %1952 = vmatprep.subr.bf16.mxu0 0
        %1953 = vmatpush1.bf16.xpose.msra.mxu0 0
        %1954 = vmatprep.subr.bf16.mxu0 0
        %1955 = vmatpush1.bf16.xpose.msra.mxu0 0
        %1956 = vmatprep.subr.bf16.mxu0 0
        %1957 = vmatpush1.bf16.xpose.msra.mxu0 0
        %1958 = vmatprep.subr.bf16.mxu0 0
        %1959 = vmatpush1.bf16.xpose.msra.mxu0 0
        %1960 = vmatprep.subr.bf16.mxu0 0
        %1961 = vmatpush1.bf16.xpose.msra.mxu0 0
        %1962 = vmatprep.subr.bf16.mxu0 0
        %1963 = vmatpush1.bf16.xpose.msra.mxu0 0
        %1964 = vmatprep.mubr.bf16.mxu0 0
        %1965 = vmatmul.mubr.bf16.gmra.mrb[0].mxu0 %v1927
        %v1966 = vpop.f32.mrb[0].mxu0
        %v1967 = vadd.f32 %v1785, %v1966
        %v1968 = vpop.f32.mrb[0].mxu0
        %v1969 = vpop.f32.mrb[0].mxu0
        %v1970 = vpop.f32.mrb[0].mxu0
        %1971 = vdwg.mxu0
        %vm1972 = vcmask 130048
        %v1973 = vsel %vm1972, %v1829, -inf
        %1974 = vmax.xlane.f32.xlu0 %v1973
        %v1975 = vpop.xlane.xlu0 %1974
        %v1976 = vsel %vm1972, %v1875, -inf
        %1977 = vmax.xlane.f32.xlu0 %v1976
        %v1978 = vpop.xlane.xlu0 %1977
        %v1979 = vsel %vm1972, %v1921, -inf
        %1980 = vmax.xlane.f32.xlu0 %v1979
        %v1981 = vpop.xlane.xlu0 %1980
        %v1982 = vsel %vm1972, %v1967, -inf
        %1983 = vmax.xlane.f32.xlu0 %v1982
        %v1984 = vpop.xlane.xlu0 %1983
        %v1985 = vsub.f32 %v1829, %v1975
        %v1986 = vsub.f32 %v1875, %v1978
        %v1987 = vsub.f32 %v1921, %v1981
        %v1988 = vsub.f32 %v1967, %v1984
        %v1989 = vmul.f32 %v1985, 1.442695
        %v1990 = vpow.pop %v1989
        %v1991 = vmul.f32 %v1986, 1.442695
        %v1992 = vpow.pop %v1991
        %v1993 = vmul.f32 %v1987, 1.442695
        %v1994 = vpow.pop %v1993
        %v1995 = vmul.f32 %v1988, 1.442695
        %v1996 = vpow.pop %v1995
        %v1997 = vsel %vm1972, %v1990, 0.0
        %1998 = vadd.xlane.f32.xlu0 %v1997
        %v1999 = vpop.xlane.xlu0 %1998
        %v2000 = vsel %vm1972, %v1992, 0.0
        %2001 = vadd.xlane.f32.xlu0 %v2000
        %v2002 = vpop.xlane.xlu0 %2001
        %v2003 = vsel %vm1972, %v1994, 0.0
        %2004 = vadd.xlane.f32.xlu0 %v2003
        %v2005 = vpop.xlane.xlu0 %2004
        %v2006 = vsel %vm1972, %v1996, 0.0
        %2007 = vadd.xlane.f32.xlu0 %v2006
        %v2008 = vpop.xlane.xlu0 %2007
        %v2009 = vrcp.pop %v1999
        %v2010 = vrcp.pop %v2002
        %v2011 = vrcp.pop %v2005
        %v2012 = vrcp.pop %v2008
        %v2013 = vpack.c.bf16 %v1990, %v1990
        %v2014 = vpack.c.bf16 %v1992, %v1992
        %v2015 = vpack.c.bf16 %v1994, %v1994
        %v2016 = vpack.c.bf16 %v1996, %v1996
        %v2018 = vsel %vm1972, %v2013, 0
        %2020 = vmatprep.subr.bf16.mxu0 0
        %2021 = vmatpush1.bf16.msra.mxu0 %v1777
        %2022 = vmatprep.subr.bf16.mxu0 0
        %2023 = vmatpush1.bf16.msra.mxu0 0
        %2024 = vmatprep.subr.bf16.mxu0 0
        %2025 = vmatpush1.bf16.msra.mxu0 0
        %2026 = vmatprep.subr.bf16.mxu0 0
        %2027 = vmatpush1.bf16.msra.mxu0 0
        %2028 = vmatprep.subr.bf16.mxu0 0
        %2029 = vmatpush1.bf16.msra.mxu0 0
        %2030 = vmatprep.subr.bf16.mxu0 0
        %2031 = vmatpush1.bf16.msra.mxu0 0
        %2032 = vmatprep.subr.bf16.mxu0 0
        %2033 = vmatpush1.bf16.msra.mxu0 0
        %2034 = vmatprep.subr.bf16.mxu0 0
        %2035 = vmatpush1.bf16.msra.mxu0 0
        %2036 = vmatprep.subr.bf16.mxu0 0
        %2037 = vmatpush1.bf16.msra.mxu0 0
        %2038 = vmatprep.subr.bf16.mxu0 0
        %2039 = vmatpush1.bf16.msra.mxu0 0
        %2040 = vmatprep.subr.bf16.mxu0 0
        %2041 = vmatpush1.bf16.msra.mxu0 0
        %2042 = vmatprep.subr.bf16.mxu0 0
        %2043 = vmatpush1.bf16.msra.mxu0 0
        %2044 = vmatprep.subr.bf16.mxu0 0
        %2045 = vmatpush1.bf16.msra.mxu0 0
        %2046 = vmatprep.subr.bf16.mxu0 0
        %2047 = vmatpush1.bf16.msra.mxu0 0
        %2048 = vmatprep.subr.bf16.mxu0 0
        %2049 = vmatpush1.bf16.msra.mxu0 0
        %2050 = vmatprep.subr.bf16.mxu0 0
        %2051 = vmatpush1.bf16.msra.mxu0 0
        %2052 = vmatprep.mubr.bf16.mxu0 0
        %2053 = vmatmul.mubr.bf16.gmra.mrb[0].mxu0 %v2018
        %v2054 = vpop.f32.mrb[0].mxu0
        %v2055 = vadd.f32 0.0, %v2054
        %v2056 = vpop.f32.mrb[0].mxu0
        %v2057 = vpop.f32.mrb[0].mxu0
        %v2058 = vpop.f32.mrb[0].mxu0
        %2059 = vdwg.mxu0
        %v2061 = vsel %vm1972, %v2014, 0
        %2063 = vmatprep.subr.bf16.mxu0 0
        %2064 = vmatpush1.bf16.msra.mxu0 %v1778
        %2065 = vmatprep.subr.bf16.mxu0 0
        %2066 = vmatpush1.bf16.msra.mxu0 0
        %2067 = vmatprep.subr.bf16.mxu0 0
        %2068 = vmatpush1.bf16.msra.mxu0 0
        %2069 = vmatprep.subr.bf16.mxu0 0
        %2070 = vmatpush1.bf16.msra.mxu0 0
        %2071 = vmatprep.subr.bf16.mxu0 0
        %2072 = vmatpush1.bf16.msra.mxu0 0
        %2073 = vmatprep.subr.bf16.mxu0 0
        %2074 = vmatpush1.bf16.msra.mxu0 0
        %2075 = vmatprep.subr.bf16.mxu0 0
        %2076 = vmatpush1.bf16.msra.mxu0 0
        %2077 = vmatprep.subr.bf16.mxu0 0
        %2078 = vmatpush1.bf16.msra.mxu0 0
        %2079 = vmatprep.subr.bf16.mxu0 0
        %2080 = vmatpush1.bf16.msra.mxu0 0
        %2081 = vmatprep.subr.bf16.mxu0 0
        %2082 = vmatpush1.bf16.msra.mxu0 0
        %2083 = vmatprep.subr.bf16.mxu0 0
        %2084 = vmatpush1.bf16.msra.mxu0 0
        %2085 = vmatprep.subr.bf16.mxu0 0
        %2086 = vmatpush1.bf16.msra.mxu0 0
        %2087 = vmatprep.subr.bf16.mxu0 0
        %2088 = vmatpush1.bf16.msra.mxu0 0
        %2089 = vmatprep.subr.bf16.mxu0 0
        %2090 = vmatpush1.bf16.msra.mxu0 0
        %2091 = vmatprep.subr.bf16.mxu0 0
        %2092 = vmatpush1.bf16.msra.mxu0 0
        %2093 = vmatprep.subr.bf16.mxu0 0
        %2094 = vmatpush1.bf16.msra.mxu0 0
        %2095 = vmatprep.mubr.bf16.mxu0 0
        %2096 = vmatmul.mubr.bf16.gmra.mrb[0].mxu0 %v2061
        %v2097 = vpop.f32.mrb[0].mxu0
        %v2098 = vadd.f32 0.0, %v2097
        %v2099 = vpop.f32.mrb[0].mxu0
        %v2100 = vpop.f32.mrb[0].mxu0
        %v2101 = vpop.f32.mrb[0].mxu0
        %2102 = vdwg.mxu0
        %v2104 = vsel %vm1972, %v2015, 0
        %2106 = vmatprep.subr.bf16.mxu0 0
        %2107 = vmatpush1.bf16.msra.mxu0 %v1779
        %2108 = vmatprep.subr.bf16.mxu0 0
        %2109 = vmatpush1.bf16.msra.mxu0 0
        %2110 = vmatprep.subr.bf16.mxu0 0
        %2111 = vmatpush1.bf16.msra.mxu0 0
        %2112 = vmatprep.subr.bf16.mxu0 0
        %2113 = vmatpush1.bf16.msra.mxu0 0
        %2114 = vmatprep.subr.bf16.mxu0 0
        %2115 = vmatpush1.bf16.msra.mxu0 0
        %2116 = vmatprep.subr.bf16.mxu0 0
        %2117 = vmatpush1.bf16.msra.mxu0 0
        %2118 = vmatprep.subr.bf16.mxu0 0
        %2119 = vmatpush1.bf16.msra.mxu0 0
        %2120 = vmatprep.subr.bf16.mxu0 0
        %2121 = vmatpush1.bf16.msra.mxu0 0
        %2122 = vmatprep.subr.bf16.mxu0 0
        %2123 = vmatpush1.bf16.msra.mxu0 0
        %2124 = vmatprep.subr.bf16.mxu0 0
        %2125 = vmatpush1.bf16.msra.mxu0 0
        %2126 = vmatprep.subr.bf16.mxu0 0
        %2127 = vmatpush1.bf16.msra.mxu0 0
        %2128 = vmatprep.subr.bf16.mxu0 0
        %2129 = vmatpush1.bf16.msra.mxu0 0
        %2130 = vmatprep.subr.bf16.mxu0 0
        %2131 = vmatpush1.bf16.msra.mxu0 0
        %2132 = vmatprep.subr.bf16.mxu0 0
        %2133 = vmatpush1.bf16.msra.mxu0 0
        %2134 = vmatprep.subr.bf16.mxu0 0
        %2135 = vmatpush1.bf16.msra.mxu0 0
        %2136 = vmatprep.subr.bf16.mxu0 0
        %2137 = vmatpush1.bf16.msra.mxu0 0
        %2138 = vmatprep.mubr.bf16.mxu0 0
        %2139 = vmatmul.mubr.bf16.gmra.mrb[0].mxu0 %v2104
        %v2140 = vpop.f32.mrb[0].mxu0
        %v2141 = vadd.f32 0.0, %v2140
        %v2142 = vpop.f32.mrb[0].mxu0
        %v2143 = vpop.f32.mrb[0].mxu0
        %v2144 = vpop.f32.mrb[0].mxu0
        %2145 = vdwg.mxu0
        %v2147 = vsel %vm1972, %v2016, 0
        %2149 = vmatprep.subr.bf16.mxu0 0
        %2150 = vmatpush1.bf16.msra.mxu0 %v1780
        %2151 = vmatprep.subr.bf16.mxu0 0
        %2152 = vmatpush1.bf16.msra.mxu0 0
        %2153 = vmatprep.subr.bf16.mxu0 0
        %2154 = vmatpush1.bf16.msra.mxu0 0
        %2155 = vmatprep.subr.bf16.mxu0 0
        %2156 = vmatpush1.bf16.msra.mxu0 0
        %2157 = vmatprep.subr.bf16.mxu0 0
        %2158 = vmatpush1.bf16.msra.mxu0 0
        %2159 = vmatprep.subr.bf16.mxu0 0
        %2160 = vmatpush1.bf16.msra.mxu0 0
        %2161 = vmatprep.subr.bf16.mxu0 0
        %2162 = vmatpush1.bf16.msra.mxu0 0
        %2163 = vmatprep.subr.bf16.mxu0 0
        %2164 = vmatpush1.bf16.msra.mxu0 0
        %2165 = vmatprep.subr.bf16.mxu0 0
        %2166 = vmatpush1.bf16.msra.mxu0 0
        %2167 = vmatprep.subr.bf16.mxu0 0
        %2168 = vmatpush1.bf16.msra.mxu0 0
        %2169 = vmatprep.subr.bf16.mxu0 0
        %2170 = vmatpush1.bf16.msra.mxu0 0
        %2171 = vmatprep.subr.bf16.mxu0 0
        %2172 = vmatpush1.bf16.msra.mxu0 0
        %2173 = vmatprep.subr.bf16.mxu0 0
        %2174 = vmatpush1.bf16.msra.mxu0 0
        %2175 = vmatprep.subr.bf16.mxu0 0
        %2176 = vmatpush1.bf16.msra.mxu0 0
        %2177 = vmatprep.subr.bf16.mxu0 0
        %2178 = vmatpush1.bf16.msra.mxu0 0
        %2179 = vmatprep.subr.bf16.mxu0 0
        %2180 = vmatpush1.bf16.msra.mxu0 0
        %2181 = vmatprep.mubr.bf16.mxu0 0
        %2182 = vmatmul.mubr.bf16.gmra.mrb[0].mxu0 %v2147
        %v2183 = vpop.f32.mrb[0].mxu0
        %v2184 = vadd.f32 0.0, %v2183
        %v2185 = vpop.f32.mrb[0].mxu0
        %v2186 = vpop.f32.mrb[0].mxu0
        %v2187 = vpop.f32.mrb[0].mxu0
        %2188 = vdwg.mxu0
        %v2189 = vmul.f32 %v2055, %v2009
        %v2190 = vmul.f32 %v2098, %v2010
        %v2191 = vmul.f32 %v2141, %v2011
        %v2192 = vmul.f32 %v2184, %v2012
        %v2193 = vcombine.low %v2189, %v2191
        %v2194 = vcombine.high %v2189, %v2191
        %v2196 = vunpack.c.l.s4 1983009808
        %v2197 = vunpack.c.0.s8 %v2196
        %v2198 = vlaneseq
        %v2199 = vshrl.u32 %v2198, 7
        %v2200 = vsub.s32 %v2197, %v2199
        %v2201 = vrot.slane %v2193, %v2200
        %v2203 = vunpack.c.l.s4 1983009808
        %v2204 = vunpack.c.0.s8 %v2203
        %v2205 = vlaneseq
        %v2206 = vshrl.u32 %v2205, 7
        %v2207 = vsub.s32 %v2204, %v2206
        %v2208 = vrot.slane %v2194, %v2207
        %v2209 = vcombine.low %v2190, %v2192
        %v2210 = vcombine.high %v2190, %v2192
        %v2212 = vunpack.c.l.s4 1983009808
        %v2213 = vunpack.c.0.s8 %v2212
        %v2214 = vlaneseq
        %v2215 = vshrl.u32 %v2214, 7
        %v2216 = vsub.s32 %v2213, %v2215
        %v2217 = vrot.slane %v2209, %v2216
        %v2219 = vunpack.c.l.s4 1983009808
        %v2220 = vunpack.c.0.s8 %v2219
        %v2221 = vlaneseq
        %v2222 = vshrl.u32 %v2221, 7
        %v2223 = vsub.s32 %v2220, %v2222
        %v2224 = vrot.slane %v2210, %v2223
        %v2225 = vcombine.low %v2201, %v2217
        %v2226 = vcombine.high %v2201, %v2217
        %v2228 = vunpack.c.l.s4 1934713408
        %v2229 = vunpack.c.0.s8 %v2228
        %v2230 = vlaneseq
        %v2231 = vshrl.u32 %v2230, 7
        %v2232 = vsub.s32 %v2229, %v2231
        %v2233 = vrot.slane %v2225, %v2232
        %v2235 = vunpack.c.l.s4 1934713408
        %v2236 = vunpack.c.0.s8 %v2235
        %v2237 = vlaneseq
        %v2238 = vshrl.u32 %v2237, 7
        %v2239 = vsub.s32 %v2236, %v2238
        %v2240 = vrot.slane %v2226, %v2239
        %v2241 = vcombine.low %v2208, %v2224
        %v2242 = vcombine.high %v2208, %v2224
        %v2244 = vunpack.c.l.s4 1934713408
        %v2245 = vunpack.c.0.s8 %v2244
        %v2246 = vlaneseq
        %v2247 = vshrl.u32 %v2246, 7
        %v2248 = vsub.s32 %v2245, %v2247
        %v2249 = vrot.slane %v2241, %v2248
        %v2251 = vunpack.c.l.s4 1934713408
        %v2252 = vunpack.c.0.s8 %v2251
        %v2253 = vlaneseq
        %v2254 = vshrl.u32 %v2253, 7
        %v2255 = vsub.s32 %v2252, %v2254
        %v2256 = vrot.slane %v2242, %v2255
        %v2257 = vcombine.high %v2233, 0.0
        %v2258 = vcombine.high %v2240, 0.0
        %v2259 = vcombine.high %v2249, 0.0
        %v2260 = vcombine.high %v2256, 0.0
        %v2261 = vcombine.low %v2233, %v2240
        %v2263 = vunpack.c.l.s4 1983009808
        %v2264 = vunpack.c.0.s8 %v2263
        %v2265 = vlaneseq
        %v2266 = vshrl.u32 %v2265, 7
        %v2267 = vsub.s32 %v2264, %v2266
        %v2268 = vrot.slane %v2261, %v2267
        %v2269 = vcombine.low %v2257, %v2258
        %v2271 = vunpack.c.l.s4 1983009808
        %v2272 = vunpack.c.0.s8 %v2271
        %v2273 = vlaneseq
        %v2274 = vshrl.u32 %v2273, 7
        %v2275 = vsub.s32 %v2272, %v2274
        %v2276 = vrot.slane %v2269, %v2275
        %v2277 = vcombine.low %v2249, %v2256
        %v2279 = vunpack.c.l.s4 1983009808
        %v2280 = vunpack.c.0.s8 %v2279
        %v2281 = vlaneseq
        %v2282 = vshrl.u32 %v2281, 7
        %v2283 = vsub.s32 %v2280, %v2282
        %v2284 = vrot.slane %v2277, %v2283
        %v2285 = vcombine.low %v2259, %v2260
        %v2287 = vunpack.c.l.s4 1983009808
        %v2288 = vunpack.c.0.s8 %v2287
        %v2289 = vlaneseq
        %v2290 = vshrl.u32 %v2289, 7
        %v2291 = vsub.s32 %v2288, %v2290
        %v2292 = vrot.slane %v2285, %v2291
        %v2293 = vcombine.low %v2268, %v2276
        %v2294 = vcombine.high %v2268, %v2276
        %v2296 = vunpack.c.l.s4 1934713408
        %v2297 = vunpack.c.0.s8 %v2296
        %v2298 = vlaneseq
        %v2299 = vshrl.u32 %v2298, 7
        %v2300 = vsub.s32 %v2297, %v2299
        %v2301 = vrot.slane %v2293, %v2300
        %v2303 = vunpack.c.l.s4 1934713408
        %v2304 = vunpack.c.0.s8 %v2303
        %v2305 = vlaneseq
        %v2306 = vshrl.u32 %v2305, 7
        %v2307 = vsub.s32 %v2304, %v2306
        %v2308 = vrot.slane %v2294, %v2307
        %v2309 = vcombine.low %v2284, %v2292
        %v2310 = vcombine.high %v2284, %v2292
        %v2312 = vunpack.c.l.s4 1934713408
        %v2313 = vunpack.c.0.s8 %v2312
        %v2314 = vlaneseq
        %v2315 = vshrl.u32 %v2314, 7
        %v2316 = vsub.s32 %v2313, %v2315
        %v2317 = vrot.slane %v2309, %v2316
        %v2319 = vunpack.c.l.s4 1934713408
        %v2320 = vunpack.c.0.s8 %v2319
        %v2321 = vlaneseq
        %v2322 = vshrl.u32 %v2321, 7
        %v2323 = vsub.s32 %v2320, %v2322
        %v2324 = vrot.slane %v2310, %v2323
        %v2325 = vcombine.low %v2301, %v2317
        %v2326 = vcombine.high %v2301, %v2317
        %v2327 = vcombine.low %v2308, %v2324
        %v2328 = vcombine.high %v2308, %v2324
        %2330 = vrot.lane.b32.xlu0 %v2326, 8
        %v2331 = vpop.permute.xlu0 %2330
        %2334 = vrot.lane.b32.xlu0 %v2327, 16
        %v2335 = vpop.permute.xlu0 %2334
        %2338 = vrot.lane.b32.xlu0 %v2328, 24
        %v2339 = vpop.permute.xlu0 %2338
        %v2341 = vsel %vm1787, %v2325, %v2331
        %v2342 = vsel %vm1972, %v2341, %v2335
        %vm2343 = vcmask 195584
        %v2344 = vsel %vm2343, %v2342, %v2339
        %v2345 = vmul.f32 %v1990, %v2009
        %v2346 = vmul.f32 %v1992, %v2010
        %v2347 = vmul.f32 %v1994, %v2011
        %v2348 = vmul.f32 %v1996, %v2012
        %2349 = vst.msk [vmem:[%s822] sm:$0xff] %vm1972, %v2345
        %2350 = vst.msk [vmem:[%s822 + $0x8] sm:$0xff] %vm1972, %v2346
        %2351 = vst.msk [vmem:[%s822 + $0x10] sm:$0xff] %vm1972, %v2347
        %2352 = vst.msk [vmem:[%s822 + $0x18] sm:$0xff] %vm1972, %v2348
        %v2353 = vpack.c.bf16 %v2344, %v2344
        %v2354 = vld [vmem:[%s9] sm:$0xf]
        %v2355 = vld [vmem:[%s9 + $0x4] sm:$0xf]
        %v2356 = vld [vmem:[%s9 + $0x8] sm:$0xf]
        %v2357 = vld [vmem:[%s9 + $0xc] sm:$0xf]
        %v2358 = vld [vmem:[#allocation13] sm:$0x1]
        %v2360 = vlaneseq
        %v2361 = vshrl.u32 %v2360, 7
        %v2362 = vsub.s32 0, %v2361
        %v2363 = vrot.slane %v2358, %v2362
        %v2369 = vunpack.c.l.b16 %v2354
        %v2370 = vunpack.c.l.b16 %v2355
        %v2371 = vunpack.c.l.b16 %v2356
        %v2372 = vunpack.c.l.b16 %v2357
        %v2373 = vpack.c.b16 %v2370, %v2369
        %v2374 = vpack.c.b16 %v2372, %v2371
        %v2378 = vsel %vm863, %v2353, 0
        %2380 = vmatprep.subr.bf16.mxu0 0
        %2381 = vmatpush1.bf16.msra.mxu0 %v2373
        %2382 = vmatprep.subr.bf16.mxu0 0
        %2383 = vmatpush1.bf16.msra.mxu0 %v2374
        %2384 = vmatprep.subr.bf16.mxu0 0
        %2385 = vmatpush1.bf16.msra.mxu0 0
        %2386 = vmatprep.subr.bf16.mxu0 0
        %2387 = vmatpush1.bf16.msra.mxu0 0
        %2388 = vmatprep.subr.bf16.mxu0 0
        %2389 = vmatpush1.bf16.msra.mxu0 0
        %2390 = vmatprep.subr.bf16.mxu0 0
        %2391 = vmatpush1.bf16.msra.mxu0 0
        %2392 = vmatprep.subr.bf16.mxu0 0
        %2393 = vmatpush1.bf16.msra.mxu0 0
        %2394 = vmatprep.subr.bf16.mxu0 0
        %2395 = vmatpush1.bf16.msra.mxu0 0
        %2396 = vmatprep.subr.bf16.mxu0 0
        %2397 = vmatpush1.bf16.msra.mxu0 0
        %2398 = vmatprep.subr.bf16.mxu0 0
        %2399 = vmatpush1.bf16.msra.mxu0 0
        %2400 = vmatprep.subr.bf16.mxu0 0
        %2401 = vmatpush1.bf16.msra.mxu0 0
        %2402 = vmatprep.subr.bf16.mxu0 0
        %2403 = vmatpush1.bf16.msra.mxu0 0
        %2404 = vmatprep.subr.bf16.mxu0 0
        %2405 = vmatpush1.bf16.msra.mxu0 0
        %2406 = vmatprep.subr.bf16.mxu0 0
        %2407 = vmatpush1.bf16.msra.mxu0 0
        %2408 = vmatprep.subr.bf16.mxu0 0
        %2409 = vmatpush1.bf16.msra.mxu0 0
        %2410 = vmatprep.subr.bf16.mxu0 0
        %2411 = vmatpush1.bf16.msra.mxu0 0
        %2412 = vmatprep.mubr.bf16.mxu0 0
        %2413 = vmatmul.mubr.bf16.gmra.mrb[0].mxu0 %v2378
        %v2414 = vpop.f32.mrb[0].mxu0
        %v2415 = vadd.f32 %v2363, %v2414
        %v2416 = vpop.f32.mrb[0].mxu0
        %v2417 = vpop.f32.mrb[0].mxu0
        %v2418 = vpop.f32.mrb[0].mxu0
        %2419 = vdwg.mxu0
        %v2420 = vadd.f32 %v832, %v2415
        %v2421 = vld [vmem:[#allocation14] sm:$0x1]
        %v2422 = vld [vmem:[#allocation16] sm:$0x1]
        %v2423 = vsel %vm863, %v2420, 0.0
        %2424 = vadd.xlane.f32.xlu0 %v2423
        %v2425 = vpop.xlane.xlu0 %2424
        %v2426 = vmul.f32 %v2420, %v2420
        %v2427 = vsel %vm863, %v2426, 0.0
        %2428 = vadd.xlane.f32.xlu0 %v2427
        %v2429 = vpop.xlane.xlu0 %2428
        %v2430 = vrcp.pop 32.0
        %v2431 = vmul.f32 %v2425, %v2430
        %v2432 = vmul.f32 %v2429, %v2430
        %v2433 = vmul.f32 %v2431, %v2431
        %v2434 = vsub.f32 %v2432, %v2433
        %v2435 = vsub.f32 %v2420, %v2431
        %v2436 = vadd.f32 %v2434, 1e-05
        %v2437 = vrsqrt.pop %v2436
        %v2438 = vmul.f32 %v2435, %v2437
        %v2440 = vlaneseq
        %v2441 = vshrl.u32 %v2440, 7
        %v2442 = vsub.s32 0, %v2441
        %v2443 = vrot.slane %v2421, %v2442
        %v2445 = vmul.f32 %v2438, %v2443
        %v2447 = vlaneseq
        %v2448 = vshrl.u32 %v2447, 7
        %v2449 = vsub.s32 0, %v2448
        %v2450 = vrot.slane %v2422, %v2449
        %v2452 = vadd.f32 %v2445, %v2450
        %v2453 = vpack.c.bf16 %v2452, %v2452
        %v2454 = vld [vmem:[%s13] sm:$0xf]
        %v2455 = vld [vmem:[%s13 + $0x4] sm:$0xf]
        %v2456 = vld [vmem:[%s13 + $0x8] sm:$0xf]
        %v2457 = vld [vmem:[%s13 + $0xc] sm:$0xf]
        %v2458 = vld [vmem:[%s14] sm:$0x1]
        %v2460 = vlaneseq
        %v2461 = vshrl.u32 %v2460, 7
        %v2462 = vsub.s32 0, %v2461
        %v2463 = vrot.slane %v2458, %v2462
        %v2469 = vunpack.c.l.b16 %v2454
        %v2470 = vunpack.c.l.b16 %v2455
        %v2471 = vunpack.c.l.b16 %v2456
        %v2472 = vunpack.c.l.b16 %v2457
        %v2473 = vpack.c.b16 %v2470, %v2469
        %v2474 = vpack.c.b16 %v2472, %v2471
        %v2478 = vsel %vm863, %v2453, 0
        %2480 = vmatprep.subr.bf16.mxu0 0
        %2481 = vmatpush1.bf16.msra.mxu0 %v2473
        %2482 = vmatprep.subr.bf16.mxu0 0
        %2483 = vmatpush1.bf16.msra.mxu0 %v2474
        %2484 = vmatprep.subr.bf16.mxu0 0
        %2485 = vmatpush1.bf16.msra.mxu0 0
        %2486 = vmatprep.subr.bf16.mxu0 0
        %2487 = vmatpush1.bf16.msra.mxu0 0
        %2488 = vmatprep.subr.bf16.mxu0 0
        %2489 = vmatpush1.bf16.msra.mxu0 0
        %2490 = vmatprep.subr.bf16.mxu0 0
        %2491 = vmatpush1.bf16.msra.mxu0 0
        %2492 = vmatprep.subr.bf16.mxu0 0
        %2493 = vmatpush1.bf16.msra.mxu0 0
        %2494 = vmatprep.subr.bf16.mxu0 0
        %2495 = vmatpush1.bf16.msra.mxu0 0
        %2496 = vmatprep.subr.bf16.mxu0 0
        %2497 = vmatpush1.bf16.msra.mxu0 0
        %2498 = vmatprep.subr.bf16.mxu0 0
        %2499 = vmatpush1.bf16.msra.mxu0 0
        %2500 = vmatprep.subr.bf16.mxu0 0
        %2501 = vmatpush1.bf16.msra.mxu0 0
        %2502 = vmatprep.subr.bf16.mxu0 0
        %2503 = vmatpush1.bf16.msra.mxu0 0
        %2504 = vmatprep.subr.bf16.mxu0 0
        %2505 = vmatpush1.bf16.msra.mxu0 0
        %2506 = vmatprep.subr.bf16.mxu0 0
        %2507 = vmatpush1.bf16.msra.mxu0 0
        %2508 = vmatprep.subr.bf16.mxu0 0
        %2509 = vmatpush1.bf16.msra.mxu0 0
        %2510 = vmatprep.subr.bf16.mxu0 0
        %2511 = vmatpush1.bf16.msra.mxu0 0
        %2512 = vmatprep.mubr.bf16.mxu0 0
        %2513 = vmatmul.mubr.bf16.gmra.mrb[0].mxu0 %v2478
        %v2514 = vpop.f32.mrb[0].mxu0
        %v2515 = vadd.f32 %v2463, %v2514
        %v2516 = vpop.f32.mrb[0].mxu0
        %v2517 = vpop.f32.mrb[0].mxu0
        %v2518 = vpop.f32.mrb[0].mxu0
        %2519 = vdwg.mxu0
        %v2520 = vmax.f32 %v2515, 0.0
        %v2521 = vpack.c.bf16 %v2520, %v2520
        %v2522 = vld [vmem:[%s15] sm:$0xf]
        %v2523 = vld [vmem:[%s15 + $0x4] sm:$0xf]
        %v2524 = vld [vmem:[%s15 + $0x8] sm:$0xf]
        %v2525 = vld [vmem:[%s15 + $0xc] sm:$0xf]
        %v2526 = vld [vmem:[%s15 + $0x10] sm:$0xf]
        %v2527 = vld [vmem:[%s15 + $0x14] sm:$0xf]
        %v2528 = vld [vmem:[%s15 + $0x18] sm:$0xf]
        %v2529 = vld [vmem:[%s15 + $0x1c] sm:$0xf]
        %v2530 = vld [vmem:[%s16] sm:$0x1]
        %v2532 = vlaneseq
        %v2533 = vshrl.u32 %v2532, 7
        %v2534 = vsub.s32 0, %v2533
        %v2535 = vrot.slane %v2530, %v2534
        %v2545 = vunpack.c.l.b16 %v2522
        %v2546 = vunpack.c.l.b16 %v2523
        %v2547 = vunpack.c.l.b16 %v2524
        %v2548 = vunpack.c.l.b16 %v2525
        %v2549 = vunpack.c.l.b16 %v2526
        %v2550 = vunpack.c.l.b16 %v2527
        %v2551 = vunpack.c.l.b16 %v2528
        %v2552 = vunpack.c.l.b16 %v2529
        %v2553 = vpack.c.b16 %v2546, %v2545
        %v2554 = vpack.c.b16 %v2548, %v2547
        %v2555 = vpack.c.b16 %v2550, %v2549
        %v2556 = vpack.c.b16 %v2552, %v2551
        %vm2561 = vcmask 523264
        %v2563 = vsel %vm2561, %v2521, 0
        %2565 = vmatprep.subr.bf16.mxu0 0
        %2566 = vmatpush1.bf16.msra.mxu0 %v2553
        %2567 = vmatprep.subr.bf16.mxu0 0
        %2568 = vmatpush1.bf16.msra.mxu0 %v2554
        %2569 = vmatprep.subr.bf16.mxu0 0
        %2570 = vmatpush1.bf16.msra.mxu0 %v2555
        %2571 = vmatprep.subr.bf16.mxu0 0
        %2572 = vmatpush1.bf16.msra.mxu0 %v2556
        %2573 = vmatprep.subr.bf16.mxu0 0
        %2574 = vmatpush1.bf16.msra.mxu0 0
        %2575 = vmatprep.subr.bf16.mxu0 0
        %2576 = vmatpush1.bf16.msra.mxu0 0
        %2577 = vmatprep.subr.bf16.mxu0 0
        %2578 = vmatpush1.bf16.msra.mxu0 0
        %2579 = vmatprep.subr.bf16.mxu0 0
        %2580 = vmatpush1.bf16.msra.mxu0 0
        %2581 = vmatprep.subr.bf16.mxu0 0
        %2582 = vmatpush1.bf16.msra.mxu0 0
        %2583 = vmatprep.subr.bf16.mxu0 0
        %2584 = vmatpush1.bf16.msra.mxu0 0
        %2585 = vmatprep.subr.bf16.mxu0 0
        %2586 = vmatpush1.bf16.msra.mxu0 0
        %2587 = vmatprep.subr.bf16.mxu0 0
        %2588 = vmatpush1.bf16.msra.mxu0 0
        %2589 = vmatprep.subr.bf16.mxu0 0
        %2590 = vmatpush1.bf16.msra.mxu0 0
        %2591 = vmatprep.subr.bf16.mxu0 0
        %2592 = vmatpush1.bf16.msra.mxu0 0
        %2593 = vmatprep.subr.bf16.mxu0 0
        %2594 = vmatpush1.bf16.msra.mxu0 0
        %2595 = vmatprep.subr.bf16.mxu0 0
        %2596 = vmatpush1.bf16.msra.mxu0 0
        %2597 = vmatprep.mubr.bf16.mxu0 0
        %2598 = vmatmul.mubr.bf16.gmra.mrb[0].mxu0 %v2563
        %v2599 = vpop.f32.mrb[0].mxu0
        %v2600 = vadd.f32 %v2535, %v2599
        %v2601 = vpop.f32.mrb[0].mxu0
        %v2602 = vpop.f32.mrb[0].mxu0
        %v2603 = vpop.f32.mrb[0].mxu0
        %2604 = vdwg.mxu0
        %v2605 = vadd.f32 %v2452, %v2600
        %v2606 = vld [vmem:[%s17] sm:$0x1]
        %v2607 = vld [vmem:[%s18] sm:$0x1]
        %v2608 = vsel %vm863, %v2605, 0.0
        %2609 = vadd.xlane.f32.xlu0 %v2608
        %v2610 = vpop.xlane.xlu0 %2609
        %v2611 = vmul.f32 %v2605, %v2605
        %v2612 = vsel %vm863, %v2611, 0.0
        %2613 = vadd.xlane.f32.xlu0 %v2612
        %v2614 = vpop.xlane.xlu0 %2613
        %v2615 = vmul.f32 %v2610, %v2430
        %v2616 = vmul.f32 %v2614, %v2430
        %v2617 = vmul.f32 %v2615, %v2615
        %v2618 = vsub.f32 %v2616, %v2617
        %v2619 = vsub.f32 %v2605, %v2615
        %v2620 = vadd.f32 %v2618, 1e-05
        %v2621 = vrsqrt.pop %v2620
        %v2622 = vmul.f32 %v2619, %v2621
        %v2624 = vlaneseq
        %v2625 = vshrl.u32 %v2624, 7
        %v2626 = vsub.s32 0, %v2625
        %v2627 = vrot.slane %v2606, %v2626
        %v2629 = vmul.f32 %v2622, %v2627
        %v2631 = vlaneseq
        %v2632 = vshrl.u32 %v2631, 7
        %v2633 = vsub.s32 0, %v2632
        %v2634 = vrot.slane %v2607, %v2633
        %v2636 = vadd.f32 %v2629, %v2634
        %2637 = vst.msk [vmem:[%s815] sm:$0xff] %vm863, %v2636
        %s2638 = sand.u32 %s485, 1
        %s2639 = scalar_lea.sflag [#allocation4], %s2638
        %s2640 = sand.u32 %s485, 1
        %s2641 = smul.addr %s2640, 8
        %s2642 = scalar_lea.vmem [#allocation17], %s2641
        %s2643 = sand.u32 %s513, 1
        %s2644 = scalar_lea.sflag [#allocation19], %s2643
        %s2645 = sand.u32 %s513, 1
        %s2646 = smul.addr %s2645, 32
        %s2647 = scalar_lea.vmem [#allocation18], %s2646
        // Predicated region
        $region133: #{tpu_custom_call.1} parent=95 // pred_check
          %p2648 = pneg %p495
        $region134: #{tpu_custom_call.1} parent=95 // pred_check_branch
          %2650 = sbr.rel (%p2648) target = $region136
        $region135: #{tpu_custom_call.1} parent=95 // pred_region
          %s2652 = ssub.s32 128, 128
          %2653 = vsyncadd %s2639, %s2652
          %s2654 = smul.addr %s51, 2
          %s2655 = sadd.s32 %s52, %s2654
          %s2656 = smul.addr %s2655, 128
          %s2657 = scalar_lea.hbm %s19, %s2656
          %s2659 = sshll.u32 %s2642, 4
          %s2660 = int_to_ptr.vmem [resolvable:$true] %s2659
          %2662 = dma.vmem_to_hbm [thread:$0]  %s2660, 128, %s2657, %s2639
        $region136: #{tpu_custom_call.1} parent=95 // pred_fallthru
          _
        // Predicated region
        $region137: #{tpu_custom_call.1} parent=95 // pred_check
          %p2663 = pneg %p523
        $region138: #{tpu_custom_call.1} parent=95 // pred_check_branch
          %2665 = sbr.rel (%p2663) target = $region140
        $region139: #{tpu_custom_call.1} parent=95 // pred_region
          %s2667 = ssub.s32 512, 512
          %2668 = vsyncadd %s2644, %s2667
          %s2669 = smul.addr %s51, 8
          %s2670 = sadd.s32 %s52, %s2669
          %s2671 = smul.addr %s2670, 128
          %s2672 = scalar_lea.hbm %s20, %s2671
          %s2673 = sshll.u32 %s2647, 4
          %s2674 = int_to_ptr.vmem [resolvable:$true] %s2673
          %2679 = dma.vmem_to_hbm [thread:$0]  %s2674, 512, %s2672, %s2644, 128, 256, 8
        $region140: #{tpu_custom_call.1} parent=95 // pred_fallthru
          _
      $region96: #{tpu_custom_call.1} parent=5 // pred_fallthru
        _
      %p2680 = scmp.le.s32.totalorder 2, %s42
      // Predicated region
      $region141: #{tpu_custom_call.1} parent=5 // pred_check
        %p2681 = pneg %p2680
      $region142: #{tpu_custom_call.1} parent=5 // pred_check_branch
        %2683 = sbr.rel (%p2681) target = $region144
      $region143: #{tpu_custom_call.1} parent=5 // pred_region
        %s2684 = ssub.s32 %s42, 2
        // Predicated region
        $region145: #{tpu_custom_call.1} parent=143 // pred_check
          %p2685 = pneg %p501
        $region146: #{tpu_custom_call.1} parent=143 // pred_check_branch
          %2687 = sbr.rel (%p2685) target = $region148
        $region147: #{tpu_custom_call.1} parent=143 // pred_region
          %s2688 = sand.u32 %s486, 1
          %s2689 = scalar_lea.sflag [#allocation4], %s2688
          %s2690 = sand.u32 %s486, 1
          %s2691 = smul.addr %s2690, 8
          %s2692 = scalar_lea.vmem [#allocation17], %s2691
          %2693 = dma.done %s2689, 128
        $region148: #{tpu_custom_call.1} parent=143 // pred_fallthru
          _
        // Predicated region
        $region149: #{tpu_custom_call.1} parent=143 // pred_check
          %p2694 = pneg %p529
        $region150: #{tpu_custom_call.1} parent=143 // pred_check_branch
          %2696 = sbr.rel (%p2694) target = $region152
        $region151: #{tpu_custom_call.1} parent=143 // pred_region
          %s2697 = sand.u32 %s514, 1
          %s2698 = scalar_lea.sflag [#allocation19], %s2697
          %s2699 = sand.u32 %s514, 1
          %s2700 = smul.addr %s2699, 32
          %s2701 = scalar_lea.vmem [#allocation18], %s2700
          %2702 = dma.done %s2698, 512
        $region152: #{tpu_custom_call.1} parent=143 // pred_fallthru
          _
      $region144: #{tpu_custom_call.1} parent=5 // pred_fallthru
        _
    $region6: #{tpu_custom_call.1} parent=1 // loop_footer
      %s46 = sadd.s32 1, %s42
    $region7: #{tpu_custom_call.1} parent=1 // loop_footer_branch
      %41 = sbr.rel target = $region3
    $region8: #{tpu_custom_call.1} parent=1 // loop_exit
      _
    %2703 = vsyncpa [#allocation3], 1
    %s2704 = scalar_lea.sflag [#allocation3], 1
    %2705 = vsyncpa %s2704, 1
    %2706 = vsyncpa [#allocation6], 1
    %s2707 = scalar_lea.sflag [#allocation6], 1
    %2708 = vsyncpa %s2707, 1
    %2709 = vsyncpa [#allocation9], 1
    %2710 = vsyncpa [#allocation12], 1
    %2711 = vsyncpa [#allocation15], 1
    %2712 = vsyncpa [#allocation4], 1
    %s2713 = scalar_lea.sflag [#allocation4], 1
    %2714 = vsyncpa %s2713, 1
    %2715 = vsyncpa [#allocation19], 1
    %s2716 = scalar_lea.sflag [#allocation19], 1
    %2717 = vsyncpa %s2716, 1

// kernel: tpu_custom_call.1
$region0: #{tpu_custom_call.1}
  #allocation0 [shape = 'u32[]', space=smem, size = 0x4, offset = 0x4, fixed_abs, tag = 'smem constant byte address 0x4 - core index']
  #allocation1 [shape = 'u32[144,128]{1,0:T(1,128)}', space=vmem, size = 0x12000, scoped, tag = 'internal scratch']
  %s0 = inlined_call_operand.vmem [shape: f32[2,16,32], index: 0, kind: input, shape index: {}]
  %s1 = inlined_call_operand.hbm [shape: f32[2,16,32], index: 1, kind: input, shape index: {}]
  %s2 = inlined_call_operand.hbm [shape: f32[2,1,16], index: 2, kind: input, shape index: {}]
  %s3 = inlined_call_operand.vmem [shape: bf16[32,32], index: 3, kind: input, shape index: {}]
  %s4 = inlined_call_operand.vmem [shape: f32[1,32], index: 4, kind: input, shape index: {}]
  %s5 = inlined_call_operand.hbm [shape: bf16[32,32], index: 5, kind: input, shape index: {}]
  %s6 = inlined_call_operand.hbm [shape: f32[1,32], index: 6, kind: input, shape index: {}]
  %s7 = inlined_call_operand.hbm [shape: bf16[32,32], index: 7, kind: input, shape index: {}]
  %s8 = inlined_call_operand.hbm [shape: f32[1,32], index: 8, kind: input, shape index: {}]
  %s9 = inlined_call_operand.vmem [shape: bf16[32,32], index: 9, kind: input, shape index: {}]
  %s10 = inlined_call_operand.hbm [shape: f32[1,32], index: 10, kind: input, shape index: {}]
  %s11 = inlined_call_operand.hbm [shape: f32[1,32], index: 11, kind: input, shape index: {}]
  %s12 = inlined_call_operand.hbm [shape: f32[1,32], index: 12, kind: input, shape index: {}]
  %s13 = inlined_call_operand.vmem [shape: bf16[32,64], index: 13, kind: input, shape index: {}]
  %s14 = inlined_call_operand.vmem [shape: f32[1,64], index: 14, kind: input, shape index: {}]
  %s15 = inlined_call_operand.vmem [shape: bf16[64,32], index: 15, kind: input, shape index: {}]
  %s16 = inlined_call_operand.vmem [shape: f32[1,32], index: 16, kind: input, shape index: {}]
  %s17 = inlined_call_operand.vmem [shape: f32[1,32], index: 17, kind: input, shape index: {}]
  %s18 = inlined_call_operand.vmem [shape: f32[1,32], index: 18, kind: input, shape index: {}]
  %s19 = inlined_call_operand.hbm [shape: f32[2,16,32], index: 19, kind: output, shape index: {0}]
  %s20 = inlined_call_operand.hbm [shape: f32[2,4,16,16], index: 20, kind: output, shape index: {1}]
  %21 = xla_tuple %s19, %s20
  %s22 = sld [smem:[#allocation0]]
  $region153: #{tpu_custom_call.1} parent=0
    _
  %s24 = ssub.s32 1, %s22
  %s25 = scalar_select 0, %s24, %s22
  $region1: #{tpu_custom_call.1} parent=0
    #allocation2 [shape = 'u8[16384]{0}', space=vmem, size = 0x4000, scoped, tag = 'input window, operand 1']
    #allocation3 [shape = 's32[2]{0}', space=sflag, size = 0x8, scoped, tag = 'scoped memory for tpu_custom_call.1']
    #allocation4 [shape = 's32[2]{0}', space=sflag, size = 0x8, scoped, tag = 'scoped memory for tpu_custom_call.1']
    #allocation5 [shape = 'u8[1024]{0}', space=vmem, size = 0x400, scoped, tag = 'input window, operand 2']
    #allocation6 [shape = 's32[2]{0}', space=sflag, size = 0x8, scoped, tag = 'scoped memory for tpu_custom_call.1']
    #allocation7 [shape = 'u8[8192]{0}', space=vmem, size = 0x2000, scoped, tag = 'input window, operand 5, single buffered']
    #allocation8 [shape = 'u8[512]{0}', space=vmem, size = 0x400, scoped, tag = 'input window, operand 6, single buffered']
    #allocation9 [shape = 's32[1]{0}', space=sflag, size = 0x4, scoped, tag = 'scoped memory for tpu_custom_call.1']
    #allocation10 [shape = 'u8[8192]{0}', space=vmem, size = 0x2000, scoped, tag = 'input window, operand 7, single buffered']
    #allocation11 [shape = 'u8[512]{0}', space=vmem, size = 0x400, scoped, tag = 'input window, operand 8, single buffered']
    #allocation12 [shape = 's32[1]{0}', space=sflag, size = 0x4, scoped, tag = 'scoped memory for tpu_custom_call.1']
    #allocation13 [shape = 'u8[512]{0}', space=vmem, size = 0x400, scoped, tag = 'input window, operand 10, single buffered']
    #allocation14 [shape = 'u8[512]{0}', space=vmem, size = 0x400, scoped, tag = 'input window, operand 11, single buffered']
    #allocation15 [shape = 's32[1]{0}', space=sflag, size = 0x4, scoped, tag = 'scoped memory for tpu_custom_call.1']
    #allocation16 [shape = 'u8[512]{0}', space=vmem, size = 0x400, scoped, tag = 'input window, operand 12, single buffered']
    #allocation17 [shape = 'u8[8192]{0}', space=vmem, size = 0x2000, scoped, tag = 'output window, operand 0']
    #allocation18 [shape = 'u8[32768]{0}', space=vmem, size = 0x8000, scoped, tag = 'output window, operand 1']
    #allocation19 [shape = 's32[2]{0}', space=sflag, size = 0x8, scoped, tag = 'scoped memory for tpu_custom_call.1']
    %26 = vsyncpa [#allocation3], 0
    %s27 = scalar_lea.sflag [#allocation3], 1
    %28 = vsyncpa %s27, 0
    %29 = vsyncpa [#allocation6], 0
    %s30 = scalar_lea.sflag [#allocation6], 1
    %31 = vsyncpa %s30, 0
    %32 = vsyncpa [#allocation9], 0
    %33 = vsyncpa [#allocation12], 0
    %34 = vsyncpa [#allocation15], 0
    %35 = vsyncpa [#allocation4], 0
    %s36 = scalar_lea.sflag [#allocation4], 1
    %37 = vsyncpa %s36, 0
    %38 = vsyncpa [#allocation19], 0
    %s39 = scalar_lea.sflag [#allocation19], 1
    %40 = vsyncpa %s39, 0
    loop: start=0, step=1, limit=6
    $region2: #{tpu_custom_call.1} parent=1 // loop_pre_header
      _
    $region3: #{tpu_custom_call.1} parent=1 // loop_header
      %s42 = sphi 0, %s46
      %p43 = scmp.ge.s32.totalorder %s42, 6
      %s49 = sphi 0, %s61
      %s50 = sphi 0, %s57
      %s51 = sphi 0, %s49
      %s52 = sphi 0, %s50
      %s53 = sphi 0, %s51
      %s54 = sphi 0, %s52
      %s66 = sphi 0, %s68
      %s69 = sphi 0, %s66
      %s70 = sphi 0, %s69
      %s86 = sphi 0, %s70
      %s92 = sphi 0, %s94
      %s95 = sphi 0, %s92
      %s96 = sphi 0, %s95
      %s112 = sphi 0, %s96
      %s118 = sphi 0, %s120
      %s121 = sphi 0, %s118
      %s122 = sphi 0, %s121
      %s138 = sphi 0, %s122
      %s142 = sphi 0, %s142
      %s144 = sphi 0, %s142
      %s145 = sphi 0, %s144
      %s159 = sphi 0, %s145
      %s163 = sphi 0, %s163
      %s165 = sphi 0, %s163
      %s166 = sphi 0, %s165
      %s180 = sphi 0, %s166
      %s184 = sphi 0, %s184
      %s186 = sphi 0, %s184
      %s187 = sphi 0, %s186
      %s201 = sphi 0, %s187
      %s205 = sphi 0, %s205
      %s207 = sphi 0, %s205
      %s208 = sphi 0, %s207
      %s222 = sphi 0, %s208
      %s226 = sphi 0, %s226
      %s228 = sphi 0, %s226
      %s229 = sphi 0, %s228
      %s243 = sphi 0, %s229
      %s247 = sphi 0, %s247
      %s249 = sphi 0, %s247
      %s250 = sphi 0, %s249
      %s264 = sphi 0, %s250
      %s268 = sphi 0, %s268
      %s270 = sphi 0, %s268
      %s271 = sphi 0, %s270
      %s285 = sphi 0, %s271
      %s289 = sphi 0, %s289
      %s291 = sphi 0, %s289
      %s292 = sphi 0, %s291
      %s306 = sphi 0, %s292
      %s310 = sphi 0, %s310
      %s312 = sphi 0, %s310
      %s313 = sphi 0, %s312
      %s327 = sphi 0, %s313
      %s331 = sphi 0, %s331
      %s333 = sphi 0, %s331
      %s334 = sphi 0, %s333
      %s348 = sphi 0, %s334
      %s352 = sphi 0, %s352
      %s354 = sphi 0, %s352
      %s355 = sphi 0, %s354
      %s369 = sphi 0, %s355
      %s373 = sphi 0, %s373
      %s375 = sphi 0, %s373
      %s376 = sphi 0, %s375
      %s390 = sphi 0, %s376
      %s394 = sphi 0, %s394
      %s396 = sphi 0, %s394
      %s397 = sphi 0, %s396
      %s411 = sphi 0, %s397
      %s415 = sphi 0, %s415
      %s417 = sphi 0, %s415
      %s418 = sphi 0, %s417
      %s432 = sphi 0, %s418
      %s436 = sphi 0, %s436
      %s438 = sphi 0, %s436
      %s439 = sphi 0, %s438
      %s453 = sphi 0, %s439
      %s457 = sphi 0, %s457
      %s459 = sphi 0, %s457
      %s460 = sphi 0, %s459
      %s474 = sphi 0, %s460
      %s482 = sphi 0, %s484
      %s485 = sphi 0, %s482
      %s486 = sphi 0, %s485
      %s502 = sphi 0, %s486
      %s510 = sphi 0, %s512
      %s513 = sphi 0, %s510
      %s514 = sphi 0, %s513
      %s530 = sphi 0, %s514
    $region4: #{tpu_custom_call.1} parent=1 // loop_header_branch
      %45 = sbr.rel (%p43) target = $region8
    $region5: #{tpu_custom_call.1} parent=1 // loop_body
      %s47 = ssub.s32 %s42, 1
      %s48 = ssub.s32 %s42, 2
      %s55 = sadd.s32 1, %s50
      %p56 = scmp.ge.s32.totalorder %s55, 2
      %s57 = scalar_select %p56, 0, %s55
      %s58 = sadd.s32 1, %s49
      %s59 = scalar_select %p56, %s58, %s49
      %p60 = scmp.ge.s32.totalorder %s59, 2
      %s61 = scalar_select %p60, 0, %s59
      %s62 = ssub.s32 %s49, %s61
      %s63 = ssub.s32 %s50, %s57
      %s64 = sor.u32 %s62, %s63
      %p65 = scmp.eq.s32.totalorder %s64, 0
      %s67 = sadd.s32 %s66, 1
      %s68 = scalar_select %p65, %s66, %s67
      %p71 = pneg %p65
      %p72 = scmp.eq.s32.totalorder %s42, 3
      %p73 = por %p71, %p72
      %p74 = scmp.ne.s32.totalorder %s66, %s69
      %p75 = scmp.eq.s32.totalorder %s42, 0
      %p76 = por %p74, %p75
      %p77 = scmp.ne.s32.totalorder %s66, %s69
      %p78 = scmp.eq.s32.totalorder %s47, 3
      %p79 = por %p77, %p78
      %p80 = scmp.ne.s32.totalorder %s69, %s70
      %p81 = scmp.eq.s32.totalorder %s47, 0
      %p82 = por %p80, %p81
      %p83 = scmp.ne.s32.totalorder %s69, %s70
      %p84 = scmp.eq.s32.totalorder %s48, 3
      %p85 = por %p83, %p84
      %p87 = scmp.ne.s32.totalorder %s70, %s86
      %p88 = scmp.eq.s32.totalorder %s48, 0
      %p89 = por %p87, %p88
      %s90 = ssub.s32 %s49, %s61
      %p91 = scmp.eq.s32.totalorder %s90, 0
      %s93 = sadd.s32 %s92, 1
      %s94 = scalar_select %p91, %s92, %s93
      %p97 = pneg %p91
      %p98 = scmp.eq.s32.totalorder %s42, 3
      %p99 = por %p97, %p98
      %p100 = scmp.ne.s32.totalorder %s92, %s95
      %p101 = scmp.eq.s32.totalorder %s42, 0
      %p102 = por %p100, %p101
      %p103 = scmp.ne.s32.totalorder %s92, %s95
      %p104 = scmp.eq.s32.totalorder %s47, 3
      %p105 = por %p103, %p104
      %p106 = scmp.ne.s32.totalorder %s95, %s96
      %p107 = scmp.eq.s32.totalorder %s47, 0
      %p108 = por %p106, %p107
      %p109 = scmp.ne.s32.totalorder %s95, %s96
      %p110 = scmp.eq.s32.totalorder %s48, 3
      %p111 = por %p109, %p110
      %p113 = scmp.ne.s32.totalorder %s96, %s112
      %p114 = scmp.eq.s32.totalorder %s48, 0
      %p115 = por %p113, %p114
      %s116 = ssub.s32 %s49, %s61
      %p117 = scmp.eq.s32.totalorder %s116, 0
      %s119 = sadd.s32 %s118, 1
      %s120 = scalar_select %p117, %s118, %s119
      %p123 = pneg %p117
      %p124 = scmp.eq.s32.totalorder %s42, 3
      %p125 = por %p123, %p124
      %p126 = scmp.ne.s32.totalorder %s118, %s121
      %p127 = scmp.eq.s32.totalorder %s42, 0
      %p128 = por %p126, %p127
      %p129 = scmp.ne.s32.totalorder %s118, %s121
      %p130 = scmp.eq.s32.totalorder %s47, 3
      %p131 = por %p129, %p130
      %p132 = scmp.ne.s32.totalorder %s121, %s122
      %p133 = scmp.eq.s32.totalorder %s47, 0
      %p134 = por %p132, %p133
      %p135 = scmp.ne.s32.totalorder %s121, %s122
      %p136 = scmp.eq.s32.totalorder %s48, 3
      %p137 = por %p135, %p136
      %p139 = scmp.ne.s32.totalorder %s122, %s138
      %p140 = scmp.eq.s32.totalorder %s48, 0
      %p141 = por %p139, %p140
      %s143 = sadd.s32 %s142, 1
      %p146 = scmp.eq.s32.totalorder %s42, 3
      %p147 = scmp.ne.s32.totalorder %s142, %s144
      %p148 = scmp.eq.s32.totalorder %s42, 0
      %p149 = por %p147, %p148
      %p150 = scmp.ne.s32.totalorder %s142, %s144
      %p151 = scmp.eq.s32.totalorder %s47, 3
      %p152 = por %p150, %p151
      %p153 = scmp.ne.s32.totalorder %s144, %s145
      %p154 = scmp.eq.s32.totalorder %s47, 0
      %p155 = por %p153, %p154
      %p156 = scmp.ne.s32.totalorder %s144, %s145
      %p157 = scmp.eq.s32.totalorder %s48, 3
      %p158 = por %p156, %p157
      %p160 = scmp.ne.s32.totalorder %s145, %s159
      %p161 = scmp.eq.s32.totalorder %s48, 0
      %p162 = por %p160, %p161
      %s164 = sadd.s32 %s163, 1
      %p167 = scmp.eq.s32.totalorder %s42, 3
      %p168 = scmp.ne.s32.totalorder %s163, %s165
      %p169 = scmp.eq.s32.totalorder %s42, 0
      %p170 = por %p168, %p169
      %p171 = scmp.ne.s32.totalorder %s163, %s165
      %p172 = scmp.eq.s32.totalorder %s47, 3
      %p173 = por %p171, %p172
      %p174 = scmp.ne.s32.totalorder %s165, %s166
      %p175 = scmp.eq.s32.totalorder %s47, 0
      %p176 = por %p174, %p175
      %p177 = scmp.ne.s32.totalorder %s165, %s166
      %p178 = scmp.eq.s32.totalorder %s48, 3
      %p179 = por %p177, %p178
      %p181 = scmp.ne.s32.totalorder %s166, %s180
      %p182 = scmp.eq.s32.totalorder %s48, 0
      %p183 = por %p181, %p182
      %s185 = sadd.s32 %s184, 1
      %p188 = scmp.eq.s32.totalorder %s42, 3
      %p189 = scmp.ne.s32.totalorder %s184, %s186
      %p190 = scmp.eq.s32.totalorder %s42, 0
      %p191 = por %p189, %p190
      %p192 = scmp.ne.s32.totalorder %s184, %s186
      %p193 = scmp.eq.s32.totalorder %s47, 3
      %p194 = por %p192, %p193
      %p195 = scmp.ne.s32.totalorder %s186, %s187
      %p196 = scmp.eq.s32.totalorder %s47, 0
      %p197 = por %p195, %p196
      %p198 = scmp.ne.s32.totalorder %s186, %s187
      %p199 = scmp.eq.s32.totalorder %s48, 3
      %p200 = por %p198, %p199
      %p202 = scmp.ne.s32.totalorder %s187, %s201
      %p203 = scmp.eq.s32.totalorder %s48, 0
      %p204 = por %p202, %p203
      %s206 = sadd.s32 %s205, 1
      %p209 = scmp.eq.s32.totalorder %s42, 3
      %p210 = scmp.ne.s32.totalorder %s205, %s207
      %p211 = scmp.eq.s32.totalorder %s42, 0
      %p212 = por %p210, %p211
      %p213 = scmp.ne.s32.totalorder %s205, %s207
      %p214 = scmp.eq.s32.totalorder %s47, 3
      %p215 = por %p213, %p214
      %p216 = scmp.ne.s32.totalorder %s207, %s208
      %p217 = scmp.eq.s32.totalorder %s47, 0
      %p218 = por %p216, %p217
      %p219 = scmp.ne.s32.totalorder %s207, %s208
      %p220 = scmp.eq.s32.totalorder %s48, 3
      %p221 = por %p219, %p220
      %p223 = scmp.ne.s32.totalorder %s208, %s222
      %p224 = scmp.eq.s32.totalorder %s48, 0
      %p225 = por %p223, %p224
      %s227 = sadd.s32 %s226, 1
      %p230 = scmp.eq.s32.totalorder %s42, 3
      %p231 = scmp.ne.s32.totalorder %s226, %s228
      %p232 = scmp.eq.s32.totalorder %s42, 0
      %p233 = por %p231, %p232
      %p234 = scmp.ne.s32.totalorder %s226, %s228
      %p235 = scmp.eq.s32.totalorder %s47, 3
      %p236 = por %p234, %p235
      %p237 = scmp.ne.s32.totalorder %s228, %s229
      %p238 = scmp.eq.s32.totalorder %s47, 0
      %p239 = por %p237, %p238
      %p240 = scmp.ne.s32.totalorder %s228, %s229
      %p241 = scmp.eq.s32.totalorder %s48, 3
      %p242 = por %p240, %p241
      %p244 = scmp.ne.s32.totalorder %s229, %s243
      %p245 = scmp.eq.s32.totalorder %s48, 0
      %p246 = por %p244, %p245
      %s248 = sadd.s32 %s247, 1
      %p251 = scmp.eq.s32.totalorder %s42, 3
      %p252 = scmp.ne.s32.totalorder %s247, %s249
      %p253 = scmp.eq.s32.totalorder %s42, 0
      %p254 = por %p252, %p253
      %p255 = scmp.ne.s32.totalorder %s247, %s249
      %p256 = scmp.eq.s32.totalorder %s47, 3
      %p257 = por %p255, %p256
      %p258 = scmp.ne.s32.totalorder %s249, %s250
      %p259 = scmp.eq.s32.totalorder %s47, 0
      %p260 = por %p258, %p259
      %p261 = scmp.ne.s32.totalorder %s249, %s250
      %p262 = scmp.eq.s32.totalorder %s48, 3
      %p263 = por %p261, %p262
      %p265 = scmp.ne.s32.totalorder %s250, %s264
      %p266 = scmp.eq.s32.totalorder %s48, 0
      %p267 = por %p265, %p266
      %s269 = sadd.s32 %s268, 1
      %p272 = scmp.eq.s32.totalorder %s42, 3
      %p273 = scmp.ne.s32.totalorder %s268, %s270
      %p274 = scmp.eq.s32.totalorder %s42, 0
      %p275 = por %p273, %p274
      %p276 = scmp.ne.s32.totalorder %s268, %s270
      %p277 = scmp.eq.s32.totalorder %s47, 3
      %p278 = por %p276, %p277
      %p279 = scmp.ne.s32.totalorder %s270, %s271
      %p280 = scmp.eq.s32.totalorder %s47, 0
      %p281 = por %p279, %p280
      %p282 = scmp.ne.s32.totalorder %s270, %s271
      %p283 = scmp.eq.s32.totalorder %s48, 3
      %p284 = por %p282, %p283
      %p286 = scmp.ne.s32.totalorder %s271, %s285
      %p287 = scmp.eq.s32.totalorder %s48, 0
      %p288 = por %p286, %p287
      %s290 = sadd.s32 %s289, 1
      %p293 = scmp.eq.s32.totalorder %s42, 3
      %p294 = scmp.ne.s32.totalorder %s289, %s291
      %p295 = scmp.eq.s32.totalorder %s42, 0
      %p296 = por %p294, %p295
      %p297 = scmp.ne.s32.totalorder %s289, %s291
      %p298 = scmp.eq.s32.totalorder %s47, 3
      %p299 = por %p297, %p298
      %p300 = scmp.ne.s32.totalorder %s291, %s292
      %p301 = scmp.eq.s32.totalorder %s47, 0
      %p302 = por %p300, %p301
      %p303 = scmp.ne.s32.totalorder %s291, %s292
      %p304 = scmp.eq.s32.totalorder %s48, 3
      %p305 = por %p303, %p304
      %p307 = scmp.ne.s32.totalorder %s292, %s306
      %p308 = scmp.eq.s32.totalorder %s48, 0
      %p309 = por %p307, %p308
      %s311 = sadd.s32 %s310, 1
      %p314 = scmp.eq.s32.totalorder %s42, 3
      %p315 = scmp.ne.s32.totalorder %s310, %s312
      %p316 = scmp.eq.s32.totalorder %s42, 0
      %p317 = por %p315, %p316
      %p318 = scmp.ne.s32.totalorder %s310, %s312
      %p319 = scmp.eq.s32.totalorder %s47, 3
      %p320 = por %p318, %p319
      %p321 = scmp.ne.s32.totalorder %s312, %s313
      %p322 = scmp.eq.s32.totalorder %s47, 0
      %p323 = por %p321, %p322
      %p324 = scmp.ne.s32.totalorder %s312, %s313
      %p325 = scmp.eq.s32.totalorder %s48, 3
      %p326 = por %p324, %p325
      %p328 = scmp.ne.s32.totalorder %s313, %s327
      %p329 = scmp.eq.s32.totalorder %s48, 0
      %p330 = por %p328, %p329
      %s332 = sadd.s32 %s331, 1
      %p335 = scmp.eq.s32.totalorder %s42, 3
      %p336 = scmp.ne.s32.totalorder %s331, %s333
      %p337 = scmp.eq.s32.totalorder %s42, 0
      %p338 = por %p336, %p337
      %p339 = scmp.ne.s32.totalorder %s331, %s333
      %p340 = scmp.eq.s32.totalorder %s47, 3
      %p341 = por %p339, %p340
      %p342 = scmp.ne.s32.totalorder %s333, %s334
      %p343 = scmp.eq.s32.totalorder %s47, 0
      %p344 = por %p342, %p343
      %p345 = scmp.ne.s32.totalorder %s333, %s334
      %p346 = scmp.eq.s32.totalorder %s48, 3
      %p347 = por %p345, %p346
      %p349 = scmp.ne.s32.totalorder %s334, %s348
      %p350 = scmp.eq.s32.totalorder %s48, 0
      %p351 = por %p349, %p350
      %s353 = sadd.s32 %s352, 1
      %p356 = scmp.eq.s32.totalorder %s42, 3
      %p357 = scmp.ne.s32.totalorder %s352, %s354
      %p358 = scmp.eq.s32.totalorder %s42, 0
      %p359 = por %p357, %p358
      %p360 = scmp.ne.s32.totalorder %s352, %s354
      %p361 = scmp.eq.s32.totalorder %s47, 3
      %p362 = por %p360, %p361
      %p363 = scmp.ne.s32.totalorder %s354, %s355
      %p364 = scmp.eq.s32.totalorder %s47, 0
      %p365 = por %p363, %p364
      %p366 = scmp.ne.s32.totalorder %s354, %s355
      %p367 = scmp.eq.s32.totalorder %s48, 3
      %p368 = por %p366, %p367
      %p370 = scmp.ne.s32.totalorder %s355, %s369
      %p371 = scmp.eq.s32.totalorder %s48, 0
      %p372 = por %p370, %p371
      %s374 = sadd.s32 %s373, 1
      %p377 = scmp.eq.s32.totalorder %s42, 3
      %p378 = scmp.ne.s32.totalorder %s373, %s375
      %p379 = scmp.eq.s32.totalorder %s42, 0
      %p380 = por %p378, %p379
      %p381 = scmp.ne.s32.totalorder %s373, %s375
      %p382 = scmp.eq.s32.totalorder %s47, 3
      %p383 = por %p381, %p382
      %p384 = scmp.ne.s32.totalorder %s375, %s376
      %p385 = scmp.eq.s32.totalorder %s47, 0
      %p386 = por %p384, %p385
      %p387 = scmp.ne.s32.totalorder %s375, %s376
      %p388 = scmp.eq.s32.totalorder %s48, 3
      %p389 = por %p387, %p388
      %p391 = scmp.ne.s32.totalorder %s376, %s390
      %p392 = scmp.eq.s32.totalorder %s48, 0
      %p393 = por %p391, %p392
      %s395 = sadd.s32 %s394, 1
      %p398 = scmp.eq.s32.totalorder %s42, 3
      %p399 = scmp.ne.s32.totalorder %s394, %s396
      %p400 = scmp.eq.s32.totalorder %s42, 0
      %p401 = por %p399, %p400
      %p402 = scmp.ne.s32.totalorder %s394, %s396
      %p403 = scmp.eq.s32.totalorder %s47, 3
      %p404 = por %p402, %p403
      %p405 = scmp.ne.s32.totalorder %s396, %s397
      %p406 = scmp.eq.s32.totalorder %s47, 0
      %p407 = por %p405, %p406
      %p408 = scmp.ne.s32.totalorder %s396, %s397
      %p409 = scmp.eq.s32.totalorder %s48, 3
      %p410 = por %p408, %p409
      %p412 = scmp.ne.s32.totalorder %s397, %s411
      %p413 = scmp.eq.s32.totalorder %s48, 0
      %p414 = por %p412, %p413
      %s416 = sadd.s32 %s415, 1
      %p419 = scmp.eq.s32.totalorder %s42, 3
      %p420 = scmp.ne.s32.totalorder %s415, %s417
      %p421 = scmp.eq.s32.totalorder %s42, 0
      %p422 = por %p420, %p421
      %p423 = scmp.ne.s32.totalorder %s415, %s417
      %p424 = scmp.eq.s32.totalorder %s47, 3
      %p425 = por %p423, %p424
      %p426 = scmp.ne.s32.totalorder %s417, %s418
      %p427 = scmp.eq.s32.totalorder %s47, 0
      %p428 = por %p426, %p427
      %p429 = scmp.ne.s32.totalorder %s417, %s418
      %p430 = scmp.eq.s32.totalorder %s48, 3
      %p431 = por %p429, %p430
      %p433 = scmp.ne.s32.totalorder %s418, %s432
      %p434 = scmp.eq.s32.totalorder %s48, 0
      %p435 = por %p433, %p434
      %s437 = sadd.s32 %s436, 1
      %p440 = scmp.eq.s32.totalorder %s42, 3
      %p441 = scmp.ne.s32.totalorder %s436, %s438
      %p442 = scmp.eq.s32.totalorder %s42, 0
      %p443 = por %p441, %p442
      %p444 = scmp.ne.s32.totalorder %s436, %s438
      %p445 = scmp.eq.s32.totalorder %s47, 3
      %p446 = por %p444, %p445
      %p447 = scmp.ne.s32.totalorder %s438, %s439
      %p448 = scmp.eq.s32.totalorder %s47, 0
      %p449 = por %p447, %p448
      %p450 = scmp.ne.s32.totalorder %s438, %s439
      %p451 = scmp.eq.s32.totalorder %s48, 3
      %p452 = por %p450, %p451
      %p454 = scmp.ne.s32.totalorder %s439, %s453
      %p455 = scmp.eq.s32.totalorder %s48, 0
      %p456 = por %p454, %p455
      %s458 = sadd.s32 %s457, 1
      %p461 = scmp.eq.s32.totalorder %s42, 3
      %p462 = scmp.ne.s32.totalorder %s457, %s459
      %p463 = scmp.eq.s32.totalorder %s42, 0
      %p464 = por %p462, %p463
      %p465 = scmp.ne.s32.totalorder %s457, %s459
      %p466 = scmp.eq.s32.totalorder %s47, 3
      %p467 = por %p465, %p466
      %p468 = scmp.ne.s32.totalorder %s459, %s460
      %p469 = scmp.eq.s32.totalorder %s47, 0
      %p470 = por %p468, %p469
      %p471 = scmp.ne.s32.totalorder %s459, %s460
      %p472 = scmp.eq.s32.totalorder %s48, 3
      %p473 = por %p471, %p472
      %p475 = scmp.ne.s32.totalorder %s460, %s474
      %p476 = scmp.eq.s32.totalorder %s48, 0
      %p477 = por %p475, %p476
      %s478 = ssub.s32 %s49, %s61
      %s479 = ssub.s32 %s50, %s57
      %s480 = sor.u32 %s478, %s479
      %p481 = scmp.eq.s32.totalorder %s480, 0
      %s483 = sadd.s32 %s482, 1
      %s484 = scalar_select %p481, %s482, %s483
      %p487 = pneg %p481
      %p488 = scmp.eq.s32.totalorder %s42, 3
      %p489 = por %p487, %p488
      %p490 = scmp.ne.s32.totalorder %s482, %s485
      %p491 = scmp.eq.s32.totalorder %s42, 0
      %p492 = por %p490, %p491
      %p493 = scmp.ne.s32.totalorder %s482, %s485
      %p494 = scmp.eq.s32.totalorder %s47, 3
      %p495 = por %p493, %p494
      %p496 = scmp.ne.s32.totalorder %s485, %s486
      %p497 = scmp.eq.s32.totalorder %s47, 0
      %p498 = por %p496, %p497
      %p499 = scmp.ne.s32.totalorder %s485, %s486
      %p500 = scmp.eq.s32.totalorder %s48, 3
      %p501 = por %p499, %p500
      %p503 = scmp.ne.s32.totalorder %s486, %s502
      %p504 = scmp.eq.s32.totalorder %s48, 0
      %p505 = por %p503, %p504
      %s506 = ssub.s32 %s49, %s61
      %s507 = ssub.s32 %s50, %s57
      %s508 = sor.u32 %s506, %s507
      %p509 = scmp.eq.s32.totalorder %s508, 0
      %s511 = sadd.s32 %s510, 1
      %s512 = scalar_select %p509, %s510, %s511
      %p515 = pneg %p509
      %p516 = scmp.eq.s32.totalorder %s42, 3
      %p517 = por %p515, %p516
      %p518 = scmp.ne.s32.totalorder %s510, %s513
      %p519 = scmp.eq.s32.totalorder %s42, 0
      %p520 = por %p518, %p519
      %p521 = scmp.ne.s32.totalorder %s510, %s513
      %p522 = scmp.eq.s32.totalorder %s47, 3
      %p523 = por %p521, %p522
      %p524 = scmp.ne.s32.totalorder %s513, %s514
      %p525 = scmp.eq.s32.totalorder %s47, 0
      %p526 = por %p524, %p525
      %p527 = scmp.ne.s32.totalorder %s513, %s514
      %p528 = scmp.eq.s32.totalorder %s48, 3
      %p529 = por %p527, %p528
      %p531 = scmp.ne.s32.totalorder %s514, %s530
      %p532 = scmp.eq.s32.totalorder %s48, 0
      %p533 = por %p531, %p532
      %p534 = scmp.le.s32.totalorder 1, %s42
      %p535 = scmp.lt.s32.totalorder %s42, 5
      %p536 = pnand %p534, %p535
      %p537 = pneg %p536
      // Predicated region
      $region9: #{tpu_custom_call.1} parent=5 // pred_check
        _
      $region10: #{tpu_custom_call.1} parent=5 // pred_check_branch
        %539 = sbr.rel (%p536) target = $region12
      $region11: #{tpu_custom_call.1} parent=5 // pred_region
        %s540 = ssub.s32 %s42, 1
        // Predicated region
        $region13: #{tpu_custom_call.1} parent=11 // pred_check
          %p541 = pneg %p155
        $region14: #{tpu_custom_call.1} parent=11 // pred_check_branch
          %543 = sbr.rel (%p541) target = $region16
        $region15: #{tpu_custom_call.1} parent=11 // pred_region
          _
        $region16: #{tpu_custom_call.1} parent=11 // pred_fallthru
          _
        // Predicated region
        $region17: #{tpu_custom_call.1} parent=11 // pred_check
          %p544 = pneg %p176
        $region18: #{tpu_custom_call.1} parent=11 // pred_check_branch
          %546 = sbr.rel (%p544) target = $region20
        $region19: #{tpu_custom_call.1} parent=11 // pred_region
          _
        $region20: #{tpu_custom_call.1} parent=11 // pred_fallthru
          _
        // Predicated region
        $region21: #{tpu_custom_call.1} parent=11 // pred_check
          %p547 = pneg %p197
        $region22: #{tpu_custom_call.1} parent=11 // pred_check_branch
          %549 = sbr.rel (%p547) target = $region24
        $region23: #{tpu_custom_call.1} parent=11 // pred_region
          %s551 = ssub.s32 256, 256
          %552 = vsyncadd [#allocation6], %s551
          %s553 = sshll.u32 [#allocation7], 4
          %s554 = int_to_ptr.vmem [resolvable:$true] %s553
          %559 = dma.hbm_to_vmem [thread:$0]  %s5, 256, %s554, [#allocation6], 64, 64, 4
        $region24: #{tpu_custom_call.1} parent=11 // pred_fallthru
          _
        // Predicated region
        $region25: #{tpu_custom_call.1} parent=11 // pred_check
          %p560 = pneg %p218
        $region26: #{tpu_custom_call.1} parent=11 // pred_check_branch
          %562 = sbr.rel (%p560) target = $region28
        $region27: #{tpu_custom_call.1} parent=11 // pred_region
          %s564 = ssub.s32 16, 16
          %565 = vsyncadd [#allocation9], %s564
          %s567 = sshll.u32 [#allocation8], 4
          %s568 = int_to_ptr.vmem [resolvable:$true] %s567
          %570 = dma.hbm_to_vmem [thread:$0]  %s6, 16, %s568, [#allocation9]
        $region28: #{tpu_custom_call.1} parent=11 // pred_fallthru
          _
        // Predicated region
        $region29: #{tpu_custom_call.1} parent=11 // pred_check
          %p571 = pneg %p239
        $region30: #{tpu_custom_call.1} parent=11 // pred_check_branch
          %573 = sbr.rel (%p571) target = $region32
        $region31: #{tpu_custom_call.1} parent=11 // pred_region
          %s575 = ssub.s32 256, 256
          %576 = vsyncadd [#allocation9], %s575
          %s577 = sshll.u32 [#allocation10], 4
          %s578 = int_to_ptr.vmem [resolvable:$true] %s577
          %583 = dma.hbm_to_vmem [thread:$0]  %s7, 256, %s578, [#allocation9], 64, 64, 4
        $region32: #{tpu_custom_call.1} parent=11 // pred_fallthru
          _
        // Predicated region
        $region33: #{tpu_custom_call.1} parent=11 // pred_check
          %p584 = pneg %p260
        $region34: #{tpu_custom_call.1} parent=11 // pred_check_branch
          %586 = sbr.rel (%p584) target = $region36
        $region35: #{tpu_custom_call.1} parent=11 // pred_region
          %s588 = ssub.s32 16, 16
          %589 = vsyncadd [#allocation12], %s588
          %s591 = sshll.u32 [#allocation11], 4
          %s592 = int_to_ptr.vmem [resolvable:$true] %s591
          %594 = dma.hbm_to_vmem [thread:$0]  %s8, 16, %s592, [#allocation12]
        $region36: #{tpu_custom_call.1} parent=11 // pred_fallthru
          _
        // Predicated region
        $region37: #{tpu_custom_call.1} parent=11 // pred_check
          %p595 = pneg %p281
        $region38: #{tpu_custom_call.1} parent=11 // pred_check_branch
          %597 = sbr.rel (%p595) target = $region40
        $region39: #{tpu_custom_call.1} parent=11 // pred_region
          _
        $region40: #{tpu_custom_call.1} parent=11 // pred_fallthru
          _
        // Predicated region
        $region41: #{tpu_custom_call.1} parent=11 // pred_check
          %p598 = pneg %p302
        $region42: #{tpu_custom_call.1} parent=11 // pred_check_branch
          %600 = sbr.rel (%p598) target = $region44
        $region43: #{tpu_custom_call.1} parent=11 // pred_region
          %s602 = ssub.s32 16, 16
          %603 = vsyncadd [#allocation12], %s602
          %s605 = sshll.u32 [#allocation13], 4
          %s606 = int_to_ptr.vmem [resolvable:$true] %s605
          %608 = dma.hbm_to_vmem [thread:$0]  %s10, 16, %s606, [#allocation12]
        $region44: #{tpu_custom_call.1} parent=11 // pred_fallthru
          _
        // Predicated region
        $region45: #{tpu_custom_call.1} parent=11 // pred_check
          %p609 = pneg %p323
        $region46: #{tpu_custom_call.1} parent=11 // pred_check_branch
          %611 = sbr.rel (%p609) target = $region48
        $region47: #{tpu_custom_call.1} parent=11 // pred_region
          %s613 = ssub.s32 16, 16
          %614 = vsyncadd [#allocation15], %s613
          %s616 = sshll.u32 [#allocation14], 4
          %s617 = int_to_ptr.vmem [resolvable:$true] %s616
          %619 = dma.hbm_to_vmem [thread:$0]  %s11, 16, %s617, [#allocation15]
        $region48: #{tpu_custom_call.1} parent=11 // pred_fallthru
          _
        // Predicated region
        $region49: #{tpu_custom_call.1} parent=11 // pred_check
          %p620 = pneg %p344
        $region50: #{tpu_custom_call.1} parent=11 // pred_check_branch
          %622 = sbr.rel (%p620) target = $region52
        $region51: #{tpu_custom_call.1} parent=11 // pred_region
          %s624 = ssub.s32 16, 16
          %625 = vsyncadd [#allocation15], %s624
          %s627 = sshll.u32 [#allocation16], 4
          %s628 = int_to_ptr.vmem [resolvable:$true] %s627
          %630 = dma.hbm_to_vmem [thread:$0]  %s12, 16, %s628, [#allocation15]
        $region52: #{tpu_custom_call.1} parent=11 // pred_fallthru
          _
        // Predicated region
        $region53: #{tpu_custom_call.1} parent=11 // pred_check
          %p631 = pneg %p365
        $region54: #{tpu_custom_call.1} parent=11 // pred_check_branch
          %633 = sbr.rel (%p631) target = $region56
        $region55: #{tpu_custom_call.1} parent=11 // pred_region
          _
        $region56: #{tpu_custom_call.1} parent=11 // pred_fallthru
          _
        // Predicated region
        $region57: #{tpu_custom_call.1} parent=11 // pred_check
          %p634 = pneg %p386
        $region58: #{tpu_custom_call.1} parent=11 // pred_check_branch
          %636 = sbr.rel (%p634) target = $region60
        $region59: #{tpu_custom_call.1} parent=11 // pred_region
          _
        $region60: #{tpu_custom_call.1} parent=11 // pred_fallthru
          _
        // Predicated region
        $region61: #{tpu_custom_call.1} parent=11 // pred_check
          %p637 = pneg %p407
        $region62: #{tpu_custom_call.1} parent=11 // pred_check_branch
          %639 = sbr.rel (%p637) target = $region64
        $region63: #{tpu_custom_call.1} parent=11 // pred_region
          _
        $region64: #{tpu_custom_call.1} parent=11 // pred_fallthru
          _
        // Predicated region
        $region65: #{tpu_custom_call.1} parent=11 // pred_check
          %p640 = pneg %p428
        $region66: #{tpu_custom_call.1} parent=11 // pred_check_branch
          %642 = sbr.rel (%p640) target = $region68
        $region67: #{tpu_custom_call.1} parent=11 // pred_region
          _
        $region68: #{tpu_custom_call.1} parent=11 // pred_fallthru
          _
        // Predicated region
        $region69: #{tpu_custom_call.1} parent=11 // pred_check
          %p643 = pneg %p449
        $region70: #{tpu_custom_call.1} parent=11 // pred_check_branch
          %645 = sbr.rel (%p643) target = $region72
        $region71: #{tpu_custom_call.1} parent=11 // pred_region
          _
        $region72: #{tpu_custom_call.1} parent=11 // pred_fallthru
          _
        // Predicated region
        $region73: #{tpu_custom_call.1} parent=11 // pred_check
          %p646 = pneg %p470
        $region74: #{tpu_custom_call.1} parent=11 // pred_check_branch
          %648 = sbr.rel (%p646) target = $region76
        $region75: #{tpu_custom_call.1} parent=11 // pred_region
          _
        $region76: #{tpu_custom_call.1} parent=11 // pred_fallthru
          _
      $region12: #{tpu_custom_call.1} parent=5 // pred_fallthru
        _
      %p649 = scmp.lt.s32.totalorder %s42, 4
      // Predicated region
      $region77: #{tpu_custom_call.1} parent=5 // pred_check
        %p650 = pneg %p649
      $region78: #{tpu_custom_call.1} parent=5 // pred_check_branch
        %652 = sbr.rel (%p650) target = $region80
      $region79: #{tpu_custom_call.1} parent=5 // pred_region
        // Predicated region
        $region81: #{tpu_custom_call.1} parent=79 // pred_check
          %p653 = pneg %p76
        $region82: #{tpu_custom_call.1} parent=79 // pred_check_branch
          %655 = sbr.rel (%p653) target = $region84
        $region83: #{tpu_custom_call.1} parent=79 // pred_region
          %p656 = scmp.lt.s32.totalorder %s49, 1
          %s657 = scalar_select %p656, %s49, 1
          %p658 = scmp.lt.s32.totalorder %s50, 1
          %s659 = scalar_select %p658, %s50, 1
          %s660 = smul.addr %s657, 2
          %s661 = sadd.s32 %s659, %s660
          %s662 = smul.addr %s661, 8
          %s663 = scalar_lea.vmem %s0, %s662
        $region84: #{tpu_custom_call.1} parent=79 // pred_fallthru
          _
        // Predicated region
        $region85: #{tpu_custom_call.1} parent=79 // pred_check
          %p664 = pneg %p102
        $region86: #{tpu_custom_call.1} parent=79 // pred_check_branch
          %666 = sbr.rel (%p664) target = $region88
        $region87: #{tpu_custom_call.1} parent=79 // pred_region
          %s667 = sand.u32 %s92, 1
          %s668 = scalar_lea.sflag [#allocation3], %s667
          %s669 = sand.u32 %s92, 1
          %s670 = smul.addr %s669, 16
          %s671 = scalar_lea.vmem [#allocation2], %s670
          %s673 = ssub.s32 256, 256
          %674 = vsyncadd %s668, %s673
          %s675 = smul.addr %s49, 2
          %s676 = smul.addr %s675, 128
          %s677 = scalar_lea.hbm %s1, %s676
          %s678 = sshll.u32 %s671, 4
          %s679 = int_to_ptr.vmem [resolvable:$true] %s678
          %684 = dma.hbm_to_vmem [thread:$0]  %s677, 256, %s679, %s668, 128, 128, 8
        $region88: #{tpu_custom_call.1} parent=79 // pred_fallthru
          _
        // Predicated region
        $region89: #{tpu_custom_call.1} parent=79 // pred_check
          %p685 = pneg %p128
        $region90: #{tpu_custom_call.1} parent=79 // pred_check_branch
          %687 = sbr.rel (%p685) target = $region92
        $region91: #{tpu_custom_call.1} parent=79 // pred_region
          %s688 = sand.u32 %s42, 1
          %s689 = scalar_lea.sflag [#allocation6], %s688
          %s690 = sand.u32 %s118, 1
          %s691 = scalar_lea.vmem [#allocation5], %s690
          %s693 = ssub.s32 16, 16
          %694 = vsyncadd %s689, %s693
          %s695 = smul.addr %s49, 16
          %s696 = scalar_lea.hbm %s2, %s695
          %s698 = sshll.u32 %s691, 4
          %s699 = int_to_ptr.vmem [resolvable:$true] %s698
          %701 = dma.hbm_to_vmem [thread:$0]  %s696, 16, %s699, %s689
        $region92: #{tpu_custom_call.1} parent=79 // pred_fallthru
          _
      $region80: #{tpu_custom_call.1} parent=5 // pred_fallthru
        _
      %p702 = scmp.le.s32.totalorder 1, %s42
      %p703 = scmp.lt.s32.totalorder %s42, 5
      %p704 = pnand %p702, %p703
      %p705 = pneg %p704
      // Predicated region
      $region93: #{tpu_custom_call.1} parent=5 // pred_check
        _
      $region94: #{tpu_custom_call.1} parent=5 // pred_check_branch
        %707 = sbr.rel (%p704) target = $region96
      $region95: #{tpu_custom_call.1} parent=5 // pred_region
        %s708 = ssub.s32 %s42, 1
        %s709 = sand.u32 %s95, 1
        %s710 = scalar_lea.sflag [#allocation3], %s709
        %s711 = sand.u32 %s95, 1
        %s712 = smul.addr %s711, 16
        %s713 = scalar_lea.vmem [#allocation2], %s712
        // Predicated region
        $region97: #{tpu_custom_call.1} parent=95 // pred_check
          %p714 = pneg %p108
        $region98: #{tpu_custom_call.1} parent=95 // pred_check_branch
          %716 = sbr.rel (%p714) target = $region100
        $region99: #{tpu_custom_call.1} parent=95 // pred_region
          %717 = dma.done %s710, 256
        $region100: #{tpu_custom_call.1} parent=95 // pred_fallthru
          _
        %s718 = sand.u32 %s47, 1
        %s719 = scalar_lea.sflag [#allocation6], %s718
        %s720 = sand.u32 %s121, 1
        %s721 = scalar_lea.vmem [#allocation5], %s720
        // Predicated region
        $region101: #{tpu_custom_call.1} parent=95 // pred_check
          %p722 = pneg %p134
        $region102: #{tpu_custom_call.1} parent=95 // pred_check_branch
          %724 = sbr.rel (%p722) target = $region104
        $region103: #{tpu_custom_call.1} parent=95 // pred_region
          %725 = dma.done %s719, 16
        $region104: #{tpu_custom_call.1} parent=95 // pred_fallthru
          _
        // Predicated region
        $region105: #{tpu_custom_call.1} parent=95 // pred_check
          %p726 = pneg %p197
        $region106: #{tpu_custom_call.1} parent=95 // pred_check_branch
          %728 = sbr.rel (%p726) target = $region108
        $region107: #{tpu_custom_call.1} parent=95 // pred_region
          %729 = dma.done [#allocation6], 256
        $region108: #{tpu_custom_call.1} parent=95 // pred_fallthru
          _
        // Predicated region
        $region109: #{tpu_custom_call.1} parent=95 // pred_check
          %p730 = pneg %p218
        $region110: #{tpu_custom_call.1} parent=95 // pred_check_branch
          %732 = sbr.rel (%p730) target = $region112
        $region111: #{tpu_custom_call.1} parent=95 // pred_region
          %733 = dma.done [#allocation9], 16
        $region112: #{tpu_custom_call.1} parent=95 // pred_fallthru
          _
        // Predicated region
        $region113: #{tpu_custom_call.1} parent=95 // pred_check
          %p734 = pneg %p239
        $region114: #{tpu_custom_call.1} parent=95 // pred_check_branch
          %736 = sbr.rel (%p734) target = $region116
        $region115: #{tpu_custom_call.1} parent=95 // pred_region
          %737 = dma.done [#allocation9], 256
        $region116: #{tpu_custom_call.1} parent=95 // pred_fallthru
          _
        // Predicated region
        $region117: #{tpu_custom_call.1} parent=95 // pred_check
          %p738 = pneg %p260
        $region118: #{tpu_custom_call.1} parent=95 // pred_check_branch
          %740 = sbr.rel (%p738) target = $region120
        $region119: #{tpu_custom_call.1} parent=95 // pred_region
          %741 = dma.done [#allocation12], 16
        $region120: #{tpu_custom_call.1} parent=95 // pred_fallthru
          _
        // Predicated region
        $region121: #{tpu_custom_call.1} parent=95 // pred_check
          %p742 = pneg %p302
        $region122: #{tpu_custom_call.1} parent=95 // pred_check_branch
          %744 = sbr.rel (%p742) target = $region124
        $region123: #{tpu_custom_call.1} parent=95 // pred_region
          %745 = dma.done [#allocation12], 16
        $region124: #{tpu_custom_call.1} parent=95 // pred_fallthru
          _
        // Predicated region
        $region125: #{tpu_custom_call.1} parent=95 // pred_check
          %p746 = pneg %p323
        $region126: #{tpu_custom_call.1} parent=95 // pred_check_branch
          %748 = sbr.rel (%p746) target = $region128
        $region127: #{tpu_custom_call.1} parent=95 // pred_region
          %749 = dma.done [#allocation15], 16
        $region128: #{tpu_custom_call.1} parent=95 // pred_fallthru
          _
        // Predicated region
        $region129: #{tpu_custom_call.1} parent=95 // pred_check
          %p750 = pneg %p344
        $region130: #{tpu_custom_call.1} parent=95 // pred_check_branch
          %752 = sbr.rel (%p750) target = $region132
        $region131: #{tpu_custom_call.1} parent=95 // pred_region
          %753 = dma.done [#allocation15], 16
        $region132: #{tpu_custom_call.1} parent=95 // pred_fallthru
          _
        %p754 = scmp.lt.s32.totalorder %s51, 1
        %s755 = scalar_select %p754, %s51, 1
        %p756 = scmp.lt.s32.totalorder %s52, 1
        %s757 = scalar_select %p756, %s52, 1
        %s758 = smul.addr %s755, 2
        %s759 = sadd.s32 %s757, %s758
        %s760 = smul.addr %s759, 8
        %s761 = scalar_lea.vmem %s0, %s760
        %p762 = pneg %p82
        %p763 = pneg %p79
        %s764 = sand.u32 %s95, 1
        %s765 = scalar_lea.sflag [#allocation3], %s764
        %s766 = sand.u32 %s95, 1
        %s767 = smul.addr %s766, 16
        %s768 = scalar_lea.vmem [#allocation2], %s767
        %p769 = pneg %p108
        %p770 = pneg %p105
        %s771 = sand.u32 %s47, 1
        %s772 = scalar_lea.sflag [#allocation6], %s771
        %s773 = sand.u32 %s121, 1
        %s774 = scalar_lea.vmem [#allocation5], %s773
        %p775 = pneg %p134
        %p776 = pneg %p131
        %p777 = pneg %p155
        %p778 = pneg %p152
        %p779 = pneg %p176
        %p780 = pneg %p173
        %p781 = pneg %p197
        %p782 = pneg %p194
        %p783 = pneg %p218
        %p784 = pneg %p215
        %p785 = pneg %p239
        %p786 = pneg %p236
        %p787 = pneg %p260
        %p788 = pneg %p257
        %p789 = pneg %p281
        %p790 = pneg %p278
        %p791 = pneg %p302
        %p792 = pneg %p299
        %p793 = pneg %p323
        %p794 = pneg %p320
        %p795 = pneg %p344
        %p796 = pneg %p341
        %p797 = pneg %p365
        %p798 = pneg %p362
        %p799 = pneg %p386
        %p800 = pneg %p383
        %p801 = pneg %p407
        %p802 = pneg %p404
        %p803 = pneg %p428
        %p804 = pneg %p425
        %p805 = pneg %p449
        %p806 = pneg %p446
        %p807 = pneg %p470
        %p808 = pneg %p467
        %p809 = pneg %p498
        %p810 = pneg %p495
        %s811 = sand.u32 %s485, 1
        %s812 = scalar_lea.sflag [#allocation4], %s811
        %s813 = sand.u32 %s485, 1
        %s814 = smul.addr %s813, 8
        %s815 = scalar_lea.vmem [#allocation17], %s814
        %p816 = pneg %p526
        %p817 = pneg %p523
        %s818 = sand.u32 %s513, 1
        %s819 = scalar_lea.sflag [#allocation19], %s818
        %s820 = sand.u32 %s513, 1
        %s821 = smul.addr %s820, 32
        %s822 = scalar_lea.vmem [#allocation18], %s821
        %p823 = scmp.lt.s32.totalorder %s51, 1
        %s824 = scalar_select %p823, %s51, 1
        %p825 = scmp.lt.s32.totalorder %s52, 1
        %s826 = scalar_select %p825, %s52, 1
        %s827 = smul.addr %s824, 2
        %s828 = sadd.s32 %s826, %s827
        %s829 = smul.addr %s828, 8
        %s830 = scalar_lea.vmem %s0, %s829
        %v832 = vld [vmem:[%s830] sm:$0xff]
        %v833 = vld [vmem:[%s713] sm:$0xff]
        %v834 = vld [vmem:[%s713 + $0x8] sm:$0xff]
        %v835 = vld [vmem:[%s721] sm:$0x1]
        %v836 = vsub.f32 1.0, %v835
        %v837 = vmul.f32 %v836, -1e+09
        %v838 = vpack.c.bf16 %v832, %v832
        %v839 = vpack.c.bf16 %v834, %v833
        %v840 = vld [vmem:[%s3] sm:$0xf]
        %v841 = vld [vmem:[%s3 + $0x4] sm:$0xf]
        %v842 = vld [vmem:[%s3 + $0x8] sm:$0xf]
        %v843 = vld [vmem:[%s3 + $0xc] sm:$0xf]
        %v844 = vld [vmem:[%s4] sm:$0x1]
        %v846 = vlaneseq
        %v847 = vshrl.u32 %v846, 7
        %v848 = vsub.s32 0, %v847
        %v849 = vrot.slane %v844, %v848
        %v855 = vunpack.c.l.b16 %v840
        %v856 = vunpack.c.l.b16 %v841
        %v857 = vunpack.c.l.b16 %v842
        %v858 = vunpack.c.l.b16 %v843
        %v859 = vpack.c.b16 %v856, %v855
        %v860 = vpack.c.b16 %v858, %v857
        %vm863 = vcmask 261120
        %v865 = vsel %vm863, %v838, 0
        %867 = vmatprep.subr.bf16.mxu0 0
        %868 = vmatpush1.bf16.msra.mxu0 %v859
        %869 = vmatprep.subr.bf16.mxu0 0
        %870 = vmatpush1.bf16.msra.mxu0 %v860
        %871 = vmatprep.subr.bf16.mxu0 0
        %872 = vmatpush1.bf16.msra.mxu0 0
        %873 = vmatprep.subr.bf16.mxu0 0
        %874 = vmatpush1.bf16.msra.mxu0 0
        %875 = vmatprep.subr.bf16.mxu0 0
        %876 = vmatpush1.bf16.msra.mxu0 0
        %877 = vmatprep.subr.bf16.mxu0 0
        %878 = vmatpush1.bf16.msra.mxu0 0
        %879 = vmatprep.subr.bf16.mxu0 0
        %880 = vmatpush1.bf16.msra.mxu0 0
        %881 = vmatprep.subr.bf16.mxu0 0
        %882 = vmatpush1.bf16.msra.mxu0 0
        %883 = vmatprep.subr.bf16.mxu0 0
        %884 = vmatpush1.bf16.msra.mxu0 0
        %885 = vmatprep.subr.bf16.mxu0 0
        %886 = vmatpush1.bf16.msra.mxu0 0
        %887 = vmatprep.subr.bf16.mxu0 0
        %888 = vmatpush1.bf16.msra.mxu0 0
        %889 = vmatprep.subr.bf16.mxu0 0
        %890 = vmatpush1.bf16.msra.mxu0 0
        %891 = vmatprep.subr.bf16.mxu0 0
        %892 = vmatpush1.bf16.msra.mxu0 0
        %893 = vmatprep.subr.bf16.mxu0 0
        %894 = vmatpush1.bf16.msra.mxu0 0
        %895 = vmatprep.subr.bf16.mxu0 0
        %896 = vmatpush1.bf16.msra.mxu0 0
        %897 = vmatprep.subr.bf16.mxu0 0
        %898 = vmatpush1.bf16.msra.mxu0 0
        %899 = vmatprep.mubr.bf16.mxu0 0
        %900 = vmatmul.mubr.bf16.gmra.mrb[0].mxu0 %v865
        %v901 = vpop.f32.mrb[0].mxu0
        %v902 = vadd.f32 %v849, %v901
        %v903 = vpop.f32.mrb[0].mxu0
        %v904 = vpop.f32.mrb[0].mxu0
        %v905 = vpop.f32.mrb[0].mxu0
        %906 = vdwg.mxu0
        %v907 = vmul.f32 %v902, 0.35355338
        %v908 = vld [vmem:[#allocation7] sm:$0xf]
        %v909 = vld [vmem:[#allocation7 + $0x4] sm:$0xf]
        %v910 = vld [vmem:[#allocation7 + $0x8] sm:$0xf]
        %v911 = vld [vmem:[#allocation7 + $0xc] sm:$0xf]
        %v912 = vld [vmem:[#allocation8] sm:$0x1]
        %v914 = vlaneseq
        %v915 = vshrl.u32 %v914, 7
        %v916 = vsub.s32 0, %v915
        %v917 = vrot.slane %v912, %v916
        %v923 = vunpack.c.l.b16 %v908
        %v924 = vunpack.c.l.b16 %v909
        %v925 = vunpack.c.l.b16 %v910
        %v926 = vunpack.c.l.b16 %v911
        %v927 = vpack.c.b16 %v924, %v923
        %v928 = vpack.c.b16 %v926, %v925
        %v932 = vsel %vm863, %v839, 0
        %934 = vmatprep.subr.bf16.mxu0 0
        %935 = vmatpush1.bf16.msra.mxu0 %v927
        %936 = vmatprep.subr.bf16.mxu0 0
        %937 = vmatpush1.bf16.msra.mxu0 %v928
        %938 = vmatprep.subr.bf16.mxu0 0
        %939 = vmatpush1.bf16.msra.mxu0 0
        %940 = vmatprep.subr.bf16.mxu0 0
        %941 = vmatpush1.bf16.msra.mxu0 0
        %942 = vmatprep.subr.bf16.mxu0 0
        %943 = vmatpush1.bf16.msra.mxu0 0
        %944 = vmatprep.subr.bf16.mxu0 0
        %945 = vmatpush1.bf16.msra.mxu0 0
        %946 = vmatprep.subr.bf16.mxu0 0
        %947 = vmatpush1.bf16.msra.mxu0 0
        %948 = vmatprep.subr.bf16.mxu0 0
        %949 = vmatpush1.bf16.msra.mxu0 0
        %950 = vmatprep.subr.bf16.mxu0 0
        %951 = vmatpush1.bf16.msra.mxu0 0
        %952 = vmatprep.subr.bf16.mxu0 0
        %953 = vmatpush1.bf16.msra.mxu0 0
        %954 = vmatprep.subr.bf16.mxu0 0
        %955 = vmatpush1.bf16.msra.mxu0 0
        %956 = vmatprep.subr.bf16.mxu0 0
        %957 = vmatpush1.bf16.msra.mxu0 0
        %958 = vmatprep.subr.bf16.mxu0 0
        %959 = vmatpush1.bf16.msra.mxu0 0
        %960 = vmatprep.subr.bf16.mxu0 0
        %961 = vmatpush1.bf16.msra.mxu0 0
        %962 = vmatprep.subr.bf16.mxu0 0
        %963 = vmatpush1.bf16.msra.mxu0 0
        %964 = vmatprep.subr.bf16.mxu0 0
        %965 = vmatpush1.bf16.msra.mxu0 0
        %966 = vmatprep.mubr.bf16.mxu0 0
        %967 = vmatmul.mubr.bf16.gmra.mrb[0].mxu0 %v932
        %v968 = vpop.f32.mrb[0].mxu0
        %v969 = vadd.f32 %v917, %v968
        %v970 = vpop.f32.mrb[0].mxu0
        %v971 = vpop.f32.mrb[0].mxu0
        %v972 = vadd.f32 %v917, %v971
        %v973 = vpop.f32.mrb[0].mxu0
        %974 = vdwg.mxu0
        %v975 = vld [vmem:[#allocation10] sm:$0xf]
        %v976 = vld [vmem:[#allocation10 + $0x4] sm:$0xf]
        %v977 = vld [vmem:[#allocation10 + $0x8] sm:$0xf]
        %v978 = vld [vmem:[#allocation10 + $0xc] sm:$0xf]
        %v979 = vld [vmem:[#allocation11] sm:$0x1]
        %v981 = vlaneseq
        %v982 = vshrl.u32 %v981, 7
        %v983 = vsub.s32 0, %v982
        %v984 = vrot.slane %v979, %v983
        %v990 = vunpack.c.l.b16 %v975
        %v991 = vunpack.c.l.b16 %v976
        %v992 = vunpack.c.l.b16 %v977
        %v993 = vunpack.c.l.b16 %v978
        %v994 = vpack.c.b16 %v991, %v990
        %v995 = vpack.c.b16 %v993, %v992
        %998 = vmatprep.subr.bf16.mxu0 0
        %999 = vmatpush1.bf16.msra.mxu0 %v994
        %1000 = vmatprep.subr.bf16.mxu0 0
        %1001 = vmatpush1.bf16.msra.mxu0 %v995
        %1002 = vmatprep.subr.bf16.mxu0 0
        %1003 = vmatpush1.bf16.msra.mxu0 0
        %1004 = vmatprep.subr.bf16.mxu0 0
        %1005 = vmatpush1.bf16.msra.mxu0 0
        %1006 = vmatprep.subr.bf16.mxu0 0
        %1007 = vmatpush1.bf16.msra.mxu0 0
        %1008 = vmatprep.subr.bf16.mxu0 0
        %1009 = vmatpush1.bf16.msra.mxu0 0
        %1010 = vmatprep.subr.bf16.mxu0 0
        %1011 = vmatpush1.bf16.msra.mxu0 0
        %1012 = vmatprep.subr.bf16.mxu0 0
        %1013 = vmatpush1.bf16.msra.mxu0 0
        %1014 = vmatprep.subr.bf16.mxu0 0
        %1015 = vmatpush1.bf16.msra.mxu0 0
        %1016 = vmatprep.subr.bf16.mxu0 0
        %1017 = vmatpush1.bf16.msra.mxu0 0
        %1018 = vmatprep.subr.bf16.mxu0 0
        %1019 = vmatpush1.bf16.msra.mxu0 0
        %1020 = vmatprep.subr.bf16.mxu0 0
        %1021 = vmatpush1.bf16.msra.mxu0 0
        %1022 = vmatprep.subr.bf16.mxu0 0
        %1023 = vmatpush1.bf16.msra.mxu0 0
        %1024 = vmatprep.subr.bf16.mxu0 0
        %1025 = vmatpush1.bf16.msra.mxu0 0
        %1026 = vmatprep.subr.bf16.mxu0 0
        %1027 = vmatpush1.bf16.msra.mxu0 0
        %1028 = vmatprep.subr.bf16.mxu0 0
        %1029 = vmatpush1.bf16.msra.mxu0 0
        %1030 = vmatprep.mubr.bf16.mxu0 0
        %1031 = vmatmul.mubr.bf16.gmra.mrb[0].mxu0 %v932
        %v1032 = vpop.f32.mrb[0].mxu0
        %v1033 = vadd.f32 %v984, %v1032
        %v1034 = vpop.f32.mrb[0].mxu0
        %v1035 = vpop.f32.mrb[0].mxu0
        %v1036 = vadd.f32 %v984, %v1035
        %v1037 = vpop.f32.mrb[0].mxu0
        %1038 = vdwg.mxu0
        %1040 = vrot.lane.b32.xlu0 %v907, 120
        %v1041 = vpop.permute.xlu0 %1040
        %1043 = vrot.lane.b32.xlu0 %v907, 112
        %v1044 = vpop.permute.xlu0 %1043
        %1046 = vrot.lane.b32.xlu0 %v907, 104
        %v1047 = vpop.permute.xlu0 %1046
        %v1049 = vcombine.low %v907, %v1044
        %v1050 = vcombine.high %v907, %v1044
        %v1052 = vunpack.c.l.s4 1983009808
        %v1053 = vunpack.c.0.s8 %v1052
        %v1054 = vlaneseq
        %v1055 = vshrl.u32 %v1054, 7
        %v1056 = vsub.s32 %v1053, %v1055
        %v1057 = vrot.slane %v1049, %v1056
        %v1059 = vunpack.c.l.s4 1983009808
        %v1060 = vunpack.c.0.s8 %v1059
        %v1061 = vlaneseq
        %v1062 = vshrl.u32 %v1061, 7
        %v1063 = vsub.s32 %v1060, %v1062
        %v1064 = vrot.slane %v1050, %v1063
        %v1065 = vcombine.low %v1041, %v1047
        %v1066 = vcombine.high %v1041, %v1047
        %v1068 = vunpack.c.l.s4 1983009808
        %v1069 = vunpack.c.0.s8 %v1068
        %v1070 = vlaneseq
        %v1071 = vshrl.u32 %v1070, 7
        %v1072 = vsub.s32 %v1069, %v1071
        %v1073 = vrot.slane %v1065, %v1072
        %v1075 = vunpack.c.l.s4 1983009808
        %v1076 = vunpack.c.0.s8 %v1075
        %v1077 = vlaneseq
        %v1078 = vshrl.u32 %v1077, 7
        %v1079 = vsub.s32 %v1076, %v1078
        %v1080 = vrot.slane %v1066, %v1079
        %v1081 = vcombine.low %v1057, %v1073
        %v1082 = vcombine.high %v1057, %v1073
        %v1084 = vunpack.c.l.s4 1934713408
        %v1085 = vunpack.c.0.s8 %v1084
        %v1086 = vlaneseq
        %v1087 = vshrl.u32 %v1086, 7
        %v1088 = vsub.s32 %v1085, %v1087
        %v1089 = vrot.slane %v1081, %v1088
        %v1091 = vunpack.c.l.s4 1934713408
        %v1092 = vunpack.c.0.s8 %v1091
        %v1093 = vlaneseq
        %v1094 = vshrl.u32 %v1093, 7
        %v1095 = vsub.s32 %v1092, %v1094
        %v1096 = vrot.slane %v1082, %v1095
        %v1097 = vcombine.low %v1064, %v1080
        %v1098 = vcombine.high %v1064, %v1080
        %v1100 = vunpack.c.l.s4 1934713408
        %v1101 = vunpack.c.0.s8 %v1100
        %v1102 = vlaneseq
        %v1103 = vshrl.u32 %v1102, 7
        %v1104 = vsub.s32 %v1101, %v1103
        %v1105 = vrot.slane %v1097, %v1104
        %v1107 = vunpack.c.l.s4 1934713408
        %v1108 = vunpack.c.0.s8 %v1107
        %v1109 = vlaneseq
        %v1110 = vshrl.u32 %v1109, 7
        %v1111 = vsub.s32 %v1108, %v1110
        %v1112 = vrot.slane %v1098, %v1111
        %v1113 = vcombine.high %v1089, 0.0
        %v1114 = vcombine.high %v1096, 0.0
        %v1115 = vcombine.high %v1105, 0.0
        %v1116 = vcombine.high %v1112, 0.0
        %v1117 = vcombine.low %v1089, %v1096
        %v1119 = vunpack.c.l.s4 1983009808
        %v1120 = vunpack.c.0.s8 %v1119
        %v1121 = vlaneseq
        %v1122 = vshrl.u32 %v1121, 7
        %v1123 = vsub.s32 %v1120, %v1122
        %v1124 = vrot.slane %v1117, %v1123
        %v1125 = vcombine.low %v1113, %v1114
        %v1127 = vunpack.c.l.s4 1983009808
        %v1128 = vunpack.c.0.s8 %v1127
        %v1129 = vlaneseq
        %v1130 = vshrl.u32 %v1129, 7
        %v1131 = vsub.s32 %v1128, %v1130
        %v1132 = vrot.slane %v1125, %v1131
        %v1133 = vcombine.low %v1105, %v1112
        %v1135 = vunpack.c.l.s4 1983009808
        %v1136 = vunpack.c.0.s8 %v1135
        %v1137 = vlaneseq
        %v1138 = vshrl.u32 %v1137, 7
        %v1139 = vsub.s32 %v1136, %v1138
        %v1140 = vrot.slane %v1133, %v1139
        %v1141 = vcombine.low %v1115, %v1116
        %v1143 = vunpack.c.l.s4 1983009808
        %v1144 = vunpack.c.0.s8 %v1143
        %v1145 = vlaneseq
        %v1146 = vshrl.u32 %v1145, 7
        %v1147 = vsub.s32 %v1144, %v1146
        %v1148 = vrot.slane %v1141, %v1147
        %v1149 = vcombine.low %v1124, %v1132
        %v1150 = vcombine.high %v1124, %v1132
        %v1152 = vunpack.c.l.s4 1934713408
        %v1153 = vunpack.c.0.s8 %v1152
        %v1154 = vlaneseq
        %v1155 = vshrl.u32 %v1154, 7
        %v1156 = vsub.s32 %v1153, %v1155
        %v1157 = vrot.slane %v1149, %v1156
        %v1159 = vunpack.c.l.s4 1934713408
        %v1160 = vunpack.c.0.s8 %v1159
        %v1161 = vlaneseq
        %v1162 = vshrl.u32 %v1161, 7
        %v1163 = vsub.s32 %v1160, %v1162
        %v1164 = vrot.slane %v1150, %v1163
        %v1165 = vcombine.low %v1140, %v1148
        %v1166 = vcombine.high %v1140, %v1148
        %v1168 = vunpack.c.l.s4 1934713408
        %v1169 = vunpack.c.0.s8 %v1168
        %v1170 = vlaneseq
        %v1171 = vshrl.u32 %v1170, 7
        %v1172 = vsub.s32 %v1169, %v1171
        %v1173 = vrot.slane %v1165, %v1172
        %v1175 = vunpack.c.l.s4 1934713408
        %v1176 = vunpack.c.0.s8 %v1175
        %v1177 = vlaneseq
        %v1178 = vshrl.u32 %v1177, 7
        %v1179 = vsub.s32 %v1176, %v1178
        %v1180 = vrot.slane %v1166, %v1179
        %v1181 = vcombine.low %v1157, %v1173
        %v1182 = vcombine.high %v1157, %v1173
        %v1183 = vcombine.low %v1164, %v1180
        %v1184 = vcombine.high %v1164, %v1180
        %v1185 = vpack.c.bf16 %v1181, %v1181
        %v1186 = vpack.c.bf16 %v1182, %v1182
        %v1187 = vpack.c.bf16 %v1183, %v1183
        %v1188 = vpack.c.bf16 %v1184, %v1184
        %1191 = vrot.lane.b32.xlu0 %v969, 120
        %v1192 = vpop.permute.xlu0 %1191
        %1193 = vrot.lane.b32.xlu0 %v972, 120
        %v1194 = vpop.permute.xlu0 %1193
        %1197 = vrot.lane.b32.xlu0 %v969, 112
        %v1198 = vpop.permute.xlu0 %1197
        %1199 = vrot.lane.b32.xlu0 %v972, 112
        %v1200 = vpop.permute.xlu0 %1199
        %1203 = vrot.lane.b32.xlu0 %v969, 104
        %v1204 = vpop.permute.xlu0 %1203
        %1205 = vrot.lane.b32.xlu0 %v972, 104
        %v1206 = vpop.permute.xlu0 %1205
        %v1209 = vcombine.low %v969, %v1198
        %v1210 = vcombine.high %v969, %v1198
        %v1212 = vunpack.c.l.s4 1983009808
        %v1213 = vunpack.c.0.s8 %v1212
        %v1214 = vlaneseq
        %v1215 = vshrl.u32 %v1214, 7
        %v1216 = vsub.s32 %v1213, %v1215
        %v1217 = vrot.slane %v1209, %v1216
        %v1219 = vunpack.c.l.s4 1983009808
        %v1220 = vunpack.c.0.s8 %v1219
        %v1221 = vlaneseq
        %v1222 = vshrl.u32 %v1221, 7
        %v1223 = vsub.s32 %v1220, %v1222
        %v1224 = vrot.slane %v1210, %v1223
        %v1225 = vcombine.low %v1192, %v1204
        %v1226 = vcombine.high %v1192, %v1204
        %v1228 = vunpack.c.l.s4 1983009808
        %v1229 = vunpack.c.0.s8 %v1228
        %v1230 = vlaneseq
        %v1231 = vshrl.u32 %v1230, 7
        %v1232 = vsub.s32 %v1229, %v1231
        %v1233 = vrot.slane %v1225, %v1232
        %v1235 = vunpack.c.l.s4 1983009808
        %v1236 = vunpack.c.0.s8 %v1235
        %v1237 = vlaneseq
        %v1238 = vshrl.u32 %v1237, 7
        %v1239 = vsub.s32 %v1236, %v1238
        %v1240 = vrot.slane %v1226, %v1239
        %v1241 = vcombine.low %v1217, %v1233
        %v1242 = vcombine.high %v1217, %v1233
        %v1244 = vunpack.c.l.s4 1934713408
        %v1245 = vunpack.c.0.s8 %v1244
        %v1246 = vlaneseq
        %v1247 = vshrl.u32 %v1246, 7
        %v1248 = vsub.s32 %v1245, %v1247
        %v1249 = vrot.slane %v1241, %v1248
        %v1251 = vunpack.c.l.s4 1934713408
        %v1252 = vunpack.c.0.s8 %v1251
        %v1253 = vlaneseq
        %v1254 = vshrl.u32 %v1253, 7
        %v1255 = vsub.s32 %v1252, %v1254
        %v1256 = vrot.slane %v1242, %v1255
        %v1257 = vcombine.low %v1224, %v1240
        %v1258 = vcombine.high %v1224, %v1240
        %v1260 = vunpack.c.l.s4 1934713408
        %v1261 = vunpack.c.0.s8 %v1260
        %v1262 = vlaneseq
        %v1263 = vshrl.u32 %v1262, 7
        %v1264 = vsub.s32 %v1261, %v1263
        %v1265 = vrot.slane %v1257, %v1264
        %v1267 = vunpack.c.l.s4 1934713408
        %v1268 = vunpack.c.0.s8 %v1267
        %v1269 = vlaneseq
        %v1270 = vshrl.u32 %v1269, 7
        %v1271 = vsub.s32 %v1268, %v1270
        %v1272 = vrot.slane %v1258, %v1271
        %v1273 = vcombine.high %v1249, 0.0
        %v1274 = vcombine.high %v1256, 0.0
        %v1275 = vcombine.high %v1265, 0.0
        %v1276 = vcombine.high %v1272, 0.0
        %v1277 = vcombine.low %v972, %v1200
        %v1278 = vcombine.high %v972, %v1200
        %v1280 = vunpack.c.l.s4 1983009808
        %v1281 = vunpack.c.0.s8 %v1280
        %v1282 = vlaneseq
        %v1283 = vshrl.u32 %v1282, 7
        %v1284 = vsub.s32 %v1281, %v1283
        %v1285 = vrot.slane %v1277, %v1284
        %v1287 = vunpack.c.l.s4 1983009808
        %v1288 = vunpack.c.0.s8 %v1287
        %v1289 = vlaneseq
        %v1290 = vshrl.u32 %v1289, 7
        %v1291 = vsub.s32 %v1288, %v1290
        %v1292 = vrot.slane %v1278, %v1291
        %v1293 = vcombine.low %v1194, %v1206
        %v1294 = vcombine.high %v1194, %v1206
        %v1296 = vunpack.c.l.s4 1983009808
        %v1297 = vunpack.c.0.s8 %v1296
        %v1298 = vlaneseq
        %v1299 = vshrl.u32 %v1298, 7
        %v1300 = vsub.s32 %v1297, %v1299
        %v1301 = vrot.slane %v1293, %v1300
        %v1303 = vunpack.c.l.s4 1983009808
        %v1304 = vunpack.c.0.s8 %v1303
        %v1305 = vlaneseq
        %v1306 = vshrl.u32 %v1305, 7
        %v1307 = vsub.s32 %v1304, %v1306
        %v1308 = vrot.slane %v1294, %v1307
        %v1309 = vcombine.low %v1285, %v1301
        %v1310 = vcombine.high %v1285, %v1301
        %v1312 = vunpack.c.l.s4 1934713408
        %v1313 = vunpack.c.0.s8 %v1312
        %v1314 = vlaneseq
        %v1315 = vshrl.u32 %v1314, 7
        %v1316 = vsub.s32 %v1313, %v1315
        %v1317 = vrot.slane %v1309, %v1316
        %v1319 = vunpack.c.l.s4 1934713408
        %v1320 = vunpack.c.0.s8 %v1319
        %v1321 = vlaneseq
        %v1322 = vshrl.u32 %v1321, 7
        %v1323 = vsub.s32 %v1320, %v1322
        %v1324 = vrot.slane %v1310, %v1323
        %v1325 = vcombine.low %v1292, %v1308
        %v1326 = vcombine.high %v1292, %v1308
        %v1328 = vunpack.c.l.s4 1934713408
        %v1329 = vunpack.c.0.s8 %v1328
        %v1330 = vlaneseq
        %v1331 = vshrl.u32 %v1330, 7
        %v1332 = vsub.s32 %v1329, %v1331
        %v1333 = vrot.slane %v1325, %v1332
        %v1335 = vunpack.c.l.s4 1934713408
        %v1336 = vunpack.c.0.s8 %v1335
        %v1337 = vlaneseq
        %v1338 = vshrl.u32 %v1337, 7
        %v1339 = vsub.s32 %v1336, %v1338
        %v1340 = vrot.slane %v1326, %v1339
        %v1341 = vcombine.high %v1317, 0.0
        %v1342 = vcombine.high %v1324, 0.0
        %v1343 = vcombine.high %v1333, 0.0
        %v1344 = vcombine.high %v1340, 0.0
        %v1345 = vcombine.low %v1249, %v1256
        %v1347 = vunpack.c.l.s4 1983009808
        %v1348 = vunpack.c.0.s8 %v1347
        %v1349 = vlaneseq
        %v1350 = vshrl.u32 %v1349, 7
        %v1351 = vsub.s32 %v1348, %v1350
        %v1352 = vrot.slane %v1345, %v1351
        %v1353 = vcombine.low %v1273, %v1274
        %v1355 = vunpack.c.l.s4 1983009808
        %v1356 = vunpack.c.0.s8 %v1355
        %v1357 = vlaneseq
        %v1358 = vshrl.u32 %v1357, 7
        %v1359 = vsub.s32 %v1356, %v1358
        %v1360 = vrot.slane %v1353, %v1359
        %v1361 = vcombine.low %v1265, %v1272
        %v1363 = vunpack.c.l.s4 1983009808
        %v1364 = vunpack.c.0.s8 %v1363
        %v1365 = vlaneseq
        %v1366 = vshrl.u32 %v1365, 7
        %v1367 = vsub.s32 %v1364, %v1366
        %v1368 = vrot.slane %v1361, %v1367
        %v1369 = vcombine.low %v1275, %v1276
        %v1371 = vunpack.c.l.s4 1983009808
        %v1372 = vunpack.c.0.s8 %v1371
        %v1373 = vlaneseq
        %v1374 = vshrl.u32 %v1373, 7
        %v1375 = vsub.s32 %v1372, %v1374
        %v1376 = vrot.slane %v1369, %v1375
        %v1377 = vcombine.low %v1352, %v1360
        %v1378 = vcombine.high %v1352, %v1360
        %v1380 = vunpack.c.l.s4 1934713408
        %v1381 = vunpack.c.0.s8 %v1380
        %v1382 = vlaneseq
        %v1383 = vshrl.u32 %v1382, 7
        %v1384 = vsub.s32 %v1381, %v1383
        %v1385 = vrot.slane %v1377, %v1384
        %v1387 = vunpack.c.l.s4 1934713408
        %v1388 = vunpack.c.0.s8 %v1387
        %v1389 = vlaneseq
        %v1390 = vshrl.u32 %v1389, 7
        %v1391 = vsub.s32 %v1388, %v1390
        %v1392 = vrot.slane %v1378, %v1391
        %v1393 = vcombine.low %v1368, %v1376
        %v1394 = vcombine.high %v1368, %v1376
        %v1396 = vunpack.c.l.s4 1934713408
        %v1397 = vunpack.c.0.s8 %v1396
        %v1398 = vlaneseq
        %v1399 = vshrl.u32 %v1398, 7
        %v1400 = vsub.s32 %v1397, %v1399
        %v1401 = vrot.slane %v1393, %v1400
        %v1403 = vunpack.c.l.s4 1934713408
        %v1404 = vunpack.c.0.s8 %v1403
        %v1405 = vlaneseq
        %v1406 = vshrl.u32 %v1405, 7
        %v1407 = vsub.s32 %v1404, %v1406
        %v1408 = vrot.slane %v1394, %v1407
        %v1409 = vcombine.low %v1385, %v1401
        %v1410 = vcombine.high %v1385, %v1401
        %v1411 = vcombine.low %v1392, %v1408
        %v1412 = vcombine.high %v1392, %v1408
        %v1413 = vcombine.low %v1317, %v1324
        %v1415 = vunpack.c.l.s4 1983009808
        %v1416 = vunpack.c.0.s8 %v1415
        %v1417 = vlaneseq
        %v1418 = vshrl.u32 %v1417, 7
        %v1419 = vsub.s32 %v1416, %v1418
        %v1420 = vrot.slane %v1413, %v1419
        %v1421 = vcombine.low %v1341, %v1342
        %v1423 = vunpack.c.l.s4 1983009808
        %v1424 = vunpack.c.0.s8 %v1423
        %v1425 = vlaneseq
        %v1426 = vshrl.u32 %v1425, 7
        %v1427 = vsub.s32 %v1424, %v1426
        %v1428 = vrot.slane %v1421, %v1427
        %v1429 = vcombine.low %v1333, %v1340
        %v1431 = vunpack.c.l.s4 1983009808
        %v1432 = vunpack.c.0.s8 %v1431
        %v1433 = vlaneseq
        %v1434 = vshrl.u32 %v1433, 7
        %v1435 = vsub.s32 %v1432, %v1434
        %v1436 = vrot.slane %v1429, %v1435
        %v1437 = vcombine.low %v1343, %v1344
        %v1439 = vunpack.c.l.s4 1983009808
        %v1440 = vunpack.c.0.s8 %v1439
        %v1441 = vlaneseq
        %v1442 = vshrl.u32 %v1441, 7
        %v1443 = vsub.s32 %v1440, %v1442
        %v1444 = vrot.slane %v1437, %v1443
        %v1445 = vcombine.low %v1420, %v1428
        %v1446 = vcombine.high %v1420, %v1428
        %v1448 = vunpack.c.l.s4 1934713408
        %v1449 = vunpack.c.0.s8 %v1448
        %v1450 = vlaneseq
        %v1451 = vshrl.u32 %v1450, 7
        %v1452 = vsub.s32 %v1449, %v1451
        %v1453 = vrot.slane %v1445, %v1452
        %v1455 = vunpack.c.l.s4 1934713408
        %v1456 = vunpack.c.0.s8 %v1455
        %v1457 = vlaneseq
        %v1458 = vshrl.u32 %v1457, 7
        %v1459 = vsub.s32 %v1456, %v1458
        %v1460 = vrot.slane %v1446, %v1459
        %v1461 = vcombine.low %v1436, %v1444
        %v1462 = vcombine.high %v1436, %v1444
        %v1464 = vunpack.c.l.s4 1934713408
        %v1465 = vunpack.c.0.s8 %v1464
        %v1466 = vlaneseq
        %v1467 = vshrl.u32 %v1466, 7
        %v1468 = vsub.s32 %v1465, %v1467
        %v1469 = vrot.slane %v1461, %v1468
        %v1471 = vunpack.c.l.s4 1934713408
        %v1472 = vunpack.c.0.s8 %v1471
        %v1473 = vlaneseq
        %v1474 = vshrl.u32 %v1473, 7
        %v1475 = vsub.s32 %v1472, %v1474
        %v1476 = vrot.slane %v1462, %v1475
        %v1477 = vcombine.low %v1453, %v1469
        %v1478 = vcombine.high %v1453, %v1469
        %v1479 = vcombine.low %v1460, %v1476
        %v1480 = vcombine.high %v1460, %v1476
        %v1481 = vpack.c.bf16 %v1477, %v1409
        %v1482 = vpack.c.bf16 %v1478, %v1410
        %v1483 = vpack.c.bf16 %v1479, %v1411
        %v1484 = vpack.c.bf16 %v1480, %v1412
        %1487 = vrot.lane.b32.xlu0 %v1033, 120
        %v1488 = vpop.permute.xlu0 %1487
        %1489 = vrot.lane.b32.xlu0 %v1036, 120
        %v1490 = vpop.permute.xlu0 %1489
        %1493 = vrot.lane.b32.xlu0 %v1033, 112
        %v1494 = vpop.permute.xlu0 %1493
        %1495 = vrot.lane.b32.xlu0 %v1036, 112
        %v1496 = vpop.permute.xlu0 %1495
        %1499 = vrot.lane.b32.xlu0 %v1033, 104
        %v1500 = vpop.permute.xlu0 %1499
        %1501 = vrot.lane.b32.xlu0 %v1036, 104
        %v1502 = vpop.permute.xlu0 %1501
        %v1505 = vcombine.low %v1033, %v1494
        %v1506 = vcombine.high %v1033, %v1494
        %v1508 = vunpack.c.l.s4 1983009808
        %v1509 = vunpack.c.0.s8 %v1508
        %v1510 = vlaneseq
        %v1511 = vshrl.u32 %v1510, 7
        %v1512 = vsub.s32 %v1509, %v1511
        %v1513 = vrot.slane %v1505, %v1512
        %v1515 = vunpack.c.l.s4 1983009808
        %v1516 = vunpack.c.0.s8 %v1515
        %v1517 = vlaneseq
        %v1518 = vshrl.u32 %v1517, 7
        %v1519 = vsub.s32 %v1516, %v1518
        %v1520 = vrot.slane %v1506, %v1519
        %v1521 = vcombine.low %v1488, %v1500
        %v1522 = vcombine.high %v1488, %v1500
        %v1524 = vunpack.c.l.s4 1983009808
        %v1525 = vunpack.c.0.s8 %v1524
        %v1526 = vlaneseq
        %v1527 = vshrl.u32 %v1526, 7
        %v1528 = vsub.s32 %v1525, %v1527
        %v1529 = vrot.slane %v1521, %v1528
        %v1531 = vunpack.c.l.s4 1983009808
        %v1532 = vunpack.c.0.s8 %v1531
        %v1533 = vlaneseq
        %v1534 = vshrl.u32 %v1533, 7
        %v1535 = vsub.s32 %v1532, %v1534
        %v1536 = vrot.slane %v1522, %v1535
        %v1537 = vcombine.low %v1513, %v1529
        %v1538 = vcombine.high %v1513, %v1529
        %v1540 = vunpack.c.l.s4 1934713408
        %v1541 = vunpack.c.0.s8 %v1540
        %v1542 = vlaneseq
        %v1543 = vshrl.u32 %v1542, 7
        %v1544 = vsub.s32 %v1541, %v1543
        %v1545 = vrot.slane %v1537, %v1544
        %v1547 = vunpack.c.l.s4 1934713408
        %v1548 = vunpack.c.0.s8 %v1547
        %v1549 = vlaneseq
        %v1550 = vshrl.u32 %v1549, 7
        %v1551 = vsub.s32 %v1548, %v1550
        %v1552 = vrot.slane %v1538, %v1551
        %v1553 = vcombine.low %v1520, %v1536
        %v1554 = vcombine.high %v1520, %v1536
        %v1556 = vunpack.c.l.s4 1934713408
        %v1557 = vunpack.c.0.s8 %v1556
        %v1558 = vlaneseq
        %v1559 = vshrl.u32 %v1558, 7
        %v1560 = vsub.s32 %v1557, %v1559
        %v1561 = vrot.slane %v1553, %v1560
        %v1563 = vunpack.c.l.s4 1934713408
        %v1564 = vunpack.c.0.s8 %v1563
        %v1565 = vlaneseq
        %v1566 = vshrl.u32 %v1565, 7
        %v1567 = vsub.s32 %v1564, %v1566
        %v1568 = vrot.slane %v1554, %v1567
        %v1569 = vcombine.high %v1545, 0.0
        %v1570 = vcombine.high %v1552, 0.0
        %v1571 = vcombine.high %v1561, 0.0
        %v1572 = vcombine.high %v1568, 0.0
        %v1573 = vcombine.low %v1036, %v1496
        %v1574 = vcombine.high %v1036, %v1496
        %v1576 = vunpack.c.l.s4 1983009808
        %v1577 = vunpack.c.0.s8 %v1576
        %v1578 = vlaneseq
        %v1579 = vshrl.u32 %v1578, 7
        %v1580 = vsub.s32 %v1577, %v1579
        %v1581 = vrot.slane %v1573, %v1580
        %v1583 = vunpack.c.l.s4 1983009808
        %v1584 = vunpack.c.0.s8 %v1583
        %v1585 = vlaneseq
        %v1586 = vshrl.u32 %v1585, 7
        %v1587 = vsub.s32 %v1584, %v1586
        %v1588 = vrot.slane %v1574, %v1587
        %v1589 = vcombine.low %v1490, %v1502
        %v1590 = vcombine.high %v1490, %v1502
        %v1592 = vunpack.c.l.s4 1983009808
        %v1593 = vunpack.c.0.s8 %v1592
        %v1594 = vlaneseq
        %v1595 = vshrl.u32 %v1594, 7
        %v1596 = vsub.s32 %v1593, %v1595
        %v1597 = vrot.slane %v1589, %v1596
        %v1599 = vunpack.c.l.s4 1983009808
        %v1600 = vunpack.c.0.s8 %v1599
        %v1601 = vlaneseq
        %v1602 = vshrl.u32 %v1601, 7
        %v1603 = vsub.s32 %v1600, %v1602
        %v1604 = vrot.slane %v1590, %v1603
        %v1605 = vcombine.low %v1581, %v1597
        %v1606 = vcombine.high %v1581, %v1597
        %v1608 = vunpack.c.l.s4 1934713408
        %v1609 = vunpack.c.0.s8 %v1608
        %v1610 = vlaneseq
        %v1611 = vshrl.u32 %v1610, 7
        %v1612 = vsub.s32 %v1609, %v1611
        %v1613 = vrot.slane %v1605, %v1612
        %v1615 = vunpack.c.l.s4 1934713408
        %v1616 = vunpack.c.0.s8 %v1615
        %v1617 = vlaneseq
        %v1618 = vshrl.u32 %v1617, 7
        %v1619 = vsub.s32 %v1616, %v1618
        %v1620 = vrot.slane %v1606, %v1619
        %v1621 = vcombine.low %v1588, %v1604
        %v1622 = vcombine.high %v1588, %v1604
        %v1624 = vunpack.c.l.s4 1934713408
        %v1625 = vunpack.c.0.s8 %v1624
        %v1626 = vlaneseq
        %v1627 = vshrl.u32 %v1626, 7
        %v1628 = vsub.s32 %v1625, %v1627
        %v1629 = vrot.slane %v1621, %v1628
        %v1631 = vunpack.c.l.s4 1934713408
        %v1632 = vunpack.c.0.s8 %v1631
        %v1633 = vlaneseq
        %v1634 = vshrl.u32 %v1633, 7
        %v1635 = vsub.s32 %v1632, %v1634
        %v1636 = vrot.slane %v1622, %v1635
        %v1637 = vcombine.high %v1613, 0.0
        %v1638 = vcombine.high %v1620, 0.0
        %v1639 = vcombine.high %v1629, 0.0
        %v1640 = vcombine.high %v1636, 0.0
        %v1641 = vcombine.low %v1545, %v1552
        %v1643 = vunpack.c.l.s4 1983009808
        %v1644 = vunpack.c.0.s8 %v1643
        %v1645 = vlaneseq
        %v1646 = vshrl.u32 %v1645, 7
        %v1647 = vsub.s32 %v1644, %v1646
        %v1648 = vrot.slane %v1641, %v1647
        %v1649 = vcombine.low %v1569, %v1570
        %v1651 = vunpack.c.l.s4 1983009808
        %v1652 = vunpack.c.0.s8 %v1651
        %v1653 = vlaneseq
        %v1654 = vshrl.u32 %v1653, 7
        %v1655 = vsub.s32 %v1652, %v1654
        %v1656 = vrot.slane %v1649, %v1655
        %v1657 = vcombine.low %v1561, %v1568
        %v1659 = vunpack.c.l.s4 1983009808
        %v1660 = vunpack.c.0.s8 %v1659
        %v1661 = vlaneseq
        %v1662 = vshrl.u32 %v1661, 7
        %v1663 = vsub.s32 %v1660, %v1662
        %v1664 = vrot.slane %v1657, %v1663
        %v1665 = vcombine.low %v1571, %v1572
        %v1667 = vunpack.c.l.s4 1983009808
        %v1668 = vunpack.c.0.s8 %v1667
        %v1669 = vlaneseq
        %v1670 = vshrl.u32 %v1669, 7
        %v1671 = vsub.s32 %v1668, %v1670
        %v1672 = vrot.slane %v1665, %v1671
        %v1673 = vcombine.low %v1648, %v1656
        %v1674 = vcombine.high %v1648, %v1656
        %v1676 = vunpack.c.l.s4 1934713408
        %v1677 = vunpack.c.0.s8 %v1676
        %v1678 = vlaneseq
        %v1679 = vshrl.u32 %v1678, 7
        %v1680 = vsub.s32 %v1677, %v1679
        %v1681 = vrot.slane %v1673, %v1680
        %v1683 = vunpack.c.l.s4 1934713408
        %v1684 = vunpack.c.0.s8 %v1683
        %v1685 = vlaneseq
        %v1686 = vshrl.u32 %v1685, 7
        %v1687 = vsub.s32 %v1684, %v1686
        %v1688 = vrot.slane %v1674, %v1687
        %v1689 = vcombine.low %v1664, %v1672
        %v1690 = vcombine.high %v1664, %v1672
        %v1692 = vunpack.c.l.s4 1934713408
        %v1693 = vunpack.c.0.s8 %v1692
        %v1694 = vlaneseq
        %v1695 = vshrl.u32 %v1694, 7
        %v1696 = vsub.s32 %v1693, %v1695
        %v1697 = vrot.slane %v1689, %v1696
        %v1699 = vunpack.c.l.s4 1934713408
        %v1700 = vunpack.c.0.s8 %v1699
        %v1701 = vlaneseq
        %v1702 = vshrl.u32 %v1701, 7
        %v1703 = vsub.s32 %v1700, %v1702
        %v1704 = vrot.slane %v1690, %v1703
        %v1705 = vcombine.low %v1681, %v1697
        %v1706 = vcombine.high %v1681, %v1697
        %v1707 = vcombine.low %v1688, %v1704
        %v1708 = vcombine.high %v1688, %v1704
        %v1709 = vcombine.low %v1613, %v1620
        %v1711 = vunpack.c.l.s4 1983009808
        %v1712 = vunpack.c.0.s8 %v1711
        %v1713 = vlaneseq
        %v1714 = vshrl.u32 %v1713, 7
        %v1715 = vsub.s32 %v1712, %v1714
        %v1716 = vrot.slane %v1709, %v1715
        %v1717 = vcombine.low %v1637, %v1638
        %v1719 = vunpack.c.l.s4 1983009808
        %v1720 = vunpack.c.0.s8 %v1719
        %v1721 = vlaneseq
        %v1722 = vshrl.u32 %v1721, 7
        %v1723 = vsub.s32 %v1720, %v1722
        %v1724 = vrot.slane %v1717, %v1723
        %v1725 = vcombine.low %v1629, %v1636
        %v1727 = vunpack.c.l.s4 1983009808
        %v1728 = vunpack.c.0.s8 %v1727
        %v1729 = vlaneseq
        %v1730 = vshrl.u32 %v1729, 7
        %v1731 = vsub.s32 %v1728, %v1730
        %v1732 = vrot.slane %v1725, %v1731
        %v1733 = vcombine.low %v1639, %v1640
        %v1735 = vunpack.c.l.s4 1983009808
        %v1736 = vunpack.c.0.s8 %v1735
        %v1737 = vlaneseq
        %v1738 = vshrl.u32 %v1737, 7
        %v1739 = vsub.s32 %v1736, %v1738
        %v1740 = vrot.slane %v1733, %v1739
        %v1741 = vcombine.low %v1716, %v1724
        %v1742 = vcombine.high %v1716, %v1724
        %v1744 = vunpack.c.l.s4 1934713408
        %v1745 = vunpack.c.0.s8 %v1744
        %v1746 = vlaneseq
        %v1747 = vshrl.u32 %v1746, 7
        %v1748 = vsub.s32 %v1745, %v1747
        %v1749 = vrot.slane %v1741, %v1748
        %v1751 = vunpack.c.l.s4 1934713408
        %v1752 = vunpack.c.0.s8 %v1751
        %v1753 = vlaneseq
        %v1754 = vshrl.u32 %v1753, 7
        %v1755 = vsub.s32 %v1752, %v1754
        %v1756 = vrot.slane %v1742, %v1755
        %v1757 = vcombine.low %v1732, %v1740
        %v1758 = vcombine.high %v1732, %v1740
        %v1760 = vunpack.c.l.s4 1934713408
        %v1761 = vunpack.c.0.s8 %v1760
        %v1762 = vlaneseq
        %v1763 = vshrl.u32 %v1762, 7
        %v1764 = vsub.s32 %v1761, %v1763
        %v1765 = vrot.slane %v1757, %v1764
        %v1767 = vunpack.c.l.s4 1934713408
        %v1768 = vunpack.c.0.s8 %v1767
        %v1769 = vlaneseq
        %v1770 = vshrl.u32 %v1769, 7
        %v1771 = vsub.s32 %v1768, %v1770
        %v1772 = vrot.slane %v1758, %v1771
        %v1773 = vcombine.low %v1749, %v1765
        %v1774 = vcombine.high %v1749, %v1765
        %v1775 = vcombine.low %v1756, %v1772
        %v1776 = vcombine.high %v1756, %v1772
        %v1777 = vpack.c.bf16 %v1773, %v1705
        %v1778 = vpack.c.bf16 %v1774, %v1706
        %v1779 = vpack.c.bf16 %v1775, %v1707
        %v1780 = vpack.c.bf16 %v1776, %v1708
        %v1782 = vlaneseq
        %v1783 = vshrl.u32 %v1782, 7
        %v1784 = vsub.s32 0, %v1783
        %v1785 = vrot.slane %v837, %v1784
        %vm1787 = vcmask 64512
        %v1789 = vsel %vm1787, %v1185, 0
        %v1792 = vsel %vm1787, %v1481, 0
        %1794 = vmatprep.subr.bf16.mxu0 0
        %1795 = vmatpush1.bf16.xpose.msra.mxu0 %v1792
        %1796 = vmatprep.subr.bf16.mxu0 0
        %1797 = vmatpush1.bf16.xpose.msra.mxu0 0
        %1798 = vmatprep.subr.bf16.mxu0 0
        %1799 = vmatpush1.bf16.xpose.msra.mxu0 0
        %1800 = vmatprep.subr.bf16.mxu0 0
        %1801 = vmatpush1.bf16.xpose.msra.mxu0 0
        %1802 = vmatprep.subr.bf16.mxu0 0
        %1803 = vmatpush1.bf16.xpose.msra.mxu0 0
        %1804 = vmatprep.subr.bf16.mxu0 0
        %1805 = vmatpush1.bf16.xpose.msra.mxu0 0
        %1806 = vmatprep.subr.bf16.mxu0 0
        %1807 = vmatpush1.bf16.xpose.msra.mxu0 0
        %1808 = vmatprep.subr.bf16.mxu0 0
        %1809 = vmatpush1.bf16.xpose.msra.mxu0 0
        %1810 = vmatprep.subr.bf16.mxu0 0
        %1811 = vmatpush1.bf16.xpose.msra.mxu0 0
        %1812 = vmatprep.subr.bf16.mxu0 0
        %1813 = vmatpush1.bf16.xpose.msra.mxu0 0
        %1814 = vmatprep.subr.bf16.mxu0 0
        %1815 = vmatpush1.bf16.xpose.msra.mxu0 0
        %1816 = vmatprep.subr.bf16.mxu0 0
        %1817 = vmatpush1.bf16.xpose.msra.mxu0 0
        %1818 = vmatprep.subr.bf16.mxu0 0
        %1819 = vmatpush1.bf16.xpose.msra.mxu0 0
        %1820 = vmatprep.subr.bf16.mxu0 0
        %1821 = vmatpush1.bf16.xpose.msra.mxu0 0
        %1822 = vmatprep.subr.bf16.mxu0 0
        %1823 = vmatpush1.bf16.xpose.msra.mxu0 0
        %1824 = vmatprep.subr.bf16.mxu0 0
        %1825 = vmatpush1.bf16.xpose.msra.mxu0 0
        %1826 = vmatprep.mubr.bf16.mxu0 0
        %1827 = vmatmul.mubr.bf16.gmra.mrb[0].mxu0 %v1789
        %v1828 = vpop.f32.mrb[0].mxu0
        %v1829 = vadd.f32 %v1785, %v1828
        %v1830 = vpop.f32.mrb[0].mxu0
        %v1831 = vpop.f32.mrb[0].mxu0
        %v1832 = vpop.f32.mrb[0].mxu0
        %1833 = vdwg.mxu0
        %v1835 = vsel %vm1787, %v1186, 0
        %v1838 = vsel %vm1787, %v1482, 0
        %1840 = vmatprep.subr.bf16.mxu0 0
        %1841 = vmatpush1.bf16.xpose.msra.mxu0 %v1838
        %1842 = vmatprep.subr.bf16.mxu0 0
        %1843 = vmatpush1.bf16.xpose.msra.mxu0 0
        %1844 = vmatprep.subr.bf16.mxu0 0
        %1845 = vmatpush1.bf16.xpose.msra.mxu0 0
        %1846 = vmatprep.subr.bf16.mxu0 0
        %1847 = vmatpush1.bf16.xpose.msra.mxu0 0
        %1848 = vmatprep.subr.bf16.mxu0 0
        %1849 = vmatpush1.bf16.xpose.msra.mxu0 0
        %1850 = vmatprep.subr.bf16.mxu0 0
        %1851 = vmatpush1.bf16.xpose.msra.mxu0 0
        %1852 = vmatprep.subr.bf16.mxu0 0
        %1853 = vmatpush1.bf16.xpose.msra.mxu0 0
        %1854 = vmatprep.subr.bf16.mxu0 0
        %1855 = vmatpush1.bf16.xpose.msra.mxu0 0
        %1856 = vmatprep.subr.bf16.mxu0 0
        %1857 = vmatpush1.bf16.xpose.msra.mxu0 0
        %1858 = vmatprep.subr.bf16.mxu0 0
        %1859 = vmatpush1.bf16.xpose.msra.mxu0 0
        %1860 = vmatprep.subr.bf16.mxu0 0
        %1861 = vmatpush1.bf16.xpose.msra.mxu0 0
        %1862 = vmatprep.subr.bf16.mxu0 0
        %1863 = vmatpush1.bf16.xpose.msra.mxu0 0
        %1864 = vmatprep.subr.bf16.mxu0 0
        %1865 = vmatpush1.bf16.xpose.msra.mxu0 0
        %1866 = vmatprep.subr.bf16.mxu0 0
        %1867 = vmatpush1.bf16.xpose.msra.mxu0 0
        %1868 = vmatprep.subr.bf16.mxu0 0
        %1869 = vmatpush1.bf16.xpose.msra.mxu0 0
        %1870 = vmatprep.subr.bf16.mxu0 0
        %1871 = vmatpush1.bf16.xpose.msra.mxu0 0
        %1872 = vmatprep.mubr.bf16.mxu0 0
        %1873 = vmatmul.mubr.bf16.gmra.mrb[0].mxu0 %v1835
        %v1874 = vpop.f32.mrb[0].mxu0
        %v1875 = vadd.f32 %v1785, %v1874
        %v1876 = vpop.f32.mrb[0].mxu0
        %v1877 = vpop.f32.mrb[0].mxu0
        %v1878 = vpop.f32.mrb[0].mxu0
        %1879 = vdwg.mxu0
        %v1881 = vsel %vm1787, %v1187, 0
        %v1884 = vsel %vm1787, %v1483, 0
        %1886 = vmatprep.subr.bf16.mxu0 0
        %1887 = vmatpush1.bf16.xpose.msra.mxu0 %v1884
        %1888 = vmatprep.subr.bf16.mxu0 0
        %1889 = vmatpush1.bf16.xpose.msra.mxu0 0
        %1890 = vmatprep.subr.bf16.mxu0 0
        %1891 = vmatpush1.bf16.xpose.msra.mxu0 0
        %1892 = vmatprep.subr.bf16.mxu0 0
        %1893 = vmatpush1.bf16.xpose.msra.mxu0 0
        %1894 = vmatprep.subr.bf16.mxu0 0
        %1895 = vmatpush1.bf16.xpose.msra.mxu0 0
        %1896 = vmatprep.subr.bf16.mxu0 0
        %1897 = vmatpush1.bf16.xpose.msra.mxu0 0
        %1898 = vmatprep.subr.bf16.mxu0 0
        %1899 = vmatpush1.bf16.xpose.msra.mxu0 0
        %1900 = vmatprep.subr.bf16.mxu0 0
        %1901 = vmatpush1.bf16.xpose.msra.mxu0 0
        %1902 = vmatprep.subr.bf16.mxu0 0
        %1903 = vmatpush1.bf16.xpose.msra.mxu0 0
        %1904 = vmatprep.subr.bf16.mxu0 0
        %1905 = vmatpush1.bf16.xpose.msra.mxu0 0
        %1906 = vmatprep.subr.bf16.mxu0 0
        %1907 = vmatpush1.bf16.xpose.msra.mxu0 0
        %1908 = vmatprep.subr.bf16.mxu0 0
        %1909 = vmatpush1.bf16.xpose.msra.mxu0 0
        %1910 = vmatprep.subr.bf16.mxu0 0
        %1911 = vmatpush1.bf16.xpose.msra.mxu0 0
        %1912 = vmatprep.subr.bf16.mxu0 0
        %1913 = vmatpush1.bf16.xpose.msra.mxu0 0
        %1914 = vmatprep.subr.bf16.mxu0 0
        %1915 = vmatpush1.bf16.xpose.msra.mxu0 0
        %1916 = vmatprep.subr.bf16.mxu0 0
        %1917 = vmatpush1.bf16.xpose.msra.mxu0 0
        %1918 = vmatprep.mubr.bf16.mxu0 0
        %1919 = vmatmul.mubr.bf16.gmra.mrb[0].mxu0 %v1881
        %v1920 = vpop.f32.mrb[0].mxu0
        %v1921 = vadd.f32 %v1785, %v1920
        %v1922 = vpop.f32.mrb[0].mxu0
        %v1923 = vpop.f32.mrb[0].mxu0
        %v1924 = vpop.f32.mrb[0].mxu0
        %1925 = vdwg.mxu0
        %v1927 = vsel %vm1787, %v1188, 0
        %v1930 = vsel %vm1787, %v1484, 0
        %1932 = vmatprep.subr.bf16.mxu0 0
        %1933 = vmatpush1.bf16.xpose.msra.mxu0 %v1930
        %1934 = vmatprep.subr.bf16.mxu0 0
        %1935 = vmatpush1.bf16.xpose.msra.mxu0 0
        %1936 = vmatprep.subr.bf16.mxu0 0
        %1937 = vmatpush1.bf16.xpose.msra.mxu0 0
        %1938 = vmatprep.subr.bf16.mxu0 0
        %1939 = vmatpush1.bf16.xpose.msra.mxu0 0
        %1940 = vmatprep.subr.bf16.mxu0 0
        %1941 = vmatpush1.bf16.xpose.msra.mxu0 0
        %1942 = vmatprep.subr.bf16.mxu0 0
        %1943 = vmatpush1.bf16.xpose.msra.mxu0 0
        %1944 = vmatprep.subr.bf16.mxu0 0
        %1945 = vmatpush1.bf16.xpose.msra.mxu0 0
        %1946 = vmatprep.subr.bf16.mxu0 0
        %1947 = vmatpush1.bf16.xpose.msra.mxu0 0
        %1948 = vmatprep.subr.bf16.mxu0 0
        %1949 = vmatpush1.bf16.xpose.msra.mxu0 0
        %1950 = vmatprep.subr.bf16.mxu0 0
        %1951 = vmatpush1.bf16.xpose.msra.mxu0 0
        %1952 = vmatprep.subr.bf16.mxu0 0
        %1953 = vmatpush1.bf16.xpose.msra.mxu0 0
        %1954 = vmatprep.subr.bf16.mxu0 0
        %1955 = vmatpush1.bf16.xpose.msra.mxu0 0
        %1956 = vmatprep.subr.bf16.mxu0 0
        %1957 = vmatpush1.bf16.xpose.msra.mxu0 0
        %1958 = vmatprep.subr.bf16.mxu0 0
        %1959 = vmatpush1.bf16.xpose.msra.mxu0 0
        %1960 = vmatprep.subr.bf16.mxu0 0
        %1961 = vmatpush1.bf16.xpose.msra.mxu0 0
        %1962 = vmatprep.subr.bf16.mxu0 0
        %1963 = vmatpush1.bf16.xpose.msra.mxu0 0
        %1964 = vmatprep.mubr.bf16.mxu0 0
        %1965 = vmatmul.mubr.bf16.gmra.mrb[0].mxu0 %v1927
        %v1966 = vpop.f32.mrb[0].mxu0
        %v1967 = vadd.f32 %v1785, %v1966
        %v1968 = vpop.f32.mrb[0].mxu0
        %v1969 = vpop.f32.mrb[0].mxu0
        %v1970 = vpop.f32.mrb[0].mxu0
        %1971 = vdwg.mxu0
        %vm1972 = vcmask 130048
        %v1973 = vsel %vm1972, %v1829, -inf
        %1974 = vmax.xlane.f32.xlu0 %v1973
        %v1975 = vpop.xlane.xlu0 %1974
        %v1976 = vsel %vm1972, %v1875, -inf
        %1977 = vmax.xlane.f32.xlu0 %v1976
        %v1978 = vpop.xlane.xlu0 %1977
        %v1979 = vsel %vm1972, %v1921, -inf
        %1980 = vmax.xlane.f32.xlu0 %v1979
        %v1981 = vpop.xlane.xlu0 %1980
        %v1982 = vsel %vm1972, %v1967, -inf
        %1983 = vmax.xlane.f32.xlu0 %v1982
        %v1984 = vpop.xlane.xlu0 %1983
        %v1985 = vsub.f32 %v1829, %v1975
        %v1986 = vsub.f32 %v1875, %v1978
        %v1987 = vsub.f32 %v1921, %v1981
        %v1988 = vsub.f32 %v1967, %v1984
        %v1989 = vmul.f32 %v1985, 1.442695
        %v1990 = vpow.pop %v1989
        %v1991 = vmul.f32 %v1986, 1.442695
        %v1992 = vpow.pop %v1991
        %v1993 = vmul.f32 %v1987, 1.442695
        %v1994 = vpow.pop %v1993
        %v1995 = vmul.f32 %v1988, 1.442695
        %v1996 = vpow.pop %v1995
        %v1997 = vsel %vm1972, %v1990, 0.0
        %1998 = vadd.xlane.f32.xlu0 %v1997
        %v1999 = vpop.xlane.xlu0 %1998
        %v2000 = vsel %vm1972, %v1992, 0.0
        %2001 = vadd.xlane.f32.xlu0 %v2000
        %v2002 = vpop.xlane.xlu0 %2001
        %v2003 = vsel %vm1972, %v1994, 0.0
        %2004 = vadd.xlane.f32.xlu0 %v2003
        %v2005 = vpop.xlane.xlu0 %2004
        %v2006 = vsel %vm1972, %v1996, 0.0
        %2007 = vadd.xlane.f32.xlu0 %v2006
        %v2008 = vpop.xlane.xlu0 %2007
        %v2009 = vrcp.pop %v1999
        %v2010 = vrcp.pop %v2002
        %v2011 = vrcp.pop %v2005
        %v2012 = vrcp.pop %v2008
        %v2013 = vpack.c.bf16 %v1990, %v1990
        %v2014 = vpack.c.bf16 %v1992, %v1992
        %v2015 = vpack.c.bf16 %v1994, %v1994
        %v2016 = vpack.c.bf16 %v1996, %v1996
        %v2018 = vsel %vm1972, %v2013, 0
        %2020 = vmatprep.subr.bf16.mxu0 0
        %2021 = vmatpush1.bf16.msra.mxu0 %v1777
        %2022 = vmatprep.subr.bf16.mxu0 0
        %2023 = vmatpush1.bf16.msra.mxu0 0
        %2024 = vmatprep.subr.bf16.mxu0 0
        %2025 = vmatpush1.bf16.msra.mxu0 0
        %2026 = vmatprep.subr.bf16.mxu0 0
        %2027 = vmatpush1.bf16.msra.mxu0 0
        %2028 = vmatprep.subr.bf16.mxu0 0
        %2029 = vmatpush1.bf16.msra.mxu0 0
        %2030 = vmatprep.subr.bf16.mxu0 0
        %2031 = vmatpush1.bf16.msra.mxu0 0
        %2032 = vmatprep.subr.bf16.mxu0 0
        %2033 = vmatpush1.bf16.msra.mxu0 0
        %2034 = vmatprep.subr.bf16.mxu0 0
        %2035 = vmatpush1.bf16.msra.mxu0 0
        %2036 = vmatprep.subr.bf16.mxu0 0
        %2037 = vmatpush1.bf16.msra.mxu0 0
        %2038 = vmatprep.subr.bf16.mxu0 0
        %2039 = vmatpush1.bf16.msra.mxu0 0
        %2040 = vmatprep.subr.bf16.mxu0 0
        %2041 = vmatpush1.bf16.msra.mxu0 0
        %2042 = vmatprep.subr.bf16.mxu0 0
        %2043 = vmatpush1.bf16.msra.mxu0 0
        %2044 = vmatprep.subr.bf16.mxu0 0
        %2045 = vmatpush1.bf16.msra.mxu0 0
        %2046 = vmatprep.subr.bf16.mxu0 0
        %2047 = vmatpush1.bf16.msra.mxu0 0
        %2048 = vmatprep.subr.bf16.mxu0 0
        %2049 = vmatpush1.bf16.msra.mxu0 0
        %2050 = vmatprep.subr.bf16.mxu0 0
        %2051 = vmatpush1.bf16.msra.mxu0 0
        %2052 = vmatprep.mubr.bf16.mxu0 0
        %2053 = vmatmul.mubr.bf16.gmra.mrb[0].mxu0 %v2018
        %v2054 = vpop.f32.mrb[0].mxu0
        %v2055 = vadd.f32 0.0, %v2054
        %v2056 = vpop.f32.mrb[0].mxu0
        %v2057 = vpop.f32.mrb[0].mxu0
        %v2058 = vpop.f32.mrb[0].mxu0
        %2059 = vdwg.mxu0
        %v2061 = vsel %vm1972, %v2014, 0
        %2063 = vmatprep.subr.bf16.mxu0 0
        %2064 = vmatpush1.bf16.msra.mxu0 %v1778
        %2065 = vmatprep.subr.bf16.mxu0 0
        %2066 = vmatpush1.bf16.msra.mxu0 0
        %2067 = vmatprep.subr.bf16.mxu0 0
        %2068 = vmatpush1.bf16.msra.mxu0 0
        %2069 = vmatprep.subr.bf16.mxu0 0
        %2070 = vmatpush1.bf16.msra.mxu0 0
        %2071 = vmatprep.subr.bf16.mxu0 0
        %2072 = vmatpush1.bf16.msra.mxu0 0
        %2073 = vmatprep.subr.bf16.mxu0 0
        %2074 = vmatpush1.bf16.msra.mxu0 0
        %2075 = vmatprep.subr.bf16.mxu0 0
        %2076 = vmatpush1.bf16.msra.mxu0 0
        %2077 = vmatprep.subr.bf16.mxu0 0
        %2078 = vmatpush1.bf16.msra.mxu0 0
        %2079 = vmatprep.subr.bf16.mxu0 0
        %2080 = vmatpush1.bf16.msra.mxu0 0
        %2081 = vmatprep.subr.bf16.mxu0 0
        %2082 = vmatpush1.bf16.msra.mxu0 0
        %2083 = vmatprep.subr.bf16.mxu0 0
        %2084 = vmatpush1.bf16.msra.mxu0 0
        %2085 = vmatprep.subr.bf16.mxu0 0
        %2086 = vmatpush1.bf16.msra.mxu0 0
        %2087 = vmatprep.subr.bf16.mxu0 0
        %2088 = vmatpush1.bf16.msra.mxu0 0
        %2089 = vmatprep.subr.bf16.mxu0 0
        %2090 = vmatpush1.bf16.msra.mxu0 0
        %2091 = vmatprep.subr.bf16.mxu0 0
        %2092 = vmatpush1.bf16.msra.mxu0 0
        %2093 = vmatprep.subr.bf16.mxu0 0
        %2094 = vmatpush1.bf16.msra.mxu0 0
        %2095 = vmatprep.mubr.bf16.mxu0 0
        %2096 = vmatmul.mubr.bf16.gmra.mrb[0].mxu0 %v2061
        %v2097 = vpop.f32.mrb[0].mxu0
        %v2098 = vadd.f32 0.0, %v2097
        %v2099 = vpop.f32.mrb[0].mxu0
        %v2100 = vpop.f32.mrb[0].mxu0
        %v2101 = vpop.f32.mrb[0].mxu0
        %2102 = vdwg.mxu0
        %v2104 = vsel %vm1972, %v2015, 0
        %2106 = vmatprep.subr.bf16.mxu0 0
        %2107 = vmatpush1.bf16.msra.mxu0 %v1779
        %2108 = vmatprep.subr.bf16.mxu0 0
        %2109 = vmatpush1.bf16.msra.mxu0 0
        %2110 = vmatprep.subr.bf16.mxu0 0
        %2111 = vmatpush1.bf16.msra.mxu0 0
        %2112 = vmatprep.subr.bf16.mxu0 0
        %2113 = vmatpush1.bf16.msra.mxu0 0
        %2114 = vmatprep.subr.bf16.mxu0 0
        %2115 = vmatpush1.bf16.msra.mxu0 0
        %2116 = vmatprep.subr.bf16.mxu0 0
        %2117 = vmatpush1.bf16.msra.mxu0 0
        %2118 = vmatprep.subr.bf16.mxu0 0
        %2119 = vmatpush1.bf16.msra.mxu0 0
        %2120 = vmatprep.subr.bf16.mxu0 0
        %2121 = vmatpush1.bf16.msra.mxu0 0
        %2122 = vmatprep.subr.bf16.mxu0 0
        %2123 = vmatpush1.bf16.msra.mxu0 0
        %2124 = vmatprep.subr.bf16.mxu0 0
        %2125 = vmatpush1.bf16.msra.mxu0 0
        %2126 = vmatprep.subr.bf16.mxu0 0
        %2127 = vmatpush1.bf16.msra.mxu0 0
        %2128 = vmatprep.subr.bf16.mxu0 0
        %2129 = vmatpush1.bf16.msra.mxu0 0
        %2130 = vmatprep.subr.bf16.mxu0 0
        %2131 = vmatpush1.bf16.msra.mxu0 0
        %2132 = vmatprep.subr.bf16.mxu0 0
        %2133 = vmatpush1.bf16.msra.mxu0 0
        %2134 = vmatprep.subr.bf16.mxu0 0
        %2135 = vmatpush1.bf16.msra.mxu0 0
        %2136 = vmatprep.subr.bf16.mxu0 0
        %2137 = vmatpush1.bf16.msra.mxu0 0
        %2138 = vmatprep.mubr.bf16.mxu0 0
        %2139 = vmatmul.mubr.bf16.gmra.mrb[0].mxu0 %v2104
        %v2140 = vpop.f32.mrb[0].mxu0
        %v2141 = vadd.f32 0.0, %v2140
        %v2142 = vpop.f32.mrb[0].mxu0
        %v2143 = vpop.f32.mrb[0].mxu0
        %v2144 = vpop.f32.mrb[0].mxu0
        %2145 = vdwg.mxu0
        %v2147 = vsel %vm1972, %v2016, 0
        %2149 = vmatprep.subr.bf16.mxu0 0
        %2150 = vmatpush1.bf16.msra.mxu0 %v1780
        %2151 = vmatprep.subr.bf16.mxu0 0
        %2152 = vmatpush1.bf16.msra.mxu0 0
        %2153 = vmatprep.subr.bf16.mxu0 0
        %2154 = vmatpush1.bf16.msra.mxu0 0
        %2155 = vmatprep.subr.bf16.mxu0 0
        %2156 = vmatpush1.bf16.msra.mxu0 0
        %2157 = vmatprep.subr.bf16.mxu0 0
        %2158 = vmatpush1.bf16.msra.mxu0 0
        %2159 = vmatprep.subr.bf16.mxu0 0
        %2160 = vmatpush1.bf16.msra.mxu0 0
        %2161 = vmatprep.subr.bf16.mxu0 0
        %2162 = vmatpush1.bf16.msra.mxu0 0
        %2163 = vmatprep.subr.bf16.mxu0 0
        %2164 = vmatpush1.bf16.msra.mxu0 0
        %2165 = vmatprep.subr.bf16.mxu0 0
        %2166 = vmatpush1.bf16.msra.mxu0 0
        %2167 = vmatprep.subr.bf16.mxu0 0
        %2168 = vmatpush1.bf16.msra.mxu0 0
        %2169 = vmatprep.subr.bf16.mxu0 0
        %2170 = vmatpush1.bf16.msra.mxu0 0
        %2171 = vmatprep.subr.bf16.mxu0 0
        %2172 = vmatpush1.bf16.msra.mxu0 0
        %2173 = vmatprep.subr.bf16.mxu0 0
        %2174 = vmatpush1.bf16.msra.mxu0 0
        %2175 = vmatprep.subr.bf16.mxu0 0
        %2176 = vmatpush1.bf16.msra.mxu0 0
        %2177 = vmatprep.subr.bf16.mxu0 0
        %2178 = vmatpush1.bf16.msra.mxu0 0
        %2179 = vmatprep.subr.bf16.mxu0 0
        %2180 = vmatpush1.bf16.msra.mxu0 0
        %2181 = vmatprep.mubr.bf16.mxu0 0
        %2182 = vmatmul.mubr.bf16.gmra.mrb[0].mxu0 %v2147
        %v2183 = vpop.f32.mrb[0].mxu0
        %v2184 = vadd.f32 0.0, %v2183
        %v2185 = vpop.f32.mrb[0].mxu0
        %v2186 = vpop.f32.mrb[0].mxu0
        %v2187 = vpop.f32.mrb[0].mxu0
        %2188 = vdwg.mxu0
        %v2189 = vmul.f32 %v2055, %v2009
        %v2190 = vmul.f32 %v2098, %v2010
        %v2191 = vmul.f32 %v2141, %v2011
        %v2192 = vmul.f32 %v2184, %v2012
        %v2193 = vcombine.low %v2189, %v2191
        %v2194 = vcombine.high %v2189, %v2191
        %v2196 = vunpack.c.l.s4 1983009808
        %v2197 = vunpack.c.0.s8 %v2196
        %v2198 = vlaneseq
        %v2199 = vshrl.u32 %v2198, 7
        %v2200 = vsub.s32 %v2197, %v2199
        %v2201 = vrot.slane %v2193, %v2200
        %v2203 = vunpack.c.l.s4 1983009808
        %v2204 = vunpack.c.0.s8 %v2203
        %v2205 = vlaneseq
        %v2206 = vshrl.u32 %v2205, 7
        %v2207 = vsub.s32 %v2204, %v2206
        %v2208 = vrot.slane %v2194, %v2207
        %v2209 = vcombine.low %v2190, %v2192
        %v2210 = vcombine.high %v2190, %v2192
        %v2212 = vunpack.c.l.s4 1983009808
        %v2213 = vunpack.c.0.s8 %v2212
        %v2214 = vlaneseq
        %v2215 = vshrl.u32 %v2214, 7
        %v2216 = vsub.s32 %v2213, %v2215
        %v2217 = vrot.slane %v2209, %v2216
        %v2219 = vunpack.c.l.s4 1983009808
        %v2220 = vunpack.c.0.s8 %v2219
        %v2221 = vlaneseq
        %v2222 = vshrl.u32 %v2221, 7
        %v2223 = vsub.s32 %v2220, %v2222
        %v2224 = vrot.slane %v2210, %v2223
        %v2225 = vcombine.low %v2201, %v2217
        %v2226 = vcombine.high %v2201, %v2217
        %v2228 = vunpack.c.l.s4 1934713408
        %v2229 = vunpack.c.0.s8 %v2228
        %v2230 = vlaneseq
        %v2231 = vshrl.u32 %v2230, 7
        %v2232 = vsub.s32 %v2229, %v2231
        %v2233 = vrot.slane %v2225, %v2232
        %v2235 = vunpack.c.l.s4 1934713408
        %v2236 = vunpack.c.0.s8 %v2235
        %v2237 = vlaneseq
        %v2238 = vshrl.u32 %v2237, 7
        %v2239 = vsub.s32 %v2236, %v2238
        %v2240 = vrot.slane %v2226, %v2239
        %v2241 = vcombine.low %v2208, %v2224
        %v2242 = vcombine.high %v2208, %v2224
        %v2244 = vunpack.c.l.s4 1934713408
        %v2245 = vunpack.c.0.s8 %v2244
        %v2246 = vlaneseq
        %v2247 = vshrl.u32 %v2246, 7
        %v2248 = vsub.s32 %v2245, %v2247
        %v2249 = vrot.slane %v2241, %v2248
        %v2251 = vunpack.c.l.s4 1934713408
        %v2252 = vunpack.c.0.s8 %v2251
        %v2253 = vlaneseq
        %v2254 = vshrl.u32 %v2253, 7
        %v2255 = vsub.s32 %v2252, %v2254
        %v2256 = vrot.slane %v2242, %v2255
        %v2257 = vcombine.high %v2233, 0.0
        %v2258 = vcombine.high %v2240, 0.0
        %v2259 = vcombine.high %v2249, 0.0
        %v2260 = vcombine.high %v2256, 0.0
        %v2261 = vcombine.low %v2233, %v2240
        %v2263 = vunpack.c.l.s4 1983009808
        %v2264 = vunpack.c.0.s8 %v2263
        %v2265 = vlaneseq
        %v2266 = vshrl.u32 %v2265, 7
        %v2267 = vsub.s32 %v2264, %v2266
        %v2268 = vrot.slane %v2261, %v2267
        %v2269 = vcombine.low %v2257, %v2258
        %v2271 = vunpack.c.l.s4 1983009808
        %v2272 = vunpack.c.0.s8 %v2271
        %v2273 = vlaneseq
        %v2274 = vshrl.u32 %v2273, 7
        %v2275 = vsub.s32 %v2272, %v2274
        %v2276 = vrot.slane %v2269, %v2275
        %v2277 = vcombine.low %v2249, %v2256
        %v2279 = vunpack.c.l.s4 1983009808
        %v2280 = vunpack.c.0.s8 %v2279
        %v2281 = vlaneseq
        %v2282 = vshrl.u32 %v2281, 7
        %v2283 = vsub.s32 %v2280, %v2282
        %v2284 = vrot.slane %v2277, %v2283
        %v2285 = vcombine.low %v2259, %v2260
        %v2287 = vunpack.c.l.s4 1983009808
        %v2288 = vunpack.c.0.s8 %v2287
        %v2289 = vlaneseq
        %v2290 = vshrl.u32 %v2289, 7
        %v2291 = vsub.s32 %v2288, %v2290
        %v2292 = vrot.slane %v2285, %v2291
        %v2293 = vcombine.low %v2268, %v2276
        %v2294 = vcombine.high %v2268, %v2276
        %v2296 = vunpack.c.l.s4 1934713408
        %v2297 = vunpack.c.0.s8 %v2296
        %v2298 = vlaneseq
        %v2299 = vshrl.u32 %v2298, 7
        %v2300 = vsub.s32 %v2297, %v2299
        %v2301 = vrot.slane %v2293, %v2300
        %v2303 = vunpack.c.l.s4 1934713408
        %v2304 = vunpack.c.0.s8 %v2303
        %v2305 = vlaneseq
        %v2306 = vshrl.u32 %v2305, 7
        %v2307 = vsub.s32 %v2304, %v2306
        %v2308 = vrot.slane %v2294, %v2307
        %v2309 = vcombine.low %v2284, %v2292
        %v2310 = vcombine.high %v2284, %v2292
        %v2312 = vunpack.c.l.s4 1934713408
        %v2313 = vunpack.c.0.s8 %v2312
        %v2314 = vlaneseq
        %v2315 = vshrl.u32 %v2314, 7
        %v2316 = vsub.s32 %v2313, %v2315
        %v2317 = vrot.slane %v2309, %v2316
        %v2319 = vunpack.c.l.s4 1934713408
        %v2320 = vunpack.c.0.s8 %v2319
        %v2321 = vlaneseq
        %v2322 = vshrl.u32 %v2321, 7
        %v2323 = vsub.s32 %v2320, %v2322
        %v2324 = vrot.slane %v2310, %v2323
        %v2325 = vcombine.low %v2301, %v2317
        %v2326 = vcombine.high %v2301, %v2317
        %v2327 = vcombine.low %v2308, %v2324
        %v2328 = vcombine.high %v2308, %v2324
        %2330 = vrot.lane.b32.xlu0 %v2326, 8
        %v2331 = vpop.permute.xlu0 %2330
        %2334 = vrot.lane.b32.xlu0 %v2327, 16
        %v2335 = vpop.permute.xlu0 %2334
        %2338 = vrot.lane.b32.xlu0 %v2328, 24
        %v2339 = vpop.permute.xlu0 %2338
        %v2341 = vsel %vm1787, %v2325, %v2331
        %v2342 = vsel %vm1972, %v2341, %v2335
        %vm2343 = vcmask 195584
        %v2344 = vsel %vm2343, %v2342, %v2339
        %v2345 = vmul.f32 %v1990, %v2009
        %v2346 = vmul.f32 %v1992, %v2010
        %v2347 = vmul.f32 %v1994, %v2011
        %v2348 = vmul.f32 %v1996, %v2012
        %2349 = vst.msk [vmem:[%s822] sm:$0xff] %vm1972, %v2345
        %2350 = vst.msk [vmem:[%s822 + $0x8] sm:$0xff] %vm1972, %v2346
        %2351 = vst.msk [vmem:[%s822 + $0x10] sm:$0xff] %vm1972, %v2347
        %2352 = vst.msk [vmem:[%s822 + $0x18] sm:$0xff] %vm1972, %v2348
        %v2353 = vpack.c.bf16 %v2344, %v2344
        %v2354 = vld [vmem:[%s9] sm:$0xf]
        %v2355 = vld [vmem:[%s9 + $0x4] sm:$0xf]
        %v2356 = vld [vmem:[%s9 + $0x8] sm:$0xf]
        %v2357 = vld [vmem:[%s9 + $0xc] sm:$0xf]
        %v2358 = vld [vmem:[#allocation13] sm:$0x1]
        %v2360 = vlaneseq
        %v2361 = vshrl.u32 %v2360, 7
        %v2362 = vsub.s32 0, %v2361
        %v2363 = vrot.slane %v2358, %v2362
        %v2369 = vunpack.c.l.b16 %v2354
        %v2370 = vunpack.c.l.b16 %v2355
        %v2371 = vunpack.c.l.b16 %v2356
        %v2372 = vunpack.c.l.b16 %v2357
        %v2373 = vpack.c.b16 %v2370, %v2369
        %v2374 = vpack.c.b16 %v2372, %v2371
        %v2378 = vsel %vm863, %v2353, 0
        %2380 = vmatprep.subr.bf16.mxu0 0
        %2381 = vmatpush1.bf16.msra.mxu0 %v2373
        %2382 = vmatprep.subr.bf16.mxu0 0
        %2383 = vmatpush1.bf16.msra.mxu0 %v2374
        %2384 = vmatprep.subr.bf16.mxu0 0
        %2385 = vmatpush1.bf16.msra.mxu0 0
        %2386 = vmatprep.subr.bf16.mxu0 0
        %2387 = vmatpush1.bf16.msra.mxu0 0
        %2388 = vmatprep.subr.bf16.mxu0 0
        %2389 = vmatpush1.bf16.msra.mxu0 0
        %2390 = vmatprep.subr.bf16.mxu0 0
        %2391 = vmatpush1.bf16.msra.mxu0 0
        %2392 = vmatprep.subr.bf16.mxu0 0
        %2393 = vmatpush1.bf16.msra.mxu0 0
        %2394 = vmatprep.subr.bf16.mxu0 0
        %2395 = vmatpush1.bf16.msra.mxu0 0
        %2396 = vmatprep.subr.bf16.mxu0 0
        %2397 = vmatpush1.bf16.msra.mxu0 0
        %2398 = vmatprep.subr.bf16.mxu0 0
        %2399 = vmatpush1.bf16.msra.mxu0 0
        %2400 = vmatprep.subr.bf16.mxu0 0
        %2401 = vmatpush1.bf16.msra.mxu0 0
        %2402 = vmatprep.subr.bf16.mxu0 0
        %2403 = vmatpush1.bf16.msra.mxu0 0
        %2404 = vmatprep.subr.bf16.mxu0 0
        %2405 = vmatpush1.bf16.msra.mxu0 0
        %2406 = vmatprep.subr.bf16.mxu0 0
        %2407 = vmatpush1.bf16.msra.mxu0 0
        %2408 = vmatprep.subr.bf16.mxu0 0
        %2409 = vmatpush1.bf16.msra.mxu0 0
        %2410 = vmatprep.subr.bf16.mxu0 0
        %2411 = vmatpush1.bf16.msra.mxu0 0
        %2412 = vmatprep.mubr.bf16.mxu0 0
        %2413 = vmatmul.mubr.bf16.gmra.mrb[0].mxu0 %v2378
        %v2414 = vpop.f32.mrb[0].mxu0
        %v2415 = vadd.f32 %v2363, %v2414
        %v2416 = vpop.f32.mrb[0].mxu0
        %v2417 = vpop.f32.mrb[0].mxu0
        %v2418 = vpop.f32.mrb[0].mxu0
        %2419 = vdwg.mxu0
        %v2420 = vadd.f32 %v832, %v2415
        %v2421 = vld [vmem:[#allocation14] sm:$0x1]
        %v2422 = vld [vmem:[#allocation16] sm:$0x1]
        %v2423 = vsel %vm863, %v2420, 0.0
        %2424 = vadd.xlane.f32.xlu0 %v2423
        %v2425 = vpop.xlane.xlu0 %2424
        %v2426 = vmul.f32 %v2420, %v2420
        %v2427 = vsel %vm863, %v2426, 0.0
        %2428 = vadd.xlane.f32.xlu0 %v2427
        %v2429 = vpop.xlane.xlu0 %2428
        %v2430 = vrcp.pop 32.0
        %v2431 = vmul.f32 %v2425, %v2430
        %v2432 = vmul.f32 %v2429, %v2430
        %v2433 = vmul.f32 %v2431, %v2431
        %v2434 = vsub.f32 %v2432, %v2433
        %v2435 = vsub.f32 %v2420, %v2431
        %v2436 = vadd.f32 %v2434, 1e-05
        %v2437 = vrsqrt.pop %v2436
        %v2438 = vmul.f32 %v2435, %v2437
        %v2440 = vlaneseq
        %v2441 = vshrl.u32 %v2440, 7
        %v2442 = vsub.s32 0, %v2441
        %v2443 = vrot.slane %v2421, %v2442
        %v2445 = vmul.f32 %v2438, %v2443
        %v2447 = vlaneseq
        %v2448 = vshrl.u32 %v2447, 7
        %v2449 = vsub.s32 0, %v2448
        %v2450 = vrot.slane %v2422, %v2449
        %v2452 = vadd.f32 %v2445, %v2450
        %v2453 = vpack.c.bf16 %v2452, %v2452
        %v2454 = vld [vmem:[%s13] sm:$0xf]
        %v2455 = vld [vmem:[%s13 + $0x4] sm:$0xf]
        %v2456 = vld [vmem:[%s13 + $0x8] sm:$0xf]
        %v2457 = vld [vmem:[%s13 + $0xc] sm:$0xf]
        %v2458 = vld [vmem:[%s14] sm:$0x1]
        %v2460 = vlaneseq
        %v2461 = vshrl.u32 %v2460, 7
        %v2462 = vsub.s32 0, %v2461
        %v2463 = vrot.slane %v2458, %v2462
        %v2469 = vunpack.c.l.b16 %v2454
        %v2470 = vunpack.c.l.b16 %v2455
        %v2471 = vunpack.c.l.b16 %v2456
        %v2472 = vunpack.c.l.b16 %v2457
        %v2473 = vpack.c.b16 %v2470, %v2469
        %v2474 = vpack.c.b16 %v2472, %v2471
        %v2478 = vsel %vm863, %v2453, 0
        %2480 = vmatprep.subr.bf16.mxu0 0
        %2481 = vmatpush1.bf16.msra.mxu0 %v2473
        %2482 = vmatprep.subr.bf16.mxu0 0
        %2483 = vmatpush1.bf16.msra.mxu0 %v2474
        %2484 = vmatprep.subr.bf16.mxu0 0
        %2485 = vmatpush1.bf16.msra.mxu0 0
        %2486 = vmatprep.subr.bf16.mxu0 0
        %2487 = vmatpush1.bf16.msra.mxu0 0
        %2488 = vmatprep.subr.bf16.mxu0 0
        %2489 = vmatpush1.bf16.msra.mxu0 0
        %2490 = vmatprep.subr.bf16.mxu0 0
        %2491 = vmatpush1.bf16.msra.mxu0 0
        %2492 = vmatprep.subr.bf16.mxu0 0
        %2493 = vmatpush1.bf16.msra.mxu0 0
        %2494 = vmatprep.subr.bf16.mxu0 0
        %2495 = vmatpush1.bf16.msra.mxu0 0
        %2496 = vmatprep.subr.bf16.mxu0 0
        %2497 = vmatpush1.bf16.msra.mxu0 0
        %2498 = vmatprep.subr.bf16.mxu0 0
        %2499 = vmatpush1.bf16.msra.mxu0 0
        %2500 = vmatprep.subr.bf16.mxu0 0
        %2501 = vmatpush1.bf16.msra.mxu0 0
        %2502 = vmatprep.subr.bf16.mxu0 0
        %2503 = vmatpush1.bf16.msra.mxu0 0
        %2504 = vmatprep.subr.bf16.mxu0 0
        %2505 = vmatpush1.bf16.msra.mxu0 0
        %2506 = vmatprep.subr.bf16.mxu0 0
        %2507 = vmatpush1.bf16.msra.mxu0 0
        %2508 = vmatprep.subr.bf16.mxu0 0
        %2509 = vmatpush1.bf16.msra.mxu0 0
        %2510 = vmatprep.subr.bf16.mxu0 0
        %2511 = vmatpush1.bf16.msra.mxu0 0
        %2512 = vmatprep.mubr.bf16.mxu0 0
        %2513 = vmatmul.mubr.bf16.gmra.mrb[0].mxu0 %v2478
        %v2514 = vpop.f32.mrb[0].mxu0
        %v2515 = vadd.f32 %v2463, %v2514
        %v2516 = vpop.f32.mrb[0].mxu0
        %v2517 = vpop.f32.mrb[0].mxu0
        %v2518 = vpop.f32.mrb[0].mxu0
        %2519 = vdwg.mxu0
        %v2520 = vmax.f32 %v2515, 0.0
        %v2521 = vpack.c.bf16 %v2520, %v2520
        %v2522 = vld [vmem:[%s15] sm:$0xf]
        %v2523 = vld [vmem:[%s15 + $0x4] sm:$0xf]
        %v2524 = vld [vmem:[%s15 + $0x8] sm:$0xf]
        %v2525 = vld [vmem:[%s15 + $0xc] sm:$0xf]
        %v2526 = vld [vmem:[%s15 + $0x10] sm:$0xf]
        %v2527 = vld [vmem:[%s15 + $0x14] sm:$0xf]
        %v2528 = vld [vmem:[%s15 + $0x18] sm:$0xf]
        %v2529 = vld [vmem:[%s15 + $0x1c] sm:$0xf]
        %v2530 = vld [vmem:[%s16] sm:$0x1]
        %v2532 = vlaneseq
        %v2533 = vshrl.u32 %v2532, 7
        %v2534 = vsub.s32 0, %v2533
        %v2535 = vrot.slane %v2530, %v2534
        %v2545 = vunpack.c.l.b16 %v2522
        %v2546 = vunpack.c.l.b16 %v2523
        %v2547 = vunpack.c.l.b16 %v2524
        %v2548 = vunpack.c.l.b16 %v2525
        %v2549 = vunpack.c.l.b16 %v2526
        %v2550 = vunpack.c.l.b16 %v2527
        %v2551 = vunpack.c.l.b16 %v2528
        %v2552 = vunpack.c.l.b16 %v2529
        %v2553 = vpack.c.b16 %v2546, %v2545
        %v2554 = vpack.c.b16 %v2548, %v2547
        %v2555 = vpack.c.b16 %v2550, %v2549
        %v2556 = vpack.c.b16 %v2552, %v2551
        %vm2561 = vcmask 523264
        %v2563 = vsel %vm2561, %v2521, 0
        %2565 = vmatprep.subr.bf16.mxu0 0
        %2566 = vmatpush1.bf16.msra.mxu0 %v2553
        %2567 = vmatprep.subr.bf16.mxu0 0
        %2568 = vmatpush1.bf16.msra.mxu0 %v2554
        %2569 = vmatprep.subr.bf16.mxu0 0
        %2570 = vmatpush1.bf16.msra.mxu0 %v2555
        %2571 = vmatprep.subr.bf16.mxu0 0
        %2572 = vmatpush1.bf16.msra.mxu0 %v2556
        %2573 = vmatprep.subr.bf16.mxu0 0
        %2574 = vmatpush1.bf16.msra.mxu0 0
        %2575 = vmatprep.subr.bf16.mxu0 0
        %2576 = vmatpush1.bf16.msra.mxu0 0
        %2577 = vmatprep.subr.bf16.mxu0 0
        %2578 = vmatpush1.bf16.msra.mxu0 0
        %2579 = vmatprep.subr.bf16.mxu0 0
        %2580 = vmatpush1.bf16.msra.mxu0 0
        %2581 = vmatprep.subr.bf16.mxu0 0
        %2582 = vmatpush1.bf16.msra.mxu0 0
        %2583 = vmatprep.subr.bf16.mxu0 0
        %2584 = vmatpush1.bf16.msra.mxu0 0
        %2585 = vmatprep.subr.bf16.mxu0 0
        %2586 = vmatpush1.bf16.msra.mxu0 0
        %2587 = vmatprep.subr.bf16.mxu0 0
        %2588 = vmatpush1.bf16.msra.mxu0 0
        %2589 = vmatprep.subr.bf16.mxu0 0
        %2590 = vmatpush1.bf16.msra.mxu0 0
        %2591 = vmatprep.subr.bf16.mxu0 0
        %2592 = vmatpush1.bf16.msra.mxu0 0
        %2593 = vmatprep.subr.bf16.mxu0 0
        %2594 = vmatpush1.bf16.msra.mxu0 0
        %2595 = vmatprep.subr.bf16.mxu0 0
        %2596 = vmatpush1.bf16.msra.mxu0 0
        %2597 = vmatprep.mubr.bf16.mxu0 0
        %2598 = vmatmul.mubr.bf16.gmra.mrb[0].mxu0 %v2563
        %v2599 = vpop.f32.mrb[0].mxu0
        %v2600 = vadd.f32 %v2535, %v2599
        %v2601 = vpop.f32.mrb[0].mxu0
        %v2602 = vpop.f32.mrb[0].mxu0
        %v2603 = vpop.f32.mrb[0].mxu0
        %2604 = vdwg.mxu0
        %v2605 = vadd.f32 %v2452, %v2600
        %v2606 = vld [vmem:[%s17] sm:$0x1]
        %v2607 = vld [vmem:[%s18] sm:$0x1]
        %v2608 = vsel %vm863, %v2605, 0.0
        %2609 = vadd.xlane.f32.xlu0 %v2608
        %v2610 = vpop.xlane.xlu0 %2609
        %v2611 = vmul.f32 %v2605, %v2605
        %v2612 = vsel %vm863, %v2611, 0.0
        %2613 = vadd.xlane.f32.xlu0 %v2612
        %v2614 = vpop.xlane.xlu0 %2613
        %v2615 = vmul.f32 %v2610, %v2430
        %v2616 = vmul.f32 %v2614, %v2430
        %v2617 = vmul.f32 %v2615, %v2615
        %v2618 = vsub.f32 %v2616, %v2617
        %v2619 = vsub.f32 %v2605, %v2615
        %v2620 = vadd.f32 %v2618, 1e-05
        %v2621 = vrsqrt.pop %v2620
        %v2622 = vmul.f32 %v2619, %v2621
        %v2624 = vlaneseq
        %v2625 = vshrl.u32 %v2624, 7
        %v2626 = vsub.s32 0, %v2625
        %v2627 = vrot.slane %v2606, %v2626
        %v2629 = vmul.f32 %v2622, %v2627
        %v2631 = vlaneseq
        %v2632 = vshrl.u32 %v2631, 7
        %v2633 = vsub.s32 0, %v2632
        %v2634 = vrot.slane %v2607, %v2633
        %v2636 = vadd.f32 %v2629, %v2634
        %2637 = vst.msk [vmem:[%s815] sm:$0xff] %vm863, %v2636
        %s2638 = sand.u32 %s485, 1
        %s2639 = scalar_lea.sflag [#allocation4], %s2638
        %s2640 = sand.u32 %s485, 1
        %s2641 = smul.addr %s2640, 8
        %s2642 = scalar_lea.vmem [#allocation17], %s2641
        %s2643 = sand.u32 %s513, 1
        %s2644 = scalar_lea.sflag [#allocation19], %s2643
        %s2645 = sand.u32 %s513, 1
        %s2646 = smul.addr %s2645, 32
        %s2647 = scalar_lea.vmem [#allocation18], %s2646
        // Predicated region
        $region133: #{tpu_custom_call.1} parent=95 // pred_check
          %p2648 = pneg %p495
        $region134: #{tpu_custom_call.1} parent=95 // pred_check_branch
          %2650 = sbr.rel (%p2648) target = $region136
        $region135: #{tpu_custom_call.1} parent=95 // pred_region
          %s2652 = ssub.s32 128, 128
          %2653 = vsyncadd %s2639, %s2652
          %s2654 = smul.addr %s51, 2
          %s2655 = sadd.s32 %s52, %s2654
          %s2656 = smul.addr %s2655, 128
          %s2657 = scalar_lea.hbm %s19, %s2656
          %s2659 = sshll.u32 %s2642, 4
          %s2660 = int_to_ptr.vmem [resolvable:$true] %s2659
          %2662 = dma.vmem_to_hbm [thread:$0]  %s2660, 128, %s2657, %s2639
        $region136: #{tpu_custom_call.1} parent=95 // pred_fallthru
          _
        // Predicated region
        $region137: #{tpu_custom_call.1} parent=95 // pred_check
          %p2663 = pneg %p523
        $region138: #{tpu_custom_call.1} parent=95 // pred_check_branch
          %2665 = sbr.rel (%p2663) target = $region140
        $region139: #{tpu_custom_call.1} parent=95 // pred_region
          %s2667 = ssub.s32 512, 512
          %2668 = vsyncadd %s2644, %s2667
          %s2669 = smul.addr %s51, 8
          %s2670 = sadd.s32 %s52, %s2669
          %s2671 = smul.addr %s2670, 128
          %s2672 = scalar_lea.hbm %s20, %s2671
          %s2673 = sshll.u32 %s2647, 4
          %s2674 = int_to_ptr.vmem [resolvable:$true] %s2673
          %2679 = dma.vmem_to_hbm [thread:$0]  %s2674, 512, %s2672, %s2644, 128, 256, 8
        $region140: #{tpu_custom_call.1} parent=95 // pred_fallthru
          _
      $region96: #{tpu_custom_call.1} parent=5 // pred_fallthru
        _
      %p2680 = scmp.le.s32.totalorder 2, %s42
      // Predicated region
      $region141: #{tpu_custom_call.1} parent=5 // pred_check
        %p2681 = pneg %p2680
      $region142: #{tpu_custom_call.1} parent=5 // pred_check_branch
        %2683 = sbr.rel (%p2681) target = $region144
      $region143: #{tpu_custom_call.1} parent=5 // pred_region
        %s2684 = ssub.s32 %s42, 2
        // Predicated region
        $region145: #{tpu_custom_call.1} parent=143 // pred_check
          %p2685 = pneg %p501
        $region146: #{tpu_custom_call.1} parent=143 // pred_check_branch
          %2687 = sbr.rel (%p2685) target = $region148
        $region147: #{tpu_custom_call.1} parent=143 // pred_region
          %s2688 = sand.u32 %s486, 1
          %s2689 = scalar_lea.sflag [#allocation4], %s2688
          %s2690 = sand.u32 %s486, 1
          %s2691 = smul.addr %s2690, 8
          %s2692 = scalar_lea.vmem [#allocation17], %s2691
          %2693 = dma.done %s2689, 128
        $region148: #{tpu_custom_call.1} parent=143 // pred_fallthru
          _
        // Predicated region
        $region149: #{tpu_custom_call.1} parent=143 // pred_check
          %p2694 = pneg %p529
        $region150: #{tpu_custom_call.1} parent=143 // pred_check_branch
          %2696 = sbr.rel (%p2694) target = $region152
        $region151: #{tpu_custom_call.1} parent=143 // pred_region
          %s2697 = sand.u32 %s514, 1
          %s2698 = scalar_lea.sflag [#allocation19], %s2697
          %s2699 = sand.u32 %s514, 1
          %s2700 = smul.addr %s2699, 32
          %s2701 = scalar_lea.vmem [#allocation18], %s2700
          %2702 = dma.done %s2698, 512
        $region152: #{tpu_custom_call.1} parent=143 // pred_fallthru
          _
      $region144: #{tpu_custom_call.1} parent=5 // pred_fallthru
        _
    $region6: #{tpu_custom_call.1} parent=1 // loop_footer
      %s46 = sadd.s32 1, %s42
    $region7: #{tpu_custom_call.1} parent=1 // loop_footer_branch
      %41 = sbr.rel target = $region3
    $region8: #{tpu_custom_call.1} parent=1 // loop_exit
      _
    %2703 = vsyncpa [#allocation3], 1
    %s2704 = scalar_lea.sflag [#allocation3], 1
    %2705 = vsyncpa %s2704, 1
    %2706 = vsyncpa [#allocation6], 1
    %s2707 = scalar_lea.sflag [#allocation6], 1
    %2708 = vsyncpa %s2707, 1
    %2709 = vsyncpa [#allocation9], 1
    %2710 = vsyncpa [#allocation12], 1
    %2711 = vsyncpa [#allocation15], 1
    %2712 = vsyncpa [#allocation4], 1
    %s2713 = scalar_lea.sflag [#allocation4], 1
    %2714 = vsyncpa %s2713, 1
    %2715 = vsyncpa [#allocation19], 1
    %s2716 = scalar_lea.sflag [#allocation19], 1
    %2717 = vsyncpa %s2716, 1

</llo_original>
